<compile_context>
chip_gen: v7x
topology: tpu7x:2x2x1
jax: 0.10.0
libtpu: 0.0.40
codegen_flags: <defaults>
</compile_context>

<pallas_src>
import functools
import math

import jax
import jax.numpy as jnp
from jax.experimental import pallas as pl
from jax.experimental.pallas import tpu as pltpu


# ----------------------------- helpers -----------------------------

def _erf_f32(x):
    # Abramowitz & Stegun 7.1.26 rational approximation, |err| < 1.5e-7.
    # Uses only exp / mul / add / select, so it always lowers on Mosaic.
    a1, a2, a3, a4, a5 = 0.254829592, -0.284496736, 1.421413741, -1.453152027, 1.061405429
    p = 0.3275911
    ax = jnp.abs(x)
    t = 1.0 / (1.0 + p * ax)
    poly = ((((a5 * t + a4) * t + a3) * t + a2) * t + a1) * t
    return jnp.sign(x) * (1.0 - poly * jnp.exp(-ax * ax))


def _gelu_exact(x):
    # nn.GELU() default is the exact erf form.
    return 0.5 * x * (1.0 + _erf_f32(x * 0.7071067811865476))


def _pick_seq_tile(seq, q_tile, batch):
    """Largest divisor of seq <= q_tile (sublane multiple); if batch==1 also cap at
    seq//2 so the (batch, seq-tile) grid has >=2 parallel steps (v7x has 2 TCs)."""
    cap = min(q_tile, seq if batch > 1 else max(seq // 2, 1))
    for d in range(max(cap, 1), 0, -1):
        if seq % d == 0 and (d % 8 == 0 or d == seq):
            return d
    return seq


def _vmem_limit_bytes():
    try:
        cap = int(pltpu.get_tpu_info().vmem_capacity_bytes)
    except Exception:
        cap = 64 << 20                       # conservative (v7x physical per-TC)
    return max(32 << 20, min(int(cap * 0.75), 100 << 20))


def _const_spec(shape):
    """BlockSpec for a grid-invariant input: constant index_map, single-buffered."""
    kwargs = {}
    if hasattr(pl, "Buffered"):              # single-buffer: never re-fetched
        kwargs["pipeline_mode"] = pl.Buffered(1)
    return pl.BlockSpec(shape, lambda b, i: (0,) * len(shape), **kwargs)


# ----------------------------- kernel A -----------------------------

def _ln_qkv_kernel(x_ref, g_ref, b_ref, wqkv_ref, bqkv_ref,
                   q_ref, k_ref, v_ref, *, num_heads, scale):
    """LayerNorm1 + fused QKV projection; head-major bf16 outputs, q pre-scaled."""
    f32 = jnp.float32
    x = x_ref[0].astype(f32)                                     # (tq, D)
    tq, D = x.shape
    hd = D // num_heads

    mu = jnp.mean(x, axis=-1, keepdims=True)
    var = jnp.mean((x - mu) ** 2, axis=-1, keepdims=True)
    h = (x - mu) * jax.lax.rsqrt(var + 1e-5) * g_ref[0] + b_ref[0]

    hc = h.astype(wqkv_ref.dtype)                                # bf16 MXU operand
    r = jnp.dot(hc, wqkv_ref[...], preferred_element_type=f32) + bqkv_ref[0]  # (tq,3D)

    def heads(t):                                                # (tq, D) -> (H, tq, hd)
        return jnp.transpose(t.reshape(tq, num_heads, hd), (1, 0, 2))

    q_ref[0] = heads(r[:, :D] * scale).astype(q_ref.dtype)       # fold 1/sqrt(hd) into q
    k_ref[0] = heads(r[:, D:2 * D]).astype(k_ref.dtype)
    v_ref[0] = heads(r[:, 2 * D:]).astype(v_ref.dtype)


# ----------------------------- kernel B -----------------------------

def _attn_ffn_kernel(*refs, causal):
    """Head-batched attention + out-proj + residual + LN2 + FF + residual."""
    if causal:
        (x_ref, q_ref, k_ref, v_ref, wo_ref, bo_ref, g2_ref, bt2_ref,
         w1_ref, b1_ref, w2_ref, b2_ref, o_ref) = refs
        mask_ref = None
    else:
        (x_ref, q_ref, k_ref, v_ref, mask_ref, wo_ref, bo_ref, g2_ref, bt2_ref,
         w1_ref, b1_ref, w2_ref, b2_ref, o_ref) = refs

    f32 = jnp.float32
    cdt = q_ref.dtype                                            # bf16

    x = x_ref[0].astype(f32)                                     # (tq, D)
    qh = q_ref[0]                                                # (H, tq, hd), pre-scaled
    kh = k_ref[0]                                                # (H, S, hd)
    vh = v_ref[0]                                                # (H, S, hd)
    H, tq, hd = qh.shape
    S = kh.shape[1]

    # --- attention: bf16 MXU matmuls, f32 softmax on VPU/EUP ---
    s = jnp.einsum("hqd,hkd->hqk", qh, kh, preferred_element_type=f32)   # (H, tq, S)
    if causal:
        row = jax.lax.broadcasted_iota(jnp.int32, (tq, S), 0) + pl.program_id(1) * tq
        col = jax.lax.broadcasted_iota(jnp.int32, (tq, S), 1)
        s = jnp.where((col <= row)[None, :, :], s, -jnp.inf)
    else:
        s = s + mask_ref[...].astype(f32)[None, :, :]
    s = s - jnp.max(s, axis=-1, keepdims=True)
    p = jnp.exp(s)
    p = p * pl.reciprocal(jnp.sum(p, axis=-1, keepdims=True), approx=True)

    ctx = jnp.einsum("hqk,hkd->hqd", p.astype(cdt), vh, preferred_element_type=f32)
    # Single K=D out-projection: (tq, H*hd=D) @ (D, D)  (no per-head matmuls / sum).
    ctx2d = jnp.transpose(ctx, (1, 0, 2)).reshape(tq, H * hd)
    attn = jnp.dot(ctx2d.astype(cdt), wo_ref[...], preferred_element_type=f32) + bo_ref[0]

    x1 = x + attn                                                # residual 1

    # --- LayerNorm 2 (f32) ---
    mu = jnp.mean(x1, axis=-1, keepdims=True)
    var = jnp.mean((x1 - mu) ** 2, axis=-1, keepdims=True)
    h2 = (x1 - mu) * jax.lax.rsqrt(var + 1e-5) * g2_ref[0] + bt2_ref[0]

    # --- Feed-forward: Linear -> GELU(exact) -> Linear -> Dropout(identity) ---
    ff = jnp.dot(h2.astype(cdt), w1_ref[...], preferred_element_type=f32) + b1_ref[0]
    ff = _gelu_exact(ff)
    ff = jnp.dot(ff.astype(cdt), w2_ref[...], preferred_element_type=f32) + b2_ref[0]

    o_ref[0] = (x1 + ff).astype(o_ref.dtype)                     # residual 2


# ----------------------------- wrapper -----------------------------

def gpt2_block_pallas(x, mask, params, *, num_heads, q_tile=256, causal=False,
                      compute_dtype=jnp.bfloat16):
    """x: (B, S, D) batch_first; mask: (S, S) additive float attention mask
    (ignored if causal=True, in which case the mask is generated in-kernel)."""
    B, S, D = x.shape
    assert D % num_heads == 0
    hd = D // num_heads
    d_ff = params["w1"].shape[0]
    f32 = jnp.float32
    cdt = compute_dtype

    tq = _pick_seq_tile(S, q_tile, B)
    n_sq = S // tq

    # --- glue: weights -> (in, out) bf16, biases / LN params -> f32 ---
    wqkv = params["in_proj_w"].T.astype(cdt)                     # (D, 3D) fused QKV
    bqkv = params["in_proj_b"][None, :].astype(f32)              # (1, 3D)
    ln1_g = params["ln1_g"][None, :].astype(f32)
    ln1_b = params["ln1_b"][None, :].astype(f32)
    wo = params["out_proj_w"].T.astype(cdt)                      # (D, D)
    bo = params["out_proj_b"][None, :].astype(f32)
    ln2_g = params["ln2_g"][None, :].astype(f32)
    ln2_b = params["ln2_b"][None, :].astype(f32)
    w1 = params["w1"].T.astype(cdt)                              # (D, d_ff)
    b1 = params["b1"][None, :].astype(f32)
    w2 = params["w2"].T.astype(cdt)                              # (d_ff, D)
    b2 = params["b2"][None, :].astype(f32)

    cp = pltpu.CompilerParams(
        dimension_semantics=("parallel", "parallel"),
        vmem_limit_bytes=_vmem_limit_bytes())

    # ---------------- kernel A: LN1 + fused QKV projection ----------------
    ce_a = pl.CostEstimate(
        flops=int(6 * B * S * D * D),
        transcendentals=int(B * S),
        bytes_accessed=int(4 * B * S * D + 3 * 2 * B * S * D + 2 * 3 * D * D))
    q4, k4, v4 = pl.pallas_call(
        functools.partial(_ln_qkv_kernel, num_heads=num_heads,
                          scale=1.0 / math.sqrt(hd)),
        out_shape=tuple(jax.ShapeDtypeStruct((B, num_heads, S, hd), cdt)
                        for _ in range(3)),
        grid=(B, n_sq),
        in_specs=[
            pl.BlockSpec((1, tq, D), lambda b, i: (b, i, 0)),    # x tile
            _const_spec((1, D)), _const_spec((1, D)),            # ln1 gamma/beta
            _const_spec((D, 3 * D)), _const_spec((1, 3 * D)),    # fused Wqkv, bqkv
        ],
        out_specs=tuple(pl.BlockSpec((1, num_heads, tq, hd), lambda b, i: (b, 0, i, 0))
                        for _ in range(3)),
        compiler_params=cp,
        cost_estimate=ce_a,
    )(x, ln1_g, ln1_b, wqkv, bqkv)

    # ------------- kernel B: attention + residual + LN2 + FF -------------
    ce_b = pl.CostEstimate(
        flops=int(B * (4 * S * S * D + 2 * S * D * D + 4 * S * D * d_ff)),
        transcendentals=int(B * (num_heads * S * S + 2 * S * d_ff + 2 * S)),
        bytes_accessed=int(2 * 4 * B * S * D                     # x in + out (f32)
                           + 2 * B * S * D                       # q (bf16)
                           + n_sq * 2 * 2 * B * S * D            # k/v per q-tile (bf16)
                           + 2 * (D * D + 2 * D * d_ff)          # weights (bf16)
                           + (0 if causal else 4 * B * S * S)))  # mask tiles

    in_specs = [
        pl.BlockSpec((1, tq, D), lambda b, i: (b, i, 0)),                     # x tile
        pl.BlockSpec((1, num_heads, tq, hd), lambda b, i: (b, 0, i, 0)),      # q tile
        pl.BlockSpec((1, num_heads, S, hd), lambda b, i: (b, 0, 0, 0)),       # k (full)
        pl.BlockSpec((1, num_heads, S, hd), lambda b, i: (b, 0, 0, 0)),       # v (full)
    ]
    args = [x, q4, k4, v4]
    if not causal:
        in_specs.append(pl.BlockSpec((tq, S), lambda b, i: (i, 0)))           # mask tile
        args.append(mask.astype(f32))
    in_specs += [
        _const_spec((D, D)), _const_spec((1, D)),                 # Wo, bo
        _const_spec((1, D)), _const_spec((1, D)),                 # ln2 gamma/beta
        _const_spec((D, d_ff)), _const_spec((1, d_ff)),           # FF linear 1
        _const_spec((d_ff, D)), _const_spec((1, D)),              # FF linear 2
    ]
    args += [wo, bo, ln2_g, ln2_b, w1, b1, w2, b2]

    out = pl.pallas_call(
        functools.partial(_attn_ffn_kernel, causal=causal),
        out_shape=jax.ShapeDtypeStruct((B, S, D), x.dtype),
        grid=(B, n_sq),
        in_specs=in_specs,
        out_specs=pl.BlockSpec((1, tq, D), lambda b, i: (b, i, 0)),
        compiler_params=cp,
        cost_estimate=ce_b,
    )(*args)
    return out


# ----------------------------- reference -----------------------------

def gpt2_block_reference(x, mask, params, *, num_heads):
    """Pure-JAX reference mirroring the PyTorch forward (eval mode)."""
    B, S, D = x.shape
    hd = D // num_heads
    eps = 1e-5

    def ln(v, g, b):
        mu = jnp.mean(v, -1, keepdims=True)
        var = jnp.mean((v - mu) ** 2, -1, keepdims=True)
        return (v - mu) / jnp.sqrt(var + eps) * g + b

    h = ln(x, params["ln1_g"], params["ln1_b"])
    qkv = h @ params["in_proj_w"].T + params["in_proj_b"]
    q, k, v = jnp.split(qkv, 3, axis=-1)

    def split_heads(t):
        return t.reshape(B, S, num_heads, hd).transpose(0, 2, 1, 3)

    qh, kh, vh = split_heads(q), split_heads(k), split_heads(v)
    s = jnp.einsum("bhqd,bhkd->bhqk", qh, kh) / math.sqrt(hd) + mask
    p = jax.nn.softmax(s, axis=-1)
    a = jnp.einsum("bhqk,bhkd->bhqd", p, vh).transpose(0, 2, 1, 3).reshape(B, S, D)
    attn_out = a @ params["out_proj_w"].T + params["out_proj_b"]

    x1 = x + attn_out
    h2 = ln(x1, params["ln2_g"], params["ln2_b"])
    ff = jax.nn.gelu(h2 @ params["w1"].T + params["b1"], approximate=False)
    ff = ff @ params["w2"].T + params["b2"]
    return x1 + ff


if __name__ == "__main__":
    B, S, D, H, d_ff = 2, 128, 128, 4, 256

    key = jax.random.PRNGKey(0)
    ks = jax.random.split(key, 8)

    params = {
        "ln1_g": jnp.ones((D,), jnp.float32),
        "ln1_b": jnp.zeros((D,), jnp.float32),
        "in_proj_w": 0.02 * jax.random.normal(ks[0], (3 * D, D), jnp.float32),
        "in_proj_b": 0.02 * jax.random.normal(ks[1], (3 * D,), jnp.float32),
        "out_proj_w": 0.02 * jax.random.normal(ks[2], (D, D), jnp.float32),
        "out_proj_b": jnp.zeros((D,), jnp.float32),
        "ln2_g": jnp.ones((D,), jnp.float32),
        "ln2_b": jnp.zeros((D,), jnp.float32),
        "w1": 0.02 * jax.random.normal(ks[3], (d_ff, D), jnp.float32),
        "b1": 0.02 * jax.random.normal(ks[4], (d_ff,), jnp.float32),
        "w2": 0.02 * jax.random.normal(ks[5], (D, d_ff), jnp.float32),
        "b2": jnp.zeros((D,), jnp.float32),
    }

    x = jax.random.normal(ks[6], (B, S, D), jnp.float32)
    # Additive causal mask (float), same convention as a PyTorch float attn_mask.
    causal = jnp.triu(jnp.full((S, S), -1e9, jnp.float32), k=1)

    ref = gpt2_block_reference(x, causal, params, num_heads=H)

    # Default path: explicit additive mask input (module semantics).
    out = gpt2_block_pallas(x, causal, params, num_heads=H, q_tile=64)
    out = jax.block_until_ready(out)
    err = jnp.max(jnp.abs(out - ref))
    assert jnp.allclose(out, ref, atol=2e-2, rtol=2e-2), f"max err {err}"

    # Optimized path: in-kernel causal mask (no mask DMA).
    out_c = gpt2_block_pallas(x, causal, params, num_heads=H, q_tile=64, causal=True)
    out_c = jax.block_until_ready(out_c)
    err_c = jnp.max(jnp.abs(out_c - ref))
    assert jnp.allclose(out_c, ref, atol=2e-2, rtol=2e-2), f"max err {err_c}"

    print("KERNEL_OK")
</pallas_src>

<mosaic_0001>
module attributes {stable_mosaic.version = 11 : i64} {
  func.func @_ln_qkv_kernel(%arg0: i32, %arg1: i32, %arg2: memref<1x64x128xf32, #tpu.memory_space<vmem>>, %arg3: memref<1x128xf32, #tpu.memory_space<vmem>>, %arg4: memref<1x128xf32, #tpu.memory_space<vmem>>, %arg5: memref<128x384xbf16, #tpu.memory_space<vmem>>, %arg6: memref<1x384xf32, #tpu.memory_space<vmem>>, %arg7: memref<1x4x64x32xbf16, #tpu.memory_space<vmem>>, %arg8: memref<1x4x64x32xbf16, #tpu.memory_space<vmem>>, %arg9: memref<1x4x64x32xbf16, #tpu.memory_space<vmem>>) attributes {dimension_semantics = [#tpu.dimension_semantics<parallel>, #tpu.dimension_semantics<parallel>], iteration_bounds = array<i64: 2, 2>, scalar_prefetch = 0 : i64, scratch_operands = 0 : i64, tpu.core_type = #tpu.core_type<tc>, window_params = [{transform_indices = @transform_0, window_bounds = array<i64: 1, 64, 128>}, {pipeline_mode = #tpu.pipeline_mode<synchronous>, transform_indices = @transform_1, window_bounds = array<i64: 1, 128>}, {pipeline_mode = #tpu.pipeline_mode<synchronous>, transform_indices = @transform_2, window_bounds = array<i64: 1, 128>}, {pipeline_mode = #tpu.pipeline_mode<synchronous>, transform_indices = @transform_3, window_bounds = array<i64: 128, 384>}, {pipeline_mode = #tpu.pipeline_mode<synchronous>, transform_indices = @transform_4, window_bounds = array<i64: 1, 384>}, {transform_indices = @transform_5, window_bounds = array<i64: 1, 4, 64, 32>}, {transform_indices = @transform_6, window_bounds = array<i64: 1, 4, 64, 32>}, {transform_indices = @transform_7, window_bounds = array<i64: 1, 4, 64, 32>}]} {
    %c0 = arith.constant 0 : index
    %c0_0 = arith.constant 0 : index
    %c0_1 = arith.constant 0 : index
    %0 = vector.load %arg2[%c0, %c0_0, %c0_1] : memref<1x64x128xf32, #tpu.memory_space<vmem>>, vector<1x64x128xf32>
    %1 = vector.shape_cast %0 : vector<1x64x128xf32> to vector<64x128xf32>
    %cst = arith.constant dense<0.000000e+00> : vector<64xf32>
    %2 = vector.multi_reduction <add>, %1, %cst [1] : vector<64x128xf32> to vector<64xf32>
    %3 = vector.shape_cast %2 : vector<64xf32> to vector<64x1xf32>
    %cst_2 = arith.constant 1.280000e+02 : f32
    %4 = vector.broadcast %cst_2 : f32 to vector<64x1xf32>
    %5 = arith.divf %3, %4 : vector<64x1xf32>
    %6 = vector.broadcast %5 : vector<64x1xf32> to vector<64x128xf32>
    %7 = arith.subf %1, %6 : vector<64x128xf32>
    %8 = arith.mulf %7, %7 : vector<64x128xf32>
    %cst_3 = arith.constant dense<0.000000e+00> : vector<64xf32>
    %9 = vector.multi_reduction <add>, %8, %cst_3 [1] : vector<64x128xf32> to vector<64xf32>
    %10 = vector.shape_cast %9 : vector<64xf32> to vector<64x1xf32>
    %cst_4 = arith.constant 1.280000e+02 : f32
    %11 = vector.broadcast %cst_4 : f32 to vector<64x1xf32>
    %12 = arith.divf %10, %11 : vector<64x1xf32>
    %13 = vector.broadcast %5 : vector<64x1xf32> to vector<64x128xf32>
    %14 = arith.subf %1, %13 : vector<64x128xf32>
    %cst_5 = arith.constant 9.99999974E-6 : f32
    %15 = vector.broadcast %cst_5 : f32 to vector<64x1xf32>
    %16 = arith.addf %12, %15 : vector<64x1xf32>
    %17 = math.rsqrt %16 : vector<64x1xf32>
    %18 = vector.broadcast %17 : vector<64x1xf32> to vector<64x128xf32>
    %19 = arith.mulf %14, %18 : vector<64x128xf32>
    %c0_6 = arith.constant 0 : index
    %c0_7 = arith.constant 0 : index
    %20 = vector.load %arg3[%c0_6, %c0_7] : memref<1x128xf32, #tpu.memory_space<vmem>>, vector<1x128xf32>
    %21 = vector.shape_cast %20 : vector<1x128xf32> to vector<128xf32>
    %22 = vector.shape_cast %21 : vector<128xf32> to vector<1x128xf32>
    %23 = vector.broadcast %22 : vector<1x128xf32> to vector<64x128xf32>
    %24 = arith.mulf %19, %23 : vector<64x128xf32>
    %c0_8 = arith.constant 0 : index
    %c0_9 = arith.constant 0 : index
    %25 = vector.load %arg4[%c0_8, %c0_9] : memref<1x128xf32, #tpu.memory_space<vmem>>, vector<1x128xf32>
    %26 = vector.shape_cast %25 : vector<1x128xf32> to vector<128xf32>
    %27 = vector.shape_cast %26 : vector<128xf32> to vector<1x128xf32>
    %28 = vector.broadcast %27 : vector<1x128xf32> to vector<64x128xf32>
    %29 = arith.addf %24, %28 : vector<64x128xf32>
    %30 = arith.truncf %29 : vector<64x128xf32> to vector<64x128xbf16>
    %c0_10 = arith.constant 0 : index
    %c0_11 = arith.constant 0 : index
    %31 = vector.load %arg5[%c0_10, %c0_11] : memref<128x384xbf16, #tpu.memory_space<vmem>>, vector<128x384xbf16>
    %cst_12 = arith.constant dense<0.000000e+00> : vector<64x384xf32>
    %32 = tpu.matmul %30, %31, %cst_12 {dimension_numbers = #tpu.dot_dimension_numbers<[1], [0], [0], [1], [0, 0, 1, 1], [], []>} : vector<64x128xbf16>, vector<128x384xbf16>, vector<64x384xf32> -> vector<64x384xf32>
    %c0_13 = arith.constant 0 : index
    %c0_14 = arith.constant 0 : index
    %33 = vector.load %arg6[%c0_13, %c0_14] : memref<1x384xf32, #tpu.memory_space<vmem>>, vector<1x384xf32>
    %34 = vector.shape_cast %33 : vector<1x384xf32> to vector<384xf32>
    %35 = vector.shape_cast %34 : vector<384xf32> to vector<1x384xf32>
    %36 = vector.broadcast %35 : vector<1x384xf32> to vector<64x384xf32>
    %37 = arith.addf %32, %36 : vector<64x384xf32>
    %38 = vector.extract_strided_slice %37 {offsets = [0, 0], sizes = [64, 128], strides = [1, 1]} : vector<64x384xf32> to vector<64x128xf32>
    %cst_15 = arith.constant 0.176776692 : f32
    %39 = vector.broadcast %cst_15 : f32 to vector<64x128xf32>
    %40 = arith.mulf %38, %39 : vector<64x128xf32>
    %41 = vector.shape_cast %40 : vector<64x128xf32> to vector<64x4x32xf32>
    %42 = tpu.transpose %41, [1, 0, 2] : vector<64x4x32xf32> -> vector<4x64x32xf32>
    %43 = arith.truncf %42 : vector<4x64x32xf32> to vector<4x64x32xbf16>
    %c0_16 = arith.constant 0 : index
    %c0_17 = arith.constant 0 : index
    %c0_18 = arith.constant 0 : index
    %c0_19 = arith.constant 0 : index
    %44 = vector.load %arg7[%c0_16, %c0_17, %c0_18, %c0_19] : memref<1x4x64x32xbf16, #tpu.memory_space<vmem>>, vector<1x4x64x32xbf16>
    %45 = vector.shape_cast %44 : vector<1x4x64x32xbf16> to vector<4x64x32xbf16>
    %46 = vector.shape_cast %43 : vector<4x64x32xbf16> to vector<1x4x64x32xbf16>
    tpu.vector_store %arg7[%c0_16, %c0_17, %c0_18, %c0_19], %46 {strides = array<i32>} : memref<1x4x64x32xbf16, #tpu.memory_space<vmem>>, vector<1x4x64x32xbf16>,
    %47 = vector.extract_strided_slice %37 {offsets = [0, 128], sizes = [64, 128], strides = [1, 1]} : vector<64x384xf32> to vector<64x128xf32>
    %48 = vector.shape_cast %47 : vector<64x128xf32> to vector<64x4x32xf32>
    %49 = tpu.transpose %48, [1, 0, 2] : vector<64x4x32xf32> -> vector<4x64x32xf32>
    %50 = arith.truncf %49 : vector<4x64x32xf32> to vector<4x64x32xbf16>
    %c0_20 = arith.constant 0 : index
    %c0_21 = arith.constant 0 : index
    %c0_22 = arith.constant 0 : index
    %c0_23 = arith.constant 0 : index
    %51 = vector.load %arg8[%c0_20, %c0_21, %c0_22, %c0_23] : memref<1x4x64x32xbf16, #tpu.memory_space<vmem>>, vector<1x4x64x32xbf16>
    %52 = vector.shape_cast %51 : vector<1x4x64x32xbf16> to vector<4x64x32xbf16>
    %53 = vector.shape_cast %50 : vector<4x64x32xbf16> to vector<1x4x64x32xbf16>
    tpu.vector_store %arg8[%c0_20, %c0_21, %c0_22, %c0_23], %53 {strides = array<i32>} : memref<1x4x64x32xbf16, #tpu.memory_space<vmem>>, vector<1x4x64x32xbf16>,
    %54 = vector.extract_strided_slice %37 {offsets = [0, 256], sizes = [64, 128], strides = [1, 1]} : vector<64x384xf32> to vector<64x128xf32>
    %55 = vector.shape_cast %54 : vector<64x128xf32> to vector<64x4x32xf32>
    %56 = tpu.transpose %55, [1, 0, 2] : vector<64x4x32xf32> -> vector<4x64x32xf32>
    %57 = arith.truncf %56 : vector<4x64x32xf32> to vector<4x64x32xbf16>
    %c0_24 = arith.constant 0 : index
    %c0_25 = arith.constant 0 : index
    %c0_26 = arith.constant 0 : index
    %c0_27 = arith.constant 0 : index
    %58 = vector.load %arg9[%c0_24, %c0_25, %c0_26, %c0_27] : memref<1x4x64x32xbf16, #tpu.memory_space<vmem>>, vector<1x4x64x32xbf16>
    %59 = vector.shape_cast %58 : vector<1x4x64x32xbf16> to vector<4x64x32xbf16>
    %60 = vector.shape_cast %57 : vector<4x64x32xbf16> to vector<1x4x64x32xbf16>
    tpu.vector_store %arg9[%c0_24, %c0_25, %c0_26, %c0_27], %60 {strides = array<i32>} : memref<1x4x64x32xbf16, #tpu.memory_space<vmem>>, vector<1x4x64x32xbf16>,
    return
  }
  func.func @transform_0(%arg0: i32, %arg1: i32) -> (i32, i32, i32) {
    %c0_i32 = arith.constant 0 : i32
    %c0_i32_0 = arith.constant 0 : i32
    return %arg0, %arg1, %c0_i32 : i32, i32, i32
  }
  func.func @transform_1(%arg0: i32, %arg1: i32) -> (i32, i32) {
    %c0_i32 = arith.constant 0 : i32
    %c0_i32_0 = arith.constant 0 : i32
    %c0_i32_1 = arith.constant 0 : i32
    return %c0_i32, %c0_i32_0 : i32, i32
  }
  func.func @transform_2(%arg0: i32, %arg1: i32) -> (i32, i32) {
    %c0_i32 = arith.constant 0 : i32
    %c0_i32_0 = arith.constant 0 : i32
    %c0_i32_1 = arith.constant 0 : i32
    return %c0_i32, %c0_i32_0 : i32, i32
  }
  func.func @transform_3(%arg0: i32, %arg1: i32) -> (i32, i32) {
    %c0_i32 = arith.constant 0 : i32
    %c0_i32_0 = arith.constant 0 : i32
    %c0_i32_1 = arith.constant 0 : i32
    return %c0_i32, %c0_i32_0 : i32, i32
  }
  func.func @transform_4(%arg0: i32, %arg1: i32) -> (i32, i32) {
    %c0_i32 = arith.constant 0 : i32
    %c0_i32_0 = arith.constant 0 : i32
    %c0_i32_1 = arith.constant 0 : i32
    return %c0_i32, %c0_i32_0 : i32, i32
  }
  func.func @transform_5(%arg0: i32, %arg1: i32) -> (i32, i32, i32, i32) {
    %c0_i32 = arith.constant 0 : i32
    %c0_i32_0 = arith.constant 0 : i32
    %c0_i32_1 = arith.constant 0 : i32
    return %arg0, %c0_i32, %arg1, %c0_i32_0 : i32, i32, i32, i32
  }
  func.func @transform_6(%arg0: i32, %arg1: i32) -> (i32, i32, i32, i32) {
    %c0_i32 = arith.constant 0 : i32
    %c0_i32_0 = arith.constant 0 : i32
    %c0_i32_1 = arith.constant 0 : i32
    return %arg0, %c0_i32, %arg1, %c0_i32_0 : i32, i32, i32, i32
  }
  func.func @transform_7(%arg0: i32, %arg1: i32) -> (i32, i32, i32, i32) {
    %c0_i32 = arith.constant 0 : i32
    %c0_i32_0 = arith.constant 0 : i32
    %c0_i32_1 = arith.constant 0 : i32
    return %arg0, %c0_i32, %arg1, %c0_i32_0 : i32, i32, i32, i32
  }
}

</mosaic_0001>

<llo_original>
// kernel: tpu_custom_call.1
$region0: #{tpu_custom_call.1}
  #allocation0 [shape = 'u32[]', space=smem, size = 0x4, offset = 0x4, fixed_abs, tag = 'smem constant byte address 0x4 - core index']
  #allocation1 [shape = 'u32[144,128]{1,0:T(1,128)}', space=vmem, size = 0x12000, scoped, tag = 'internal scratch']
  %s0 = inlined_call_operand.hbm [shape: f32[2,128,128], index: 0, kind: input, shape index: {}]
  %s1 = inlined_call_operand.vmem [shape: f32[1,128], index: 1, kind: input, shape index: {}]
  %s2 = inlined_call_operand.vmem [shape: f32[1,128], index: 2, kind: input, shape index: {}]
  %s3 = inlined_call_operand.hbm [shape: bf16[128,384], index: 3, kind: input, shape index: {}]
  %s4 = inlined_call_operand.vmem [shape: f32[1,384], index: 4, kind: input, shape index: {}]
  %s5 = inlined_call_operand.vmem [shape: bf16[2,4,128,32], index: 5, kind: output, shape index: {0}]
  %s6 = inlined_call_operand.vmem [shape: bf16[2,4,128,32], index: 6, kind: output, shape index: {1}]
  %s7 = inlined_call_operand.vmem [shape: bf16[2,4,128,32], index: 7, kind: output, shape index: {2}]
  %8 = xla_tuple %s5, %s6, %s7
  %s9 = sld [smem:[#allocation0]]
  $region188: #{tpu_custom_call.1} parent=0
    _
  %s11 = ssub.s32 1, %s9
  %s12 = scalar_select 0, %s11, %s9
  $region1: #{tpu_custom_call.1} parent=0
    #allocation2 [shape = 'u8[65536]{0}', space=vmem, size = 0x10000, scoped, tag = 'input window, operand 0']
    #allocation3 [shape = 's32[2]{0}', space=sflag, size = 0x8, scoped, tag = 'scoped memory for tpu_custom_call.1']
    #allocation4 [shape = 'u8[98304]{0}', space=vmem, size = 0x18000, scoped, tag = 'input window, operand 3, single buffered']
    #allocation5 [shape = 's32[1]{0}', space=sflag, size = 0x4, scoped, tag = 'scoped memory for tpu_custom_call.1']
    #allocation6 [shape = 'u8[131072]{0}', space=vmem, size = 0x20000, scoped, tag = 'output window, operand 0']
    #allocation7 [shape = 'u8[131072]{0}', space=vmem, size = 0x20000, scoped, tag = 'output window, operand 1']
    #allocation8 [shape = 'u8[131072]{0}', space=vmem, size = 0x20000, scoped, tag = 'output window, operand 2']
    %13 = vsyncpa [#allocation3], 0
    %s14 = scalar_lea.sflag [#allocation3], 1
    %15 = vsyncpa %s14, 0
    %16 = vsyncpa [#allocation5], 0
    loop: start=0, step=1, limit=6
    $region2: #{tpu_custom_call.1} parent=1 // loop_pre_header
      _
    $region3: #{tpu_custom_call.1} parent=1 // loop_header
      %s18 = sphi 0, %s22
      %p19 = scmp.ge.s32.totalorder %s18, 6
      %s25 = sphi 0, %s37
      %s26 = sphi 0, %s33
      %s27 = sphi 0, %s25
      %s28 = sphi 0, %s26
      %s29 = sphi 0, %s27
      %s30 = sphi 0, %s28
      %s42 = sphi 0, %s44
      %s45 = sphi 0, %s42
      %s46 = sphi 0, %s45
      %s62 = sphi 0, %s46
      %s66 = sphi 0, %s66
      %s68 = sphi 0, %s66
      %s69 = sphi 0, %s68
      %s83 = sphi 0, %s69
      %s87 = sphi 0, %s87
      %s89 = sphi 0, %s87
      %s90 = sphi 0, %s89
      %s104 = sphi 0, %s90
      %s108 = sphi 0, %s108
      %s110 = sphi 0, %s108
      %s111 = sphi 0, %s110
      %s125 = sphi 0, %s111
      %s129 = sphi 0, %s129
      %s131 = sphi 0, %s129
      %s132 = sphi 0, %s131
      %s146 = sphi 0, %s132
      %s154 = sphi 0, %s156
      %s157 = sphi 0, %s154
      %s158 = sphi 0, %s157
      %s174 = sphi 0, %s158
      %s182 = sphi 0, %s184
      %s185 = sphi 0, %s182
      %s186 = sphi 0, %s185
      %s202 = sphi 0, %s186
      %s210 = sphi 0, %s212
      %s213 = sphi 0, %s210
      %s214 = sphi 0, %s213
      %s230 = sphi 0, %s214
    $region4: #{tpu_custom_call.1} parent=1 // loop_header_branch
      %21 = sbr.rel (%p19) target = $region8
    $region5: #{tpu_custom_call.1} parent=1 // loop_body
      %s23 = ssub.s32 %s18, 1
      %s24 = ssub.s32 %s18, 2
      %s31 = sadd.s32 1, %s26
      %p32 = scmp.ge.s32.totalorder %s31, 2
      %s33 = scalar_select %p32, 0, %s31
      %s34 = sadd.s32 1, %s25
      %s35 = scalar_select %p32, %s34, %s25
      %p36 = scmp.ge.s32.totalorder %s35, 2
      %s37 = scalar_select %p36, 0, %s35
      %s38 = ssub.s32 %s25, %s37
      %s39 = ssub.s32 %s26, %s33
      %s40 = sor.u32 %s38, %s39
      %p41 = scmp.eq.s32.totalorder %s40, 0
      %s43 = sadd.s32 %s42, 1
      %s44 = scalar_select %p41, %s42, %s43
      %p47 = pneg %p41
      %p48 = scmp.eq.s32.totalorder %s18, 3
      %p49 = por %p47, %p48
      %p50 = scmp.ne.s32.totalorder %s42, %s45
      %p51 = scmp.eq.s32.totalorder %s18, 0
      %p52 = por %p50, %p51
      %p53 = scmp.ne.s32.totalorder %s42, %s45
      %p54 = scmp.eq.s32.totalorder %s23, 3
      %p55 = por %p53, %p54
      %p56 = scmp.ne.s32.totalorder %s45, %s46
      %p57 = scmp.eq.s32.totalorder %s23, 0
      %p58 = por %p56, %p57
      %p59 = scmp.ne.s32.totalorder %s45, %s46
      %p60 = scmp.eq.s32.totalorder %s24, 3
      %p61 = por %p59, %p60
      %p63 = scmp.ne.s32.totalorder %s46, %s62
      %p64 = scmp.eq.s32.totalorder %s24, 0
      %p65 = por %p63, %p64
      %s67 = sadd.s32 %s66, 1
      %p70 = scmp.eq.s32.totalorder %s18, 3
      %p71 = scmp.ne.s32.totalorder %s66, %s68
      %p72 = scmp.eq.s32.totalorder %s18, 0
      %p73 = por %p71, %p72
      %p74 = scmp.ne.s32.totalorder %s66, %s68
      %p75 = scmp.eq.s32.totalorder %s23, 3
      %p76 = por %p74, %p75
      %p77 = scmp.ne.s32.totalorder %s68, %s69
      %p78 = scmp.eq.s32.totalorder %s23, 0
      %p79 = por %p77, %p78
      %p80 = scmp.ne.s32.totalorder %s68, %s69
      %p81 = scmp.eq.s32.totalorder %s24, 3
      %p82 = por %p80, %p81
      %p84 = scmp.ne.s32.totalorder %s69, %s83
      %p85 = scmp.eq.s32.totalorder %s24, 0
      %p86 = por %p84, %p85
      %s88 = sadd.s32 %s87, 1
      %p91 = scmp.eq.s32.totalorder %s18, 3
      %p92 = scmp.ne.s32.totalorder %s87, %s89
      %p93 = scmp.eq.s32.totalorder %s18, 0
      %p94 = por %p92, %p93
      %p95 = scmp.ne.s32.totalorder %s87, %s89
      %p96 = scmp.eq.s32.totalorder %s23, 3
      %p97 = por %p95, %p96
      %p98 = scmp.ne.s32.totalorder %s89, %s90
      %p99 = scmp.eq.s32.totalorder %s23, 0
      %p100 = por %p98, %p99
      %p101 = scmp.ne.s32.totalorder %s89, %s90
      %p102 = scmp.eq.s32.totalorder %s24, 3
      %p103 = por %p101, %p102
      %p105 = scmp.ne.s32.totalorder %s90, %s104
      %p106 = scmp.eq.s32.totalorder %s24, 0
      %p107 = por %p105, %p106
      %s109 = sadd.s32 %s108, 1
      %p112 = scmp.eq.s32.totalorder %s18, 3
      %p113 = scmp.ne.s32.totalorder %s108, %s110
      %p114 = scmp.eq.s32.totalorder %s18, 0
      %p115 = por %p113, %p114
      %p116 = scmp.ne.s32.totalorder %s108, %s110
      %p117 = scmp.eq.s32.totalorder %s23, 3
      %p118 = por %p116, %p117
      %p119 = scmp.ne.s32.totalorder %s110, %s111
      %p120 = scmp.eq.s32.totalorder %s23, 0
      %p121 = por %p119, %p120
      %p122 = scmp.ne.s32.totalorder %s110, %s111
      %p123 = scmp.eq.s32.totalorder %s24, 3
      %p124 = por %p122, %p123
      %p126 = scmp.ne.s32.totalorder %s111, %s125
      %p127 = scmp.eq.s32.totalorder %s24, 0
      %p128 = por %p126, %p127
      %s130 = sadd.s32 %s129, 1
      %p133 = scmp.eq.s32.totalorder %s18, 3
      %p134 = scmp.ne.s32.totalorder %s129, %s131
      %p135 = scmp.eq.s32.totalorder %s18, 0
      %p136 = por %p134, %p135
      %p137 = scmp.ne.s32.totalorder %s129, %s131
      %p138 = scmp.eq.s32.totalorder %s23, 3
      %p139 = por %p137, %p138
      %p140 = scmp.ne.s32.totalorder %s131, %s132
      %p141 = scmp.eq.s32.totalorder %s23, 0
      %p142 = por %p140, %p141
      %p143 = scmp.ne.s32.totalorder %s131, %s132
      %p144 = scmp.eq.s32.totalorder %s24, 3
      %p145 = por %p143, %p144
      %p147 = scmp.ne.s32.totalorder %s132, %s146
      %p148 = scmp.eq.s32.totalorder %s24, 0
      %p149 = por %p147, %p148
      %s150 = ssub.s32 %s25, %s37
      %s151 = ssub.s32 %s26, %s33
      %s152 = sor.u32 %s150, %s151
      %p153 = scmp.eq.s32.totalorder %s152, 0
      %s155 = sadd.s32 %s154, 1
      %s156 = scalar_select %p153, %s154, %s155
      %p159 = pneg %p153
      %p160 = scmp.eq.s32.totalorder %s18, 3
      %p161 = por %p159, %p160
      %p162 = scmp.ne.s32.totalorder %s154, %s157
      %p163 = scmp.eq.s32.totalorder %s18, 0
      %p164 = por %p162, %p163
      %p165 = scmp.ne.s32.totalorder %s154, %s157
      %p166 = scmp.eq.s32.totalorder %s23, 3
      %p167 = por %p165, %p166
      %p168 = scmp.ne.s32.totalorder %s157, %s158
      %p169 = scmp.eq.s32.totalorder %s23, 0
      %p170 = por %p168, %p169
      %p171 = scmp.ne.s32.totalorder %s157, %s158
      %p172 = scmp.eq.s32.totalorder %s24, 3
      %p173 = por %p171, %p172
      %p175 = scmp.ne.s32.totalorder %s158, %s174
      %p176 = scmp.eq.s32.totalorder %s24, 0
      %p177 = por %p175, %p176
      %s178 = ssub.s32 %s25, %s37
      %s179 = ssub.s32 %s26, %s33
      %s180 = sor.u32 %s178, %s179
      %p181 = scmp.eq.s32.totalorder %s180, 0
      %s183 = sadd.s32 %s182, 1
      %s184 = scalar_select %p181, %s182, %s183
      %p187 = pneg %p181
      %p188 = scmp.eq.s32.totalorder %s18, 3
      %p189 = por %p187, %p188
      %p190 = scmp.ne.s32.totalorder %s182, %s185
      %p191 = scmp.eq.s32.totalorder %s18, 0
      %p192 = por %p190, %p191
      %p193 = scmp.ne.s32.totalorder %s182, %s185
      %p194 = scmp.eq.s32.totalorder %s23, 3
      %p195 = por %p193, %p194
      %p196 = scmp.ne.s32.totalorder %s185, %s186
      %p197 = scmp.eq.s32.totalorder %s23, 0
      %p198 = por %p196, %p197
      %p199 = scmp.ne.s32.totalorder %s185, %s186
      %p200 = scmp.eq.s32.totalorder %s24, 3
      %p201 = por %p199, %p200
      %p203 = scmp.ne.s32.totalorder %s186, %s202
      %p204 = scmp.eq.s32.totalorder %s24, 0
      %p205 = por %p203, %p204
      %s206 = ssub.s32 %s25, %s37
      %s207 = ssub.s32 %s26, %s33
      %s208 = sor.u32 %s206, %s207
      %p209 = scmp.eq.s32.totalorder %s208, 0
      %s211 = sadd.s32 %s210, 1
      %s212 = scalar_select %p209, %s210, %s211
      %p215 = pneg %p209
      %p216 = scmp.eq.s32.totalorder %s18, 3
      %p217 = por %p215, %p216
      %p218 = scmp.ne.s32.totalorder %s210, %s213
      %p219 = scmp.eq.s32.totalorder %s18, 0
      %p220 = por %p218, %p219
      %p221 = scmp.ne.s32.totalorder %s210, %s213
      %p222 = scmp.eq.s32.totalorder %s23, 3
      %p223 = por %p221, %p222
      %p224 = scmp.ne.s32.totalorder %s213, %s214
      %p225 = scmp.eq.s32.totalorder %s23, 0
      %p226 = por %p224, %p225
      %p227 = scmp.ne.s32.totalorder %s213, %s214
      %p228 = scmp.eq.s32.totalorder %s24, 3
      %p229 = por %p227, %p228
      %p231 = scmp.ne.s32.totalorder %s214, %s230
      %p232 = scmp.eq.s32.totalorder %s24, 0
      %p233 = por %p231, %p232
      %p234 = scmp.le.s32.totalorder 1, %s18
      %p235 = scmp.lt.s32.totalorder %s18, 5
      %p236 = pnand %p234, %p235
      %p237 = pneg %p236
      // Predicated region
      $region9: #{tpu_custom_call.1} parent=5 // pred_check
        _
      $region10: #{tpu_custom_call.1} parent=5 // pred_check_branch
        %239 = sbr.rel (%p236) target = $region12
      $region11: #{tpu_custom_call.1} parent=5 // pred_region
        %s240 = ssub.s32 %s18, 1
        // Predicated region
        $region13: #{tpu_custom_call.1} parent=11 // pred_check
          %p241 = pneg %p79
        $region14: #{tpu_custom_call.1} parent=11 // pred_check_branch
          %243 = sbr.rel (%p241) target = $region16
        $region15: #{tpu_custom_call.1} parent=11 // pred_region
          _
        $region16: #{tpu_custom_call.1} parent=11 // pred_fallthru
          _
        // Predicated region
        $region17: #{tpu_custom_call.1} parent=11 // pred_check
          %p244 = pneg %p100
        $region18: #{tpu_custom_call.1} parent=11 // pred_check_branch
          %246 = sbr.rel (%p244) target = $region20
        $region19: #{tpu_custom_call.1} parent=11 // pred_region
          _
        $region20: #{tpu_custom_call.1} parent=11 // pred_fallthru
          _
        // Predicated region
        $region21: #{tpu_custom_call.1} parent=11 // pred_check
          %p247 = pneg %p121
        $region22: #{tpu_custom_call.1} parent=11 // pred_check_branch
          %249 = sbr.rel (%p247) target = $region24
        $region23: #{tpu_custom_call.1} parent=11 // pred_region
          %s251 = ssub.s32 3072, 3072
          %252 = vsyncadd [#allocation5], %s251
          %s253 = sshll.u32 [#allocation4], 4
          %s254 = int_to_ptr.vmem [resolvable:$true] %s253
          %259 = dma.hbm_to_vmem [thread:$0]  %s3, 3072, %s254, [#allocation5], 192, 192, 12
        $region24: #{tpu_custom_call.1} parent=11 // pred_fallthru
          _
        // Predicated region
        $region25: #{tpu_custom_call.1} parent=11 // pred_check
          %p260 = pneg %p142
        $region26: #{tpu_custom_call.1} parent=11 // pred_check_branch
          %262 = sbr.rel (%p260) target = $region28
        $region27: #{tpu_custom_call.1} parent=11 // pred_region
          _
        $region28: #{tpu_custom_call.1} parent=11 // pred_fallthru
          _
      $region12: #{tpu_custom_call.1} parent=5 // pred_fallthru
        _
      %p263 = scmp.lt.s32.totalorder %s18, 4
      // Predicated region
      $region29: #{tpu_custom_call.1} parent=5 // pred_check
        %p264 = pneg %p263
      $region30: #{tpu_custom_call.1} parent=5 // pred_check_branch
        %266 = sbr.rel (%p264) target = $region32
      $region31: #{tpu_custom_call.1} parent=5 // pred_region
        // Predicated region
        $region33: #{tpu_custom_call.1} parent=31 // pred_check
          %p267 = pneg %p52
        $region34: #{tpu_custom_call.1} parent=31 // pred_check_branch
          %269 = sbr.rel (%p267) target = $region36
        $region35: #{tpu_custom_call.1} parent=31 // pred_region
          %s270 = sand.u32 %s42, 1
          %s271 = scalar_lea.sflag [#allocation3], %s270
          %s272 = sand.u32 %s42, 1
          %s273 = smul.addr %s272, 64
          %s274 = scalar_lea.vmem [#allocation2], %s273
          %s275 = smul.u32 8, %s26
          %s277 = ssub.s32 1024, 1024
          %278 = vsyncadd %s271, %s277
          %s279 = smul.addr %s25, 16
          %s280 = sadd.s32 %s275, %s279
          %s281 = smul.addr %s280, 128
          %s282 = scalar_lea.hbm %s0, %s281
          %s283 = sshll.u32 %s274, 4
          %s284 = int_to_ptr.vmem [resolvable:$true] %s283
          %289 = dma.hbm_to_vmem [thread:$0]  %s282, 1024, %s284, %s271, 128, 128, 8
        $region36: #{tpu_custom_call.1} parent=31 // pred_fallthru
          _
      $region32: #{tpu_custom_call.1} parent=5 // pred_fallthru
        _
      %p290 = scmp.le.s32.totalorder 1, %s18
      %p291 = scmp.lt.s32.totalorder %s18, 5
      %p292 = pnand %p290, %p291
      %p293 = pneg %p292
      // Predicated region
      $region37: #{tpu_custom_call.1} parent=5 // pred_check
        _
      $region38: #{tpu_custom_call.1} parent=5 // pred_check_branch
        %295 = sbr.rel (%p292) target = $region40
      $region39: #{tpu_custom_call.1} parent=5 // pred_region
        %s296 = ssub.s32 %s18, 1
        %s297 = sand.u32 %s45, 1
        %s298 = scalar_lea.sflag [#allocation3], %s297
        %s299 = sand.u32 %s45, 1
        %s300 = smul.addr %s299, 64
        %s301 = scalar_lea.vmem [#allocation2], %s300
        // Predicated region
        $region41: #{tpu_custom_call.1} parent=39 // pred_check
          %p302 = pneg %p58
        $region42: #{tpu_custom_call.1} parent=39 // pred_check_branch
          %304 = sbr.rel (%p302) target = $region44
        $region43: #{tpu_custom_call.1} parent=39 // pred_region
          %305 = dma.done %s298, 1024
        $region44: #{tpu_custom_call.1} parent=39 // pred_fallthru
          _
        // Predicated region
        $region45: #{tpu_custom_call.1} parent=39 // pred_check
          %p306 = pneg %p121
        $region46: #{tpu_custom_call.1} parent=39 // pred_check_branch
          %308 = sbr.rel (%p306) target = $region48
        $region47: #{tpu_custom_call.1} parent=39 // pred_region
          %309 = dma.done [#allocation5], 3072
        $region48: #{tpu_custom_call.1} parent=39 // pred_fallthru
          _
        %s310 = sand.u32 %s45, 1
        %s311 = scalar_lea.sflag [#allocation3], %s310
        %s312 = sand.u32 %s45, 1
        %s313 = smul.addr %s312, 64
        %s314 = scalar_lea.vmem [#allocation2], %s313
        %p315 = pneg %p58
        %p316 = pneg %p55
        %p317 = pneg %p79
        %p318 = pneg %p76
        %p319 = pneg %p100
        %p320 = pneg %p97
        %p321 = pneg %p121
        %p322 = pneg %p118
        %p323 = pneg %p142
        %p324 = pneg %p139
        %p325 = pneg %p170
        %p326 = pneg %p167
        %s327 = sand.u32 %s157, 1
        %s328 = sand.u32 %s157, 1
        %s329 = smul.addr %s328, 128
        %s330 = scalar_lea.vmem [#allocation6], %s329
        %p331 = pneg %p198
        %p332 = pneg %p195
        %s333 = sand.u32 %s185, 1
        %s334 = sand.u32 %s185, 1
        %s335 = smul.addr %s334, 128
        %s336 = scalar_lea.vmem [#allocation7], %s335
        %p337 = pneg %p226
        %p338 = pneg %p223
        %s339 = sand.u32 %s213, 1
        %s340 = sand.u32 %s213, 1
        %s341 = smul.addr %s340, 128
        %s342 = scalar_lea.vmem [#allocation8], %s341
        %s343 = smul.u32 8, %s28
        %s344 = smul.u32 8, %s28
        %s345 = smul.u32 8, %s28
        %s346 = smul.u32 8, %s28
        %v348 = vld [vmem:[%s301] sm:$0xff]
        %v349 = vld [vmem:[%s301 + $0x8] sm:$0xff]
        %v350 = vld [vmem:[%s301 + $0x10] sm:$0xff]
        %v351 = vld [vmem:[%s301 + $0x18] sm:$0xff]
        %v352 = vld [vmem:[%s301 + $0x20] sm:$0xff]
        %v353 = vld [vmem:[%s301 + $0x28] sm:$0xff]
        %v354 = vld [vmem:[%s301 + $0x30] sm:$0xff]
        %v355 = vld [vmem:[%s301 + $0x38] sm:$0xff]
        %356 = vadd.xlane.f32.xlu0 %v348
        %v357 = vpop.xlane.xlu0 %356
        %358 = vadd.xlane.f32.xlu0 %v349
        %v359 = vpop.xlane.xlu0 %358
        %360 = vadd.xlane.f32.xlu0 %v350
        %v361 = vpop.xlane.xlu0 %360
        %362 = vadd.xlane.f32.xlu0 %v351
        %v363 = vpop.xlane.xlu0 %362
        %364 = vadd.xlane.f32.xlu0 %v352
        %v365 = vpop.xlane.xlu0 %364
        %366 = vadd.xlane.f32.xlu0 %v353
        %v367 = vpop.xlane.xlu0 %366
        %368 = vadd.xlane.f32.xlu0 %v354
        %v369 = vpop.xlane.xlu0 %368
        %370 = vadd.xlane.f32.xlu0 %v355
        %v371 = vpop.xlane.xlu0 %370
        %v372 = vrcp.pop 128.0
        %v373 = vmul.f32 %v357, %v372
        %v374 = vmul.f32 %v359, %v372
        %v375 = vmul.f32 %v361, %v372
        %v376 = vmul.f32 %v363, %v372
        %v377 = vmul.f32 %v365, %v372
        %v378 = vmul.f32 %v367, %v372
        %v379 = vmul.f32 %v369, %v372
        %v380 = vmul.f32 %v371, %v372
        %v381 = vsub.f32 %v348, %v373
        %v382 = vsub.f32 %v349, %v374
        %v383 = vsub.f32 %v350, %v375
        %v384 = vsub.f32 %v351, %v376
        %v385 = vsub.f32 %v352, %v377
        %v386 = vsub.f32 %v353, %v378
        %v387 = vsub.f32 %v354, %v379
        %v388 = vsub.f32 %v355, %v380
        %v389 = vmul.f32 %v381, %v381
        %v390 = vmul.f32 %v382, %v382
        %v391 = vmul.f32 %v383, %v383
        %v392 = vmul.f32 %v384, %v384
        %v393 = vmul.f32 %v385, %v385
        %v394 = vmul.f32 %v386, %v386
        %v395 = vmul.f32 %v387, %v387
        %v396 = vmul.f32 %v388, %v388
        %397 = vadd.xlane.f32.xlu0 %v389
        %v398 = vpop.xlane.xlu0 %397
        %399 = vadd.xlane.f32.xlu0 %v390
        %v400 = vpop.xlane.xlu0 %399
        %401 = vadd.xlane.f32.xlu0 %v391
        %v402 = vpop.xlane.xlu0 %401
        %403 = vadd.xlane.f32.xlu0 %v392
        %v404 = vpop.xlane.xlu0 %403
        %405 = vadd.xlane.f32.xlu0 %v393
        %v406 = vpop.xlane.xlu0 %405
        %407 = vadd.xlane.f32.xlu0 %v394
        %v408 = vpop.xlane.xlu0 %407
        %409 = vadd.xlane.f32.xlu0 %v395
        %v410 = vpop.xlane.xlu0 %409
        %411 = vadd.xlane.f32.xlu0 %v396
        %v412 = vpop.xlane.xlu0 %411
        %v413 = vmul.f32 %v398, %v372
        %v414 = vmul.f32 %v400, %v372
        %v415 = vmul.f32 %v402, %v372
        %v416 = vmul.f32 %v404, %v372
        %v417 = vmul.f32 %v406, %v372
        %v418 = vmul.f32 %v408, %v372
        %v419 = vmul.f32 %v410, %v372
        %v420 = vmul.f32 %v412, %v372
        %v421 = vadd.f32 %v413, 1e-05
        %v422 = vadd.f32 %v414, 1e-05
        %v423 = vadd.f32 %v415, 1e-05
        %v424 = vadd.f32 %v416, 1e-05
        %v425 = vadd.f32 %v417, 1e-05
        %v426 = vadd.f32 %v418, 1e-05
        %v427 = vadd.f32 %v419, 1e-05
        %v428 = vadd.f32 %v420, 1e-05
        %v429 = vrsqrt.pop %v421
        %v430 = vrsqrt.pop %v422
        %v431 = vrsqrt.pop %v423
        %v432 = vrsqrt.pop %v424
        %v433 = vrsqrt.pop %v425
        %v434 = vrsqrt.pop %v426
        %v435 = vrsqrt.pop %v427
        %v436 = vrsqrt.pop %v428
        %v437 = vmul.f32 %v381, %v429
        %v438 = vmul.f32 %v382, %v430
        %v439 = vmul.f32 %v383, %v431
        %v440 = vmul.f32 %v384, %v432
        %v441 = vmul.f32 %v385, %v433
        %v442 = vmul.f32 %v386, %v434
        %v443 = vmul.f32 %v387, %v435
        %v444 = vmul.f32 %v388, %v436
        %v445 = vld [vmem:[%s1] sm:$0x1]
        %v447 = vlaneseq
        %v448 = vshrl.u32 %v447, 7
        %v449 = vsub.s32 0, %v448
        %v450 = vrot.slane %v445, %v449
        %v452 = vmul.f32 %v437, %v450
        %v453 = vmul.f32 %v438, %v450
        %v454 = vmul.f32 %v439, %v450
        %v455 = vmul.f32 %v440, %v450
        %v456 = vmul.f32 %v441, %v450
        %v457 = vmul.f32 %v442, %v450
        %v458 = vmul.f32 %v443, %v450
        %v459 = vmul.f32 %v444, %v450
        %v460 = vld [vmem:[%s2] sm:$0x1]
        %v462 = vlaneseq
        %v463 = vshrl.u32 %v462, 7
        %v464 = vsub.s32 0, %v463
        %v465 = vrot.slane %v460, %v464
        %v467 = vadd.f32 %v452, %v465
        %v468 = vadd.f32 %v453, %v465
        %v469 = vadd.f32 %v454, %v465
        %v470 = vadd.f32 %v455, %v465
        %v471 = vadd.f32 %v456, %v465
        %v472 = vadd.f32 %v457, %v465
        %v473 = vadd.f32 %v458, %v465
        %v474 = vadd.f32 %v459, %v465
        %v475 = vpack.c.bf16 %v468, %v467
        %v476 = vpack.c.bf16 %v470, %v469
        %v477 = vpack.c.bf16 %v472, %v471
        %v478 = vpack.c.bf16 %v474, %v473
        %v479 = vld [vmem:[#allocation4] sm:$0xff]
        %v480 = vld [vmem:[#allocation4 + $0x8] sm:$0xf]
        %v481 = vld [vmem:[#allocation4 + $0xc] sm:$0xff]
        %v482 = vld [vmem:[#allocation4 + $0x14] sm:$0xf]
        %v483 = vld [vmem:[#allocation4 + $0x18] sm:$0xff]
        %v484 = vld [vmem:[#allocation4 + $0x20] sm:$0xf]
        %v485 = vld [vmem:[#allocation4 + $0x24] sm:$0xff]
        %v486 = vld [vmem:[#allocation4 + $0x2c] sm:$0xf]
        %v487 = vld [vmem:[#allocation4 + $0x30] sm:$0xff]
        %v488 = vld [vmem:[#allocation4 + $0x38] sm:$0xf]
        %v489 = vld [vmem:[#allocation4 + $0x3c] sm:$0xff]
        %v490 = vld [vmem:[#allocation4 + $0x44] sm:$0xf]
        %v491 = vld [vmem:[#allocation4 + $0x48] sm:$0xff]
        %v492 = vld [vmem:[#allocation4 + $0x50] sm:$0xf]
        %v493 = vld [vmem:[#allocation4 + $0x54] sm:$0xff]
        %v494 = vld [vmem:[#allocation4 + $0x5c] sm:$0xf]
        %v495 = vld [vmem:[#allocation4 + $0x60] sm:$0xff]
        %v496 = vld [vmem:[#allocation4 + $0x68] sm:$0xf]
        %v497 = vld [vmem:[#allocation4 + $0x6c] sm:$0xff]
        %v498 = vld [vmem:[#allocation4 + $0x74] sm:$0xf]
        %v499 = vld [vmem:[#allocation4 + $0x78] sm:$0xff]
        %v500 = vld [vmem:[#allocation4 + $0x80] sm:$0xf]
        %v501 = vld [vmem:[#allocation4 + $0x84] sm:$0xff]
        %v502 = vld [vmem:[#allocation4 + $0x8c] sm:$0xf]
        %v503 = vld [vmem:[#allocation4 + $0x90] sm:$0xff]
        %v504 = vld [vmem:[#allocation4 + $0x98] sm:$0xf]
        %v505 = vld [vmem:[#allocation4 + $0x9c] sm:$0xff]
        %v506 = vld [vmem:[#allocation4 + $0xa4] sm:$0xf]
        %v507 = vld [vmem:[#allocation4 + $0xa8] sm:$0xff]
        %v508 = vld [vmem:[#allocation4 + $0xb0] sm:$0xf]
        %v509 = vld [vmem:[#allocation4 + $0xb4] sm:$0xff]
        %v510 = vld [vmem:[#allocation4 + $0xbc] sm:$0xf]
        %v511 = vld [vmem:[%s4] sm:$0x7]
        %v513 = vlaneseq
        %v514 = vshrl.u32 %v513, 7
        %v515 = vsub.s32 0, %v514
        %v516 = vrot.slane %v511, %v515
        %v517 = vlaneseq
        %v518 = vshrl.u32 %v517, 7
        %v519 = vsub.s32 1, %v518
        %v520 = vrot.slane %v511, %v519
        %v521 = vlaneseq
        %v522 = vshrl.u32 %v521, 7
        %v523 = vsub.s32 2, %v522
        %v524 = vrot.slane %v511, %v523
        %v560 = vunpack.c.l.b16 %v479
        %v561 = vunpack.c.h.b16 %v479
        %v562 = vunpack.c.l.b16 %v480
        %v563 = vunpack.c.l.b16 %v481
        %v564 = vunpack.c.h.b16 %v481
        %v565 = vunpack.c.l.b16 %v482
        %v566 = vunpack.c.l.b16 %v483
        %v567 = vunpack.c.h.b16 %v483
        %v568 = vunpack.c.l.b16 %v484
        %v569 = vunpack.c.l.b16 %v485
        %v570 = vunpack.c.h.b16 %v485
        %v571 = vunpack.c.l.b16 %v486
        %v572 = vunpack.c.l.b16 %v487
        %v573 = vunpack.c.h.b16 %v487
        %v574 = vunpack.c.l.b16 %v488
        %v575 = vunpack.c.l.b16 %v489
        %v576 = vunpack.c.h.b16 %v489
        %v577 = vunpack.c.l.b16 %v490
        %v578 = vunpack.c.l.b16 %v491
        %v579 = vunpack.c.h.b16 %v491
        %v580 = vunpack.c.l.b16 %v492
        %v581 = vunpack.c.l.b16 %v493
        %v582 = vunpack.c.h.b16 %v493
        %v583 = vunpack.c.l.b16 %v494
        %v584 = vunpack.c.l.b16 %v495
        %v585 = vunpack.c.h.b16 %v495
        %v586 = vunpack.c.l.b16 %v496
        %v587 = vunpack.c.l.b16 %v497
        %v588 = vunpack.c.h.b16 %v497
        %v589 = vunpack.c.l.b16 %v498
        %v590 = vunpack.c.l.b16 %v499
        %v591 = vunpack.c.h.b16 %v499
        %v592 = vunpack.c.l.b16 %v500
        %v593 = vunpack.c.l.b16 %v501
        %v594 = vunpack.c.h.b16 %v501
        %v595 = vunpack.c.l.b16 %v502
        %v596 = vunpack.c.l.b16 %v503
        %v597 = vunpack.c.h.b16 %v503
        %v598 = vunpack.c.l.b16 %v504
        %v599 = vunpack.c.l.b16 %v505
        %v600 = vunpack.c.h.b16 %v505
        %v601 = vunpack.c.l.b16 %v506
        %v602 = vunpack.c.l.b16 %v507
        %v603 = vunpack.c.h.b16 %v507
        %v604 = vunpack.c.l.b16 %v508
        %v605 = vunpack.c.l.b16 %v509
        %v606 = vunpack.c.h.b16 %v509
        %v607 = vunpack.c.l.b16 %v510
        %v608 = vpack.c.b16 %v563, %v560
        %v609 = vpack.c.b16 %v564, %v561
        %v610 = vpack.c.b16 %v565, %v562
        %v611 = vpack.c.b16 %v569, %v566
        %v612 = vpack.c.b16 %v570, %v567
        %v613 = vpack.c.b16 %v571, %v568
        %v614 = vpack.c.b16 %v575, %v572
        %v615 = vpack.c.b16 %v576, %v573
        %v616 = vpack.c.b16 %v577, %v574
        %v617 = vpack.c.b16 %v581, %v578
        %v618 = vpack.c.b16 %v582, %v579
        %v619 = vpack.c.b16 %v583, %v580
        %v620 = vpack.c.b16 %v587, %v584
        %v621 = vpack.c.b16 %v588, %v585
        %v622 = vpack.c.b16 %v589, %v586
        %v623 = vpack.c.b16 %v593, %v590
        %v624 = vpack.c.b16 %v594, %v591
        %v625 = vpack.c.b16 %v595, %v592
        %v626 = vpack.c.b16 %v599, %v596
        %v627 = vpack.c.b16 %v600, %v597
        %v628 = vpack.c.b16 %v601, %v598
        %v629 = vpack.c.b16 %v605, %v602
        %v630 = vpack.c.b16 %v606, %v603
        %v631 = vpack.c.b16 %v607, %v604
        %656 = vmatprep.subr.bf16.mxu0 %v609
        %657 = vmatpush1.bf16.msra.mxu0 %v608
        %658 = vmatprep.subr.bf16.mxu0 %v612
        %659 = vmatpush1.bf16.msra.mxu0 %v611
        %660 = vmatprep.subr.bf16.mxu0 %v615
        %661 = vmatpush1.bf16.msra.mxu0 %v614
        %662 = vmatprep.subr.bf16.mxu0 %v618
        %663 = vmatpush1.bf16.msra.mxu0 %v617
        %664 = vmatprep.subr.bf16.mxu0 %v621
        %665 = vmatpush1.bf16.msra.mxu0 %v620
        %666 = vmatprep.subr.bf16.mxu0 %v624
        %667 = vmatpush1.bf16.msra.mxu0 %v623
        %668 = vmatprep.subr.bf16.mxu0 %v627
        %669 = vmatpush1.bf16.msra.mxu0 %v626
        %670 = vmatprep.subr.bf16.mxu0 %v630
        %671 = vmatpush1.bf16.msra.mxu0 %v629
        %672 = vmatprep.subr.bf16.mxu0 0
        %673 = vmatpush1.bf16.msra.mxu0 0
        %674 = vmatprep.subr.bf16.mxu0 0
        %675 = vmatpush1.bf16.msra.mxu0 0
        %676 = vmatprep.subr.bf16.mxu0 0
        %677 = vmatpush1.bf16.msra.mxu0 0
        %678 = vmatprep.subr.bf16.mxu0 0
        %679 = vmatpush1.bf16.msra.mxu0 0
        %680 = vmatprep.subr.bf16.mxu0 0
        %681 = vmatpush1.bf16.msra.mxu0 0
        %682 = vmatprep.subr.bf16.mxu0 0
        %683 = vmatpush1.bf16.msra.mxu0 0
        %684 = vmatprep.subr.bf16.mxu0 0
        %685 = vmatpush1.bf16.msra.mxu0 0
        %686 = vmatprep.subr.bf16.mxu0 0
        %687 = vmatpush1.bf16.msra.mxu0 0
        %688 = vmatprep.mubr.bf16.mxu0 0
        %689 = vmatmul.mubr.bf16.gmra.mrb[0].mxu0 %v475
        %v690 = vpop.f32.mrb[0].mxu0
        %v691 = vadd.f32 %v516, %v690
        %v692 = vpop.f32.mrb[0].mxu0
        %v693 = vadd.f32 %v520, %v692
        %v694 = vpop.f32.mrb[0].mxu0
        %v695 = vadd.f32 %v516, %v694
        %v696 = vpop.f32.mrb[0].mxu0
        %v697 = vadd.f32 %v520, %v696
        %698 = vmatprep.mubr.bf16.mxu0 0
        %699 = vmatmul.mubr.bf16.gmra.mrb[0].mxu0 %v476
        %v700 = vpop.f32.mrb[0].mxu0
        %v701 = vadd.f32 %v516, %v700
        %v702 = vpop.f32.mrb[0].mxu0
        %v703 = vadd.f32 %v520, %v702
        %v704 = vpop.f32.mrb[0].mxu0
        %v705 = vadd.f32 %v516, %v704
        %v706 = vpop.f32.mrb[0].mxu0
        %v707 = vadd.f32 %v520, %v706
        %708 = vmatprep.mubr.bf16.mxu0 0
        %709 = vmatmul.mubr.bf16.gmra.mrb[0].mxu0 %v477
        %v710 = vpop.f32.mrb[0].mxu0
        %v711 = vadd.f32 %v516, %v710
        %v712 = vpop.f32.mrb[0].mxu0
        %v713 = vadd.f32 %v520, %v712
        %v714 = vpop.f32.mrb[0].mxu0
        %v715 = vadd.f32 %v516, %v714
        %v716 = vpop.f32.mrb[0].mxu0
        %v717 = vadd.f32 %v520, %v716
        %718 = vmatprep.mubr.bf16.mxu0 0
        %719 = vmatmul.mubr.bf16.gmra.mrb[0].mxu0 %v478
        %v720 = vpop.f32.mrb[0].mxu0
        %v721 = vadd.f32 %v516, %v720
        %v722 = vpop.f32.mrb[0].mxu0
        %v723 = vadd.f32 %v520, %v722
        %v724 = vpop.f32.mrb[0].mxu0
        %v725 = vadd.f32 %v516, %v724
        %v726 = vpop.f32.mrb[0].mxu0
        %v727 = vadd.f32 %v520, %v726
        %728 = vdwg.mxu0
        %729 = vmatprep.subr.bf16.mxu0 0
        %730 = vmatpush1.bf16.msra.mxu0 %v610
        %731 = vmatprep.subr.bf16.mxu0 0
        %732 = vmatpush1.bf16.msra.mxu0 %v613
        %733 = vmatprep.subr.bf16.mxu0 0
        %734 = vmatpush1.bf16.msra.mxu0 %v616
        %735 = vmatprep.subr.bf16.mxu0 0
        %736 = vmatpush1.bf16.msra.mxu0 %v619
        %737 = vmatprep.subr.bf16.mxu0 0
        %738 = vmatpush1.bf16.msra.mxu0 %v622
        %739 = vmatprep.subr.bf16.mxu0 0
        %740 = vmatpush1.bf16.msra.mxu0 %v625
        %741 = vmatprep.subr.bf16.mxu0 0
        %742 = vmatpush1.bf16.msra.mxu0 %v628
        %743 = vmatprep.subr.bf16.mxu0 0
        %744 = vmatpush1.bf16.msra.mxu0 %v631
        %745 = vmatprep.subr.bf16.mxu0 0
        %746 = vmatpush1.bf16.msra.mxu0 0
        %747 = vmatprep.subr.bf16.mxu0 0
        %748 = vmatpush1.bf16.msra.mxu0 0
        %749 = vmatprep.subr.bf16.mxu0 0
        %750 = vmatpush1.bf16.msra.mxu0 0
        %751 = vmatprep.subr.bf16.mxu0 0
        %752 = vmatpush1.bf16.msra.mxu0 0
        %753 = vmatprep.subr.bf16.mxu0 0
        %754 = vmatpush1.bf16.msra.mxu0 0
        %755 = vmatprep.subr.bf16.mxu0 0
        %756 = vmatpush1.bf16.msra.mxu0 0
        %757 = vmatprep.subr.bf16.mxu0 0
        %758 = vmatpush1.bf16.msra.mxu0 0
        %759 = vmatprep.subr.bf16.mxu0 0
        %760 = vmatpush1.bf16.msra.mxu0 0
        %761 = vmatprep.mubr.bf16.mxu0 0
        %762 = vmatmul.mubr.bf16.gmra.mrb[0].mxu0 %v475
        %v763 = vpop.f32.mrb[0].mxu0
        %v764 = vadd.f32 %v524, %v763
        %v765 = vpop.f32.mrb[0].mxu0
        %v766 = vpop.f32.mrb[0].mxu0
        %v767 = vadd.f32 %v524, %v766
        %v768 = vpop.f32.mrb[0].mxu0
        %769 = vmatprep.mubr.bf16.mxu0 0
        %770 = vmatmul.mubr.bf16.gmra.mrb[0].mxu0 %v476
        %v771 = vpop.f32.mrb[0].mxu0
        %v772 = vadd.f32 %v524, %v771
        %v773 = vpop.f32.mrb[0].mxu0
        %v774 = vpop.f32.mrb[0].mxu0
        %v775 = vadd.f32 %v524, %v774
        %v776 = vpop.f32.mrb[0].mxu0
        %777 = vmatprep.mubr.bf16.mxu0 0
        %778 = vmatmul.mubr.bf16.gmra.mrb[0].mxu0 %v477
        %v779 = vpop.f32.mrb[0].mxu0
        %v780 = vadd.f32 %v524, %v779
        %v781 = vpop.f32.mrb[0].mxu0
        %v782 = vpop.f32.mrb[0].mxu0
        %v783 = vadd.f32 %v524, %v782
        %v784 = vpop.f32.mrb[0].mxu0
        %785 = vmatprep.mubr.bf16.mxu0 0
        %786 = vmatmul.mubr.bf16.gmra.mrb[0].mxu0 %v478
        %v787 = vpop.f32.mrb[0].mxu0
        %v788 = vadd.f32 %v524, %v787
        %v789 = vpop.f32.mrb[0].mxu0
        %v790 = vpop.f32.mrb[0].mxu0
        %v791 = vadd.f32 %v524, %v790
        %v792 = vpop.f32.mrb[0].mxu0
        %793 = vdwg.mxu0
        %v794 = vmul.f32 %v691, 0.17677669
        %v795 = vmul.f32 %v695, 0.17677669
        %v796 = vmul.f32 %v701, 0.17677669
        %v797 = vmul.f32 %v705, 0.17677669
        %v798 = vmul.f32 %v711, 0.17677669
        %v799 = vmul.f32 %v715, 0.17677669
        %v800 = vmul.f32 %v721, 0.17677669
        %v801 = vmul.f32 %v725, 0.17677669
        %810 = vrot.lane.b32.xlu0 %v794, 96
        %v811 = vpop.permute.xlu0 %810
        %812 = vrot.lane.b32.xlu0 %v795, 96
        %v813 = vpop.permute.xlu0 %812
        %814 = vrot.lane.b32.xlu0 %v796, 96
        %v815 = vpop.permute.xlu0 %814
        %816 = vrot.lane.b32.xlu0 %v797, 96
        %v817 = vpop.permute.xlu0 %816
        %818 = vrot.lane.b32.xlu0 %v798, 96
        %v819 = vpop.permute.xlu0 %818
        %820 = vrot.lane.b32.xlu0 %v799, 96
        %v821 = vpop.permute.xlu0 %820
        %822 = vrot.lane.b32.xlu0 %v800, 96
        %v823 = vpop.permute.xlu0 %822
        %824 = vrot.lane.b32.xlu0 %v801, 96
        %v825 = vpop.permute.xlu0 %824
        %834 = vrot.lane.b32.xlu0 %v794, 64
        %v835 = vpop.permute.xlu0 %834
        %836 = vrot.lane.b32.xlu0 %v795, 64
        %v837 = vpop.permute.xlu0 %836
        %838 = vrot.lane.b32.xlu0 %v796, 64
        %v839 = vpop.permute.xlu0 %838
        %840 = vrot.lane.b32.xlu0 %v797, 64
        %v841 = vpop.permute.xlu0 %840
        %842 = vrot.lane.b32.xlu0 %v798, 64
        %v843 = vpop.permute.xlu0 %842
        %844 = vrot.lane.b32.xlu0 %v799, 64
        %v845 = vpop.permute.xlu0 %844
        %846 = vrot.lane.b32.xlu0 %v800, 64
        %v847 = vpop.permute.xlu0 %846
        %848 = vrot.lane.b32.xlu0 %v801, 64
        %v849 = vpop.permute.xlu0 %848
        %858 = vrot.lane.b32.xlu0 %v794, 32
        %v859 = vpop.permute.xlu0 %858
        %860 = vrot.lane.b32.xlu0 %v795, 32
        %v861 = vpop.permute.xlu0 %860
        %862 = vrot.lane.b32.xlu0 %v796, 32
        %v863 = vpop.permute.xlu0 %862
        %864 = vrot.lane.b32.xlu0 %v797, 32
        %v865 = vpop.permute.xlu0 %864
        %866 = vrot.lane.b32.xlu0 %v798, 32
        %v867 = vpop.permute.xlu0 %866
        %868 = vrot.lane.b32.xlu0 %v799, 32
        %v869 = vpop.permute.xlu0 %868
        %870 = vrot.lane.b32.xlu0 %v800, 32
        %v871 = vpop.permute.xlu0 %870
        %872 = vrot.lane.b32.xlu0 %v801, 32
        %v873 = vpop.permute.xlu0 %872
        %v882 = vcombine.low %v794, %v835
        %v883 = vcombine.high %v794, %v835
        %v885 = vunpack.c.l.s4 1983009808
        %v886 = vunpack.c.0.s8 %v885
        %v887 = vlaneseq
        %v888 = vshrl.u32 %v887, 7
        %v889 = vsub.s32 %v886, %v888
        %v890 = vrot.slane %v882, %v889
        %v892 = vunpack.c.l.s4 1983009808
        %v893 = vunpack.c.0.s8 %v892
        %v894 = vlaneseq
        %v895 = vshrl.u32 %v894, 7
        %v896 = vsub.s32 %v893, %v895
        %v897 = vrot.slane %v883, %v896
        %v898 = vcombine.low %v811, %v859
        %v899 = vcombine.high %v811, %v859
        %v901 = vunpack.c.l.s4 1983009808
        %v902 = vunpack.c.0.s8 %v901
        %v903 = vlaneseq
        %v904 = vshrl.u32 %v903, 7
        %v905 = vsub.s32 %v902, %v904
        %v906 = vrot.slane %v898, %v905
        %v908 = vunpack.c.l.s4 1983009808
        %v909 = vunpack.c.0.s8 %v908
        %v910 = vlaneseq
        %v911 = vshrl.u32 %v910, 7
        %v912 = vsub.s32 %v909, %v911
        %v913 = vrot.slane %v899, %v912
        %v914 = vcombine.low %v890, %v906
        %v915 = vcombine.high %v890, %v906
        %v917 = vunpack.c.l.s4 1934713408
        %v918 = vunpack.c.0.s8 %v917
        %v919 = vlaneseq
        %v920 = vshrl.u32 %v919, 7
        %v921 = vsub.s32 %v918, %v920
        %v922 = vrot.slane %v914, %v921
        %v924 = vunpack.c.l.s4 1934713408
        %v925 = vunpack.c.0.s8 %v924
        %v926 = vlaneseq
        %v927 = vshrl.u32 %v926, 7
        %v928 = vsub.s32 %v925, %v927
        %v929 = vrot.slane %v915, %v928
        %v930 = vcombine.low %v897, %v913
        %v931 = vcombine.high %v897, %v913
        %v933 = vunpack.c.l.s4 1934713408
        %v934 = vunpack.c.0.s8 %v933
        %v935 = vlaneseq
        %v936 = vshrl.u32 %v935, 7
        %v937 = vsub.s32 %v934, %v936
        %v938 = vrot.slane %v930, %v937
        %v940 = vunpack.c.l.s4 1934713408
        %v941 = vunpack.c.0.s8 %v940
        %v942 = vlaneseq
        %v943 = vshrl.u32 %v942, 7
        %v944 = vsub.s32 %v941, %v943
        %v945 = vrot.slane %v931, %v944
        %v946 = vcombine.high %v922, 0.0
        %v947 = vcombine.high %v929, 0.0
        %v948 = vcombine.high %v938, 0.0
        %v949 = vcombine.high %v945, 0.0
        %v950 = vcombine.low %v795, %v837
        %v951 = vcombine.high %v795, %v837
        %v953 = vunpack.c.l.s4 1983009808
        %v954 = vunpack.c.0.s8 %v953
        %v955 = vlaneseq
        %v956 = vshrl.u32 %v955, 7
        %v957 = vsub.s32 %v954, %v956
        %v958 = vrot.slane %v950, %v957
        %v960 = vunpack.c.l.s4 1983009808
        %v961 = vunpack.c.0.s8 %v960
        %v962 = vlaneseq
        %v963 = vshrl.u32 %v962, 7
        %v964 = vsub.s32 %v961, %v963
        %v965 = vrot.slane %v951, %v964
        %v966 = vcombine.low %v813, %v861
        %v967 = vcombine.high %v813, %v861
        %v969 = vunpack.c.l.s4 1983009808
        %v970 = vunpack.c.0.s8 %v969
        %v971 = vlaneseq
        %v972 = vshrl.u32 %v971, 7
        %v973 = vsub.s32 %v970, %v972
        %v974 = vrot.slane %v966, %v973
        %v976 = vunpack.c.l.s4 1983009808
        %v977 = vunpack.c.0.s8 %v976
        %v978 = vlaneseq
        %v979 = vshrl.u32 %v978, 7
        %v980 = vsub.s32 %v977, %v979
        %v981 = vrot.slane %v967, %v980
        %v982 = vcombine.low %v958, %v974
        %v983 = vcombine.high %v958, %v974
        %v985 = vunpack.c.l.s4 1934713408
        %v986 = vunpack.c.0.s8 %v985
        %v987 = vlaneseq
        %v988 = vshrl.u32 %v987, 7
        %v989 = vsub.s32 %v986, %v988
        %v990 = vrot.slane %v982, %v989
        %v992 = vunpack.c.l.s4 1934713408
        %v993 = vunpack.c.0.s8 %v992
        %v994 = vlaneseq
        %v995 = vshrl.u32 %v994, 7
        %v996 = vsub.s32 %v993, %v995
        %v997 = vrot.slane %v983, %v996
        %v998 = vcombine.low %v965, %v981
        %v999 = vcombine.high %v965, %v981
        %v1001 = vunpack.c.l.s4 1934713408
        %v1002 = vunpack.c.0.s8 %v1001
        %v1003 = vlaneseq
        %v1004 = vshrl.u32 %v1003, 7
        %v1005 = vsub.s32 %v1002, %v1004
        %v1006 = vrot.slane %v998, %v1005
        %v1008 = vunpack.c.l.s4 1934713408
        %v1009 = vunpack.c.0.s8 %v1008
        %v1010 = vlaneseq
        %v1011 = vshrl.u32 %v1010, 7
        %v1012 = vsub.s32 %v1009, %v1011
        %v1013 = vrot.slane %v999, %v1012
        %v1014 = vcombine.high %v990, 0.0
        %v1015 = vcombine.high %v997, 0.0
        %v1016 = vcombine.high %v1006, 0.0
        %v1017 = vcombine.high %v1013, 0.0
        %v1018 = vcombine.low %v796, %v839
        %v1019 = vcombine.high %v796, %v839
        %v1021 = vunpack.c.l.s4 1983009808
        %v1022 = vunpack.c.0.s8 %v1021
        %v1023 = vlaneseq
        %v1024 = vshrl.u32 %v1023, 7
        %v1025 = vsub.s32 %v1022, %v1024
        %v1026 = vrot.slane %v1018, %v1025
        %v1028 = vunpack.c.l.s4 1983009808
        %v1029 = vunpack.c.0.s8 %v1028
        %v1030 = vlaneseq
        %v1031 = vshrl.u32 %v1030, 7
        %v1032 = vsub.s32 %v1029, %v1031
        %v1033 = vrot.slane %v1019, %v1032
        %v1034 = vcombine.low %v815, %v863
        %v1035 = vcombine.high %v815, %v863
        %v1037 = vunpack.c.l.s4 1983009808
        %v1038 = vunpack.c.0.s8 %v1037
        %v1039 = vlaneseq
        %v1040 = vshrl.u32 %v1039, 7
        %v1041 = vsub.s32 %v1038, %v1040
        %v1042 = vrot.slane %v1034, %v1041
        %v1044 = vunpack.c.l.s4 1983009808
        %v1045 = vunpack.c.0.s8 %v1044
        %v1046 = vlaneseq
        %v1047 = vshrl.u32 %v1046, 7
        %v1048 = vsub.s32 %v1045, %v1047
        %v1049 = vrot.slane %v1035, %v1048
        %v1050 = vcombine.low %v1026, %v1042
        %v1051 = vcombine.high %v1026, %v1042
        %v1053 = vunpack.c.l.s4 1934713408
        %v1054 = vunpack.c.0.s8 %v1053
        %v1055 = vlaneseq
        %v1056 = vshrl.u32 %v1055, 7
        %v1057 = vsub.s32 %v1054, %v1056
        %v1058 = vrot.slane %v1050, %v1057
        %v1060 = vunpack.c.l.s4 1934713408
        %v1061 = vunpack.c.0.s8 %v1060
        %v1062 = vlaneseq
        %v1063 = vshrl.u32 %v1062, 7
        %v1064 = vsub.s32 %v1061, %v1063
        %v1065 = vrot.slane %v1051, %v1064
        %v1066 = vcombine.low %v1033, %v1049
        %v1067 = vcombine.high %v1033, %v1049
        %v1069 = vunpack.c.l.s4 1934713408
        %v1070 = vunpack.c.0.s8 %v1069
        %v1071 = vlaneseq
        %v1072 = vshrl.u32 %v1071, 7
        %v1073 = vsub.s32 %v1070, %v1072
        %v1074 = vrot.slane %v1066, %v1073
        %v1076 = vunpack.c.l.s4 1934713408
        %v1077 = vunpack.c.0.s8 %v1076
        %v1078 = vlaneseq
        %v1079 = vshrl.u32 %v1078, 7
        %v1080 = vsub.s32 %v1077, %v1079
        %v1081 = vrot.slane %v1067, %v1080
        %v1082 = vcombine.high %v1058, 0.0
        %v1083 = vcombine.high %v1065, 0.0
        %v1084 = vcombine.high %v1074, 0.0
        %v1085 = vcombine.high %v1081, 0.0
        %v1086 = vcombine.low %v797, %v841
        %v1087 = vcombine.high %v797, %v841
        %v1089 = vunpack.c.l.s4 1983009808
        %v1090 = vunpack.c.0.s8 %v1089
        %v1091 = vlaneseq
        %v1092 = vshrl.u32 %v1091, 7
        %v1093 = vsub.s32 %v1090, %v1092
        %v1094 = vrot.slane %v1086, %v1093
        %v1096 = vunpack.c.l.s4 1983009808
        %v1097 = vunpack.c.0.s8 %v1096
        %v1098 = vlaneseq
        %v1099 = vshrl.u32 %v1098, 7
        %v1100 = vsub.s32 %v1097, %v1099
        %v1101 = vrot.slane %v1087, %v1100
        %v1102 = vcombine.low %v817, %v865
        %v1103 = vcombine.high %v817, %v865
        %v1105 = vunpack.c.l.s4 1983009808
        %v1106 = vunpack.c.0.s8 %v1105
        %v1107 = vlaneseq
        %v1108 = vshrl.u32 %v1107, 7
        %v1109 = vsub.s32 %v1106, %v1108
        %v1110 = vrot.slane %v1102, %v1109
        %v1112 = vunpack.c.l.s4 1983009808
        %v1113 = vunpack.c.0.s8 %v1112
        %v1114 = vlaneseq
        %v1115 = vshrl.u32 %v1114, 7
        %v1116 = vsub.s32 %v1113, %v1115
        %v1117 = vrot.slane %v1103, %v1116
        %v1118 = vcombine.low %v1094, %v1110
        %v1119 = vcombine.high %v1094, %v1110
        %v1121 = vunpack.c.l.s4 1934713408
        %v1122 = vunpack.c.0.s8 %v1121
        %v1123 = vlaneseq
        %v1124 = vshrl.u32 %v1123, 7
        %v1125 = vsub.s32 %v1122, %v1124
        %v1126 = vrot.slane %v1118, %v1125
        %v1128 = vunpack.c.l.s4 1934713408
        %v1129 = vunpack.c.0.s8 %v1128
        %v1130 = vlaneseq
        %v1131 = vshrl.u32 %v1130, 7
        %v1132 = vsub.s32 %v1129, %v1131
        %v1133 = vrot.slane %v1119, %v1132
        %v1134 = vcombine.low %v1101, %v1117
        %v1135 = vcombine.high %v1101, %v1117
        %v1137 = vunpack.c.l.s4 1934713408
        %v1138 = vunpack.c.0.s8 %v1137
        %v1139 = vlaneseq
        %v1140 = vshrl.u32 %v1139, 7
        %v1141 = vsub.s32 %v1138, %v1140
        %v1142 = vrot.slane %v1134, %v1141
        %v1144 = vunpack.c.l.s4 1934713408
        %v1145 = vunpack.c.0.s8 %v1144
        %v1146 = vlaneseq
        %v1147 = vshrl.u32 %v1146, 7
        %v1148 = vsub.s32 %v1145, %v1147
        %v1149 = vrot.slane %v1135, %v1148
        %v1150 = vcombine.high %v1126, 0.0
        %v1151 = vcombine.high %v1133, 0.0
        %v1152 = vcombine.high %v1142, 0.0
        %v1153 = vcombine.high %v1149, 0.0
        %v1154 = vcombine.low %v798, %v843
        %v1155 = vcombine.high %v798, %v843
        %v1157 = vunpack.c.l.s4 1983009808
        %v1158 = vunpack.c.0.s8 %v1157
        %v1159 = vlaneseq
        %v1160 = vshrl.u32 %v1159, 7
        %v1161 = vsub.s32 %v1158, %v1160
        %v1162 = vrot.slane %v1154, %v1161
        %v1164 = vunpack.c.l.s4 1983009808
        %v1165 = vunpack.c.0.s8 %v1164
        %v1166 = vlaneseq
        %v1167 = vshrl.u32 %v1166, 7
        %v1168 = vsub.s32 %v1165, %v1167
        %v1169 = vrot.slane %v1155, %v1168
        %v1170 = vcombine.low %v819, %v867
        %v1171 = vcombine.high %v819, %v867
        %v1173 = vunpack.c.l.s4 1983009808
        %v1174 = vunpack.c.0.s8 %v1173
        %v1175 = vlaneseq
        %v1176 = vshrl.u32 %v1175, 7
        %v1177 = vsub.s32 %v1174, %v1176
        %v1178 = vrot.slane %v1170, %v1177
        %v1180 = vunpack.c.l.s4 1983009808
        %v1181 = vunpack.c.0.s8 %v1180
        %v1182 = vlaneseq
        %v1183 = vshrl.u32 %v1182, 7
        %v1184 = vsub.s32 %v1181, %v1183
        %v1185 = vrot.slane %v1171, %v1184
        %v1186 = vcombine.low %v1162, %v1178
        %v1187 = vcombine.high %v1162, %v1178
        %v1189 = vunpack.c.l.s4 1934713408
        %v1190 = vunpack.c.0.s8 %v1189
        %v1191 = vlaneseq
        %v1192 = vshrl.u32 %v1191, 7
        %v1193 = vsub.s32 %v1190, %v1192
        %v1194 = vrot.slane %v1186, %v1193
        %v1196 = vunpack.c.l.s4 1934713408
        %v1197 = vunpack.c.0.s8 %v1196
        %v1198 = vlaneseq
        %v1199 = vshrl.u32 %v1198, 7
        %v1200 = vsub.s32 %v1197, %v1199
        %v1201 = vrot.slane %v1187, %v1200
        %v1202 = vcombine.low %v1169, %v1185
        %v1203 = vcombine.high %v1169, %v1185
        %v1205 = vunpack.c.l.s4 1934713408
        %v1206 = vunpack.c.0.s8 %v1205
        %v1207 = vlaneseq
        %v1208 = vshrl.u32 %v1207, 7
        %v1209 = vsub.s32 %v1206, %v1208
        %v1210 = vrot.slane %v1202, %v1209
        %v1212 = vunpack.c.l.s4 1934713408
        %v1213 = vunpack.c.0.s8 %v1212
        %v1214 = vlaneseq
        %v1215 = vshrl.u32 %v1214, 7
        %v1216 = vsub.s32 %v1213, %v1215
        %v1217 = vrot.slane %v1203, %v1216
        %v1218 = vcombine.high %v1194, 0.0
        %v1219 = vcombine.high %v1201, 0.0
        %v1220 = vcombine.high %v1210, 0.0
        %v1221 = vcombine.high %v1217, 0.0
        %v1222 = vcombine.low %v799, %v845
        %v1223 = vcombine.high %v799, %v845
        %v1225 = vunpack.c.l.s4 1983009808
        %v1226 = vunpack.c.0.s8 %v1225
        %v1227 = vlaneseq
        %v1228 = vshrl.u32 %v1227, 7
        %v1229 = vsub.s32 %v1226, %v1228
        %v1230 = vrot.slane %v1222, %v1229
        %v1232 = vunpack.c.l.s4 1983009808
        %v1233 = vunpack.c.0.s8 %v1232
        %v1234 = vlaneseq
        %v1235 = vshrl.u32 %v1234, 7
        %v1236 = vsub.s32 %v1233, %v1235
        %v1237 = vrot.slane %v1223, %v1236
        %v1238 = vcombine.low %v821, %v869
        %v1239 = vcombine.high %v821, %v869
        %v1241 = vunpack.c.l.s4 1983009808
        %v1242 = vunpack.c.0.s8 %v1241
        %v1243 = vlaneseq
        %v1244 = vshrl.u32 %v1243, 7
        %v1245 = vsub.s32 %v1242, %v1244
        %v1246 = vrot.slane %v1238, %v1245
        %v1248 = vunpack.c.l.s4 1983009808
        %v1249 = vunpack.c.0.s8 %v1248
        %v1250 = vlaneseq
        %v1251 = vshrl.u32 %v1250, 7
        %v1252 = vsub.s32 %v1249, %v1251
        %v1253 = vrot.slane %v1239, %v1252
        %v1254 = vcombine.low %v1230, %v1246
        %v1255 = vcombine.high %v1230, %v1246
        %v1257 = vunpack.c.l.s4 1934713408
        %v1258 = vunpack.c.0.s8 %v1257
        %v1259 = vlaneseq
        %v1260 = vshrl.u32 %v1259, 7
        %v1261 = vsub.s32 %v1258, %v1260
        %v1262 = vrot.slane %v1254, %v1261
        %v1264 = vunpack.c.l.s4 1934713408
        %v1265 = vunpack.c.0.s8 %v1264
        %v1266 = vlaneseq
        %v1267 = vshrl.u32 %v1266, 7
        %v1268 = vsub.s32 %v1265, %v1267
        %v1269 = vrot.slane %v1255, %v1268
        %v1270 = vcombine.low %v1237, %v1253
        %v1271 = vcombine.high %v1237, %v1253
        %v1273 = vunpack.c.l.s4 1934713408
        %v1274 = vunpack.c.0.s8 %v1273
        %v1275 = vlaneseq
        %v1276 = vshrl.u32 %v1275, 7
        %v1277 = vsub.s32 %v1274, %v1276
        %v1278 = vrot.slane %v1270, %v1277
        %v1280 = vunpack.c.l.s4 1934713408
        %v1281 = vunpack.c.0.s8 %v1280
        %v1282 = vlaneseq
        %v1283 = vshrl.u32 %v1282, 7
        %v1284 = vsub.s32 %v1281, %v1283
        %v1285 = vrot.slane %v1271, %v1284
        %v1286 = vcombine.high %v1262, 0.0
        %v1287 = vcombine.high %v1269, 0.0
        %v1288 = vcombine.high %v1278, 0.0
        %v1289 = vcombine.high %v1285, 0.0
        %v1290 = vcombine.low %v800, %v847
        %v1291 = vcombine.high %v800, %v847
        %v1293 = vunpack.c.l.s4 1983009808
        %v1294 = vunpack.c.0.s8 %v1293
        %v1295 = vlaneseq
        %v1296 = vshrl.u32 %v1295, 7
        %v1297 = vsub.s32 %v1294, %v1296
        %v1298 = vrot.slane %v1290, %v1297
        %v1300 = vunpack.c.l.s4 1983009808
        %v1301 = vunpack.c.0.s8 %v1300
        %v1302 = vlaneseq
        %v1303 = vshrl.u32 %v1302, 7
        %v1304 = vsub.s32 %v1301, %v1303
        %v1305 = vrot.slane %v1291, %v1304
        %v1306 = vcombine.low %v823, %v871
        %v1307 = vcombine.high %v823, %v871
        %v1309 = vunpack.c.l.s4 1983009808
        %v1310 = vunpack.c.0.s8 %v1309
        %v1311 = vlaneseq
        %v1312 = vshrl.u32 %v1311, 7
        %v1313 = vsub.s32 %v1310, %v1312
        %v1314 = vrot.slane %v1306, %v1313
        %v1316 = vunpack.c.l.s4 1983009808
        %v1317 = vunpack.c.0.s8 %v1316
        %v1318 = vlaneseq
        %v1319 = vshrl.u32 %v1318, 7
        %v1320 = vsub.s32 %v1317, %v1319
        %v1321 = vrot.slane %v1307, %v1320
        %v1322 = vcombine.low %v1298, %v1314
        %v1323 = vcombine.high %v1298, %v1314
        %v1325 = vunpack.c.l.s4 1934713408
        %v1326 = vunpack.c.0.s8 %v1325
        %v1327 = vlaneseq
        %v1328 = vshrl.u32 %v1327, 7
        %v1329 = vsub.s32 %v1326, %v1328
        %v1330 = vrot.slane %v1322, %v1329
        %v1332 = vunpack.c.l.s4 1934713408
        %v1333 = vunpack.c.0.s8 %v1332
        %v1334 = vlaneseq
        %v1335 = vshrl.u32 %v1334, 7
        %v1336 = vsub.s32 %v1333, %v1335
        %v1337 = vrot.slane %v1323, %v1336
        %v1338 = vcombine.low %v1305, %v1321
        %v1339 = vcombine.high %v1305, %v1321
        %v1341 = vunpack.c.l.s4 1934713408
        %v1342 = vunpack.c.0.s8 %v1341
        %v1343 = vlaneseq
        %v1344 = vshrl.u32 %v1343, 7
        %v1345 = vsub.s32 %v1342, %v1344
        %v1346 = vrot.slane %v1338, %v1345
        %v1348 = vunpack.c.l.s4 1934713408
        %v1349 = vunpack.c.0.s8 %v1348
        %v1350 = vlaneseq
        %v1351 = vshrl.u32 %v1350, 7
        %v1352 = vsub.s32 %v1349, %v1351
        %v1353 = vrot.slane %v1339, %v1352
        %v1354 = vcombine.high %v1330, 0.0
        %v1355 = vcombine.high %v1337, 0.0
        %v1356 = vcombine.high %v1346, 0.0
        %v1357 = vcombine.high %v1353, 0.0
        %v1358 = vcombine.low %v801, %v849
        %v1359 = vcombine.high %v801, %v849
        %v1361 = vunpack.c.l.s4 1983009808
        %v1362 = vunpack.c.0.s8 %v1361
        %v1363 = vlaneseq
        %v1364 = vshrl.u32 %v1363, 7
        %v1365 = vsub.s32 %v1362, %v1364
        %v1366 = vrot.slane %v1358, %v1365
        %v1368 = vunpack.c.l.s4 1983009808
        %v1369 = vunpack.c.0.s8 %v1368
        %v1370 = vlaneseq
        %v1371 = vshrl.u32 %v1370, 7
        %v1372 = vsub.s32 %v1369, %v1371
        %v1373 = vrot.slane %v1359, %v1372
        %v1374 = vcombine.low %v825, %v873
        %v1375 = vcombine.high %v825, %v873
        %v1377 = vunpack.c.l.s4 1983009808
        %v1378 = vunpack.c.0.s8 %v1377
        %v1379 = vlaneseq
        %v1380 = vshrl.u32 %v1379, 7
        %v1381 = vsub.s32 %v1378, %v1380
        %v1382 = vrot.slane %v1374, %v1381
        %v1384 = vunpack.c.l.s4 1983009808
        %v1385 = vunpack.c.0.s8 %v1384
        %v1386 = vlaneseq
        %v1387 = vshrl.u32 %v1386, 7
        %v1388 = vsub.s32 %v1385, %v1387
        %v1389 = vrot.slane %v1375, %v1388
        %v1390 = vcombine.low %v1366, %v1382
        %v1391 = vcombine.high %v1366, %v1382
        %v1393 = vunpack.c.l.s4 1934713408
        %v1394 = vunpack.c.0.s8 %v1393
        %v1395 = vlaneseq
        %v1396 = vshrl.u32 %v1395, 7
        %v1397 = vsub.s32 %v1394, %v1396
        %v1398 = vrot.slane %v1390, %v1397
        %v1400 = vunpack.c.l.s4 1934713408
        %v1401 = vunpack.c.0.s8 %v1400
        %v1402 = vlaneseq
        %v1403 = vshrl.u32 %v1402, 7
        %v1404 = vsub.s32 %v1401, %v1403
        %v1405 = vrot.slane %v1391, %v1404
        %v1406 = vcombine.low %v1373, %v1389
        %v1407 = vcombine.high %v1373, %v1389
        %v1409 = vunpack.c.l.s4 1934713408
        %v1410 = vunpack.c.0.s8 %v1409
        %v1411 = vlaneseq
        %v1412 = vshrl.u32 %v1411, 7
        %v1413 = vsub.s32 %v1410, %v1412
        %v1414 = vrot.slane %v1406, %v1413
        %v1416 = vunpack.c.l.s4 1934713408
        %v1417 = vunpack.c.0.s8 %v1416
        %v1418 = vlaneseq
        %v1419 = vshrl.u32 %v1418, 7
        %v1420 = vsub.s32 %v1417, %v1419
        %v1421 = vrot.slane %v1407, %v1420
        %v1422 = vcombine.high %v1398, 0.0
        %v1423 = vcombine.high %v1405, 0.0
        %v1424 = vcombine.high %v1414, 0.0
        %v1425 = vcombine.high %v1421, 0.0
        %v1426 = vcombine.low %v922, %v929
        %v1428 = vunpack.c.l.s4 1983009808
        %v1429 = vunpack.c.0.s8 %v1428
        %v1430 = vlaneseq
        %v1431 = vshrl.u32 %v1430, 7
        %v1432 = vsub.s32 %v1429, %v1431
        %v1433 = vrot.slane %v1426, %v1432
        %v1434 = vcombine.low %v946, %v947
        %v1436 = vunpack.c.l.s4 1983009808
        %v1437 = vunpack.c.0.s8 %v1436
        %v1438 = vlaneseq
        %v1439 = vshrl.u32 %v1438, 7
        %v1440 = vsub.s32 %v1437, %v1439
        %v1441 = vrot.slane %v1434, %v1440
        %v1442 = vcombine.low %v938, %v945
        %v1444 = vunpack.c.l.s4 1983009808
        %v1445 = vunpack.c.0.s8 %v1444
        %v1446 = vlaneseq
        %v1447 = vshrl.u32 %v1446, 7
        %v1448 = vsub.s32 %v1445, %v1447
        %v1449 = vrot.slane %v1442, %v1448
        %v1450 = vcombine.low %v948, %v949
        %v1452 = vunpack.c.l.s4 1983009808
        %v1453 = vunpack.c.0.s8 %v1452
        %v1454 = vlaneseq
        %v1455 = vshrl.u32 %v1454, 7
        %v1456 = vsub.s32 %v1453, %v1455
        %v1457 = vrot.slane %v1450, %v1456
        %v1458 = vcombine.low %v1433, %v1441
        %v1459 = vcombine.high %v1433, %v1441
        %v1461 = vunpack.c.l.s4 1934713408
        %v1462 = vunpack.c.0.s8 %v1461
        %v1463 = vlaneseq
        %v1464 = vshrl.u32 %v1463, 7
        %v1465 = vsub.s32 %v1462, %v1464
        %v1466 = vrot.slane %v1458, %v1465
        %v1468 = vunpack.c.l.s4 1934713408
        %v1469 = vunpack.c.0.s8 %v1468
        %v1470 = vlaneseq
        %v1471 = vshrl.u32 %v1470, 7
        %v1472 = vsub.s32 %v1469, %v1471
        %v1473 = vrot.slane %v1459, %v1472
        %v1474 = vcombine.low %v1449, %v1457
        %v1475 = vcombine.high %v1449, %v1457
        %v1477 = vunpack.c.l.s4 1934713408
        %v1478 = vunpack.c.0.s8 %v1477
        %v1479 = vlaneseq
        %v1480 = vshrl.u32 %v1479, 7
        %v1481 = vsub.s32 %v1478, %v1480
        %v1482 = vrot.slane %v1474, %v1481
        %v1484 = vunpack.c.l.s4 1934713408
        %v1485 = vunpack.c.0.s8 %v1484
        %v1486 = vlaneseq
        %v1487 = vshrl.u32 %v1486, 7
        %v1488 = vsub.s32 %v1485, %v1487
        %v1489 = vrot.slane %v1475, %v1488
        %v1490 = vcombine.low %v1466, %v1482
        %v1491 = vcombine.high %v1466, %v1482
        %v1492 = vcombine.low %v1473, %v1489
        %v1493 = vcombine.high %v1473, %v1489
        %v1494 = vcombine.low %v990, %v997
        %v1496 = vunpack.c.l.s4 1983009808
        %v1497 = vunpack.c.0.s8 %v1496
        %v1498 = vlaneseq
        %v1499 = vshrl.u32 %v1498, 7
        %v1500 = vsub.s32 %v1497, %v1499
        %v1501 = vrot.slane %v1494, %v1500
        %v1502 = vcombine.low %v1014, %v1015
        %v1504 = vunpack.c.l.s4 1983009808
        %v1505 = vunpack.c.0.s8 %v1504
        %v1506 = vlaneseq
        %v1507 = vshrl.u32 %v1506, 7
        %v1508 = vsub.s32 %v1505, %v1507
        %v1509 = vrot.slane %v1502, %v1508
        %v1510 = vcombine.low %v1006, %v1013
        %v1512 = vunpack.c.l.s4 1983009808
        %v1513 = vunpack.c.0.s8 %v1512
        %v1514 = vlaneseq
        %v1515 = vshrl.u32 %v1514, 7
        %v1516 = vsub.s32 %v1513, %v1515
        %v1517 = vrot.slane %v1510, %v1516
        %v1518 = vcombine.low %v1016, %v1017
        %v1520 = vunpack.c.l.s4 1983009808
        %v1521 = vunpack.c.0.s8 %v1520
        %v1522 = vlaneseq
        %v1523 = vshrl.u32 %v1522, 7
        %v1524 = vsub.s32 %v1521, %v1523
        %v1525 = vrot.slane %v1518, %v1524
        %v1526 = vcombine.low %v1501, %v1509
        %v1527 = vcombine.high %v1501, %v1509
        %v1529 = vunpack.c.l.s4 1934713408
        %v1530 = vunpack.c.0.s8 %v1529
        %v1531 = vlaneseq
        %v1532 = vshrl.u32 %v1531, 7
        %v1533 = vsub.s32 %v1530, %v1532
        %v1534 = vrot.slane %v1526, %v1533
        %v1536 = vunpack.c.l.s4 1934713408
        %v1537 = vunpack.c.0.s8 %v1536
        %v1538 = vlaneseq
        %v1539 = vshrl.u32 %v1538, 7
        %v1540 = vsub.s32 %v1537, %v1539
        %v1541 = vrot.slane %v1527, %v1540
        %v1542 = vcombine.low %v1517, %v1525
        %v1543 = vcombine.high %v1517, %v1525
        %v1545 = vunpack.c.l.s4 1934713408
        %v1546 = vunpack.c.0.s8 %v1545
        %v1547 = vlaneseq
        %v1548 = vshrl.u32 %v1547, 7
        %v1549 = vsub.s32 %v1546, %v1548
        %v1550 = vrot.slane %v1542, %v1549
        %v1552 = vunpack.c.l.s4 1934713408
        %v1553 = vunpack.c.0.s8 %v1552
        %v1554 = vlaneseq
        %v1555 = vshrl.u32 %v1554, 7
        %v1556 = vsub.s32 %v1553, %v1555
        %v1557 = vrot.slane %v1543, %v1556
        %v1558 = vcombine.low %v1534, %v1550
        %v1559 = vcombine.high %v1534, %v1550
        %v1560 = vcombine.low %v1541, %v1557
        %v1561 = vcombine.high %v1541, %v1557
        %v1562 = vcombine.low %v1058, %v1065
        %v1564 = vunpack.c.l.s4 1983009808
        %v1565 = vunpack.c.0.s8 %v1564
        %v1566 = vlaneseq
        %v1567 = vshrl.u32 %v1566, 7
        %v1568 = vsub.s32 %v1565, %v1567
        %v1569 = vrot.slane %v1562, %v1568
        %v1570 = vcombine.low %v1082, %v1083
        %v1572 = vunpack.c.l.s4 1983009808
        %v1573 = vunpack.c.0.s8 %v1572
        %v1574 = vlaneseq
        %v1575 = vshrl.u32 %v1574, 7
        %v1576 = vsub.s32 %v1573, %v1575
        %v1577 = vrot.slane %v1570, %v1576
        %v1578 = vcombine.low %v1074, %v1081
        %v1580 = vunpack.c.l.s4 1983009808
        %v1581 = vunpack.c.0.s8 %v1580
        %v1582 = vlaneseq
        %v1583 = vshrl.u32 %v1582, 7
        %v1584 = vsub.s32 %v1581, %v1583
        %v1585 = vrot.slane %v1578, %v1584
        %v1586 = vcombine.low %v1084, %v1085
        %v1588 = vunpack.c.l.s4 1983009808
        %v1589 = vunpack.c.0.s8 %v1588
        %v1590 = vlaneseq
        %v1591 = vshrl.u32 %v1590, 7
        %v1592 = vsub.s32 %v1589, %v1591
        %v1593 = vrot.slane %v1586, %v1592
        %v1594 = vcombine.low %v1569, %v1577
        %v1595 = vcombine.high %v1569, %v1577
        %v1597 = vunpack.c.l.s4 1934713408
        %v1598 = vunpack.c.0.s8 %v1597
        %v1599 = vlaneseq
        %v1600 = vshrl.u32 %v1599, 7
        %v1601 = vsub.s32 %v1598, %v1600
        %v1602 = vrot.slane %v1594, %v1601
        %v1604 = vunpack.c.l.s4 1934713408
        %v1605 = vunpack.c.0.s8 %v1604
        %v1606 = vlaneseq
        %v1607 = vshrl.u32 %v1606, 7
        %v1608 = vsub.s32 %v1605, %v1607
        %v1609 = vrot.slane %v1595, %v1608
        %v1610 = vcombine.low %v1585, %v1593
        %v1611 = vcombine.high %v1585, %v1593
        %v1613 = vunpack.c.l.s4 1934713408
        %v1614 = vunpack.c.0.s8 %v1613
        %v1615 = vlaneseq
        %v1616 = vshrl.u32 %v1615, 7
        %v1617 = vsub.s32 %v1614, %v1616
        %v1618 = vrot.slane %v1610, %v1617
        %v1620 = vunpack.c.l.s4 1934713408
        %v1621 = vunpack.c.0.s8 %v1620
        %v1622 = vlaneseq
        %v1623 = vshrl.u32 %v1622, 7
        %v1624 = vsub.s32 %v1621, %v1623
        %v1625 = vrot.slane %v1611, %v1624
        %v1626 = vcombine.low %v1602, %v1618
        %v1627 = vcombine.high %v1602, %v1618
        %v1628 = vcombine.low %v1609, %v1625
        %v1629 = vcombine.high %v1609, %v1625
        %v1630 = vcombine.low %v1126, %v1133
        %v1632 = vunpack.c.l.s4 1983009808
        %v1633 = vunpack.c.0.s8 %v1632
        %v1634 = vlaneseq
        %v1635 = vshrl.u32 %v1634, 7
        %v1636 = vsub.s32 %v1633, %v1635
        %v1637 = vrot.slane %v1630, %v1636
        %v1638 = vcombine.low %v1150, %v1151
        %v1640 = vunpack.c.l.s4 1983009808
        %v1641 = vunpack.c.0.s8 %v1640
        %v1642 = vlaneseq
        %v1643 = vshrl.u32 %v1642, 7
        %v1644 = vsub.s32 %v1641, %v1643
        %v1645 = vrot.slane %v1638, %v1644
        %v1646 = vcombine.low %v1142, %v1149
        %v1648 = vunpack.c.l.s4 1983009808
        %v1649 = vunpack.c.0.s8 %v1648
        %v1650 = vlaneseq
        %v1651 = vshrl.u32 %v1650, 7
        %v1652 = vsub.s32 %v1649, %v1651
        %v1653 = vrot.slane %v1646, %v1652
        %v1654 = vcombine.low %v1152, %v1153
        %v1656 = vunpack.c.l.s4 1983009808
        %v1657 = vunpack.c.0.s8 %v1656
        %v1658 = vlaneseq
        %v1659 = vshrl.u32 %v1658, 7
        %v1660 = vsub.s32 %v1657, %v1659
        %v1661 = vrot.slane %v1654, %v1660
        %v1662 = vcombine.low %v1637, %v1645
        %v1663 = vcombine.high %v1637, %v1645
        %v1665 = vunpack.c.l.s4 1934713408
        %v1666 = vunpack.c.0.s8 %v1665
        %v1667 = vlaneseq
        %v1668 = vshrl.u32 %v1667, 7
        %v1669 = vsub.s32 %v1666, %v1668
        %v1670 = vrot.slane %v1662, %v1669
        %v1672 = vunpack.c.l.s4 1934713408
        %v1673 = vunpack.c.0.s8 %v1672
        %v1674 = vlaneseq
        %v1675 = vshrl.u32 %v1674, 7
        %v1676 = vsub.s32 %v1673, %v1675
        %v1677 = vrot.slane %v1663, %v1676
        %v1678 = vcombine.low %v1653, %v1661
        %v1679 = vcombine.high %v1653, %v1661
        %v1681 = vunpack.c.l.s4 1934713408
        %v1682 = vunpack.c.0.s8 %v1681
        %v1683 = vlaneseq
        %v1684 = vshrl.u32 %v1683, 7
        %v1685 = vsub.s32 %v1682, %v1684
        %v1686 = vrot.slane %v1678, %v1685
        %v1688 = vunpack.c.l.s4 1934713408
        %v1689 = vunpack.c.0.s8 %v1688
        %v1690 = vlaneseq
        %v1691 = vshrl.u32 %v1690, 7
        %v1692 = vsub.s32 %v1689, %v1691
        %v1693 = vrot.slane %v1679, %v1692
        %v1694 = vcombine.low %v1670, %v1686
        %v1695 = vcombine.high %v1670, %v1686
        %v1696 = vcombine.low %v1677, %v1693
        %v1697 = vcombine.high %v1677, %v1693
        %v1698 = vcombine.low %v1194, %v1201
        %v1700 = vunpack.c.l.s4 1983009808
        %v1701 = vunpack.c.0.s8 %v1700
        %v1702 = vlaneseq
        %v1703 = vshrl.u32 %v1702, 7
        %v1704 = vsub.s32 %v1701, %v1703
        %v1705 = vrot.slane %v1698, %v1704
        %v1706 = vcombine.low %v1218, %v1219
        %v1708 = vunpack.c.l.s4 1983009808
        %v1709 = vunpack.c.0.s8 %v1708
        %v1710 = vlaneseq
        %v1711 = vshrl.u32 %v1710, 7
        %v1712 = vsub.s32 %v1709, %v1711
        %v1713 = vrot.slane %v1706, %v1712
        %v1714 = vcombine.low %v1210, %v1217
        %v1716 = vunpack.c.l.s4 1983009808
        %v1717 = vunpack.c.0.s8 %v1716
        %v1718 = vlaneseq
        %v1719 = vshrl.u32 %v1718, 7
        %v1720 = vsub.s32 %v1717, %v1719
        %v1721 = vrot.slane %v1714, %v1720
        %v1722 = vcombine.low %v1220, %v1221
        %v1724 = vunpack.c.l.s4 1983009808
        %v1725 = vunpack.c.0.s8 %v1724
        %v1726 = vlaneseq
        %v1727 = vshrl.u32 %v1726, 7
        %v1728 = vsub.s32 %v1725, %v1727
        %v1729 = vrot.slane %v1722, %v1728
        %v1730 = vcombine.low %v1705, %v1713
        %v1731 = vcombine.high %v1705, %v1713
        %v1733 = vunpack.c.l.s4 1934713408
        %v1734 = vunpack.c.0.s8 %v1733
        %v1735 = vlaneseq
        %v1736 = vshrl.u32 %v1735, 7
        %v1737 = vsub.s32 %v1734, %v1736
        %v1738 = vrot.slane %v1730, %v1737
        %v1740 = vunpack.c.l.s4 1934713408
        %v1741 = vunpack.c.0.s8 %v1740
        %v1742 = vlaneseq
        %v1743 = vshrl.u32 %v1742, 7
        %v1744 = vsub.s32 %v1741, %v1743
        %v1745 = vrot.slane %v1731, %v1744
        %v1746 = vcombine.low %v1721, %v1729
        %v1747 = vcombine.high %v1721, %v1729
        %v1749 = vunpack.c.l.s4 1934713408
        %v1750 = vunpack.c.0.s8 %v1749
        %v1751 = vlaneseq
        %v1752 = vshrl.u32 %v1751, 7
        %v1753 = vsub.s32 %v1750, %v1752
        %v1754 = vrot.slane %v1746, %v1753
        %v1756 = vunpack.c.l.s4 1934713408
        %v1757 = vunpack.c.0.s8 %v1756
        %v1758 = vlaneseq
        %v1759 = vshrl.u32 %v1758, 7
        %v1760 = vsub.s32 %v1757, %v1759
        %v1761 = vrot.slane %v1747, %v1760
        %v1762 = vcombine.low %v1738, %v1754
        %v1763 = vcombine.high %v1738, %v1754
        %v1764 = vcombine.low %v1745, %v1761
        %v1765 = vcombine.high %v1745, %v1761
        %v1766 = vcombine.low %v1262, %v1269
        %v1768 = vunpack.c.l.s4 1983009808
        %v1769 = vunpack.c.0.s8 %v1768
        %v1770 = vlaneseq
        %v1771 = vshrl.u32 %v1770, 7
        %v1772 = vsub.s32 %v1769, %v1771
        %v1773 = vrot.slane %v1766, %v1772
        %v1774 = vcombine.low %v1286, %v1287
        %v1776 = vunpack.c.l.s4 1983009808
        %v1777 = vunpack.c.0.s8 %v1776
        %v1778 = vlaneseq
        %v1779 = vshrl.u32 %v1778, 7
        %v1780 = vsub.s32 %v1777, %v1779
        %v1781 = vrot.slane %v1774, %v1780
        %v1782 = vcombine.low %v1278, %v1285
        %v1784 = vunpack.c.l.s4 1983009808
        %v1785 = vunpack.c.0.s8 %v1784
        %v1786 = vlaneseq
        %v1787 = vshrl.u32 %v1786, 7
        %v1788 = vsub.s32 %v1785, %v1787
        %v1789 = vrot.slane %v1782, %v1788
        %v1790 = vcombine.low %v1288, %v1289
        %v1792 = vunpack.c.l.s4 1983009808
        %v1793 = vunpack.c.0.s8 %v1792
        %v1794 = vlaneseq
        %v1795 = vshrl.u32 %v1794, 7
        %v1796 = vsub.s32 %v1793, %v1795
        %v1797 = vrot.slane %v1790, %v1796
        %v1798 = vcombine.low %v1773, %v1781
        %v1799 = vcombine.high %v1773, %v1781
        %v1801 = vunpack.c.l.s4 1934713408
        %v1802 = vunpack.c.0.s8 %v1801
        %v1803 = vlaneseq
        %v1804 = vshrl.u32 %v1803, 7
        %v1805 = vsub.s32 %v1802, %v1804
        %v1806 = vrot.slane %v1798, %v1805
        %v1808 = vunpack.c.l.s4 1934713408
        %v1809 = vunpack.c.0.s8 %v1808
        %v1810 = vlaneseq
        %v1811 = vshrl.u32 %v1810, 7
        %v1812 = vsub.s32 %v1809, %v1811
        %v1813 = vrot.slane %v1799, %v1812
        %v1814 = vcombine.low %v1789, %v1797
        %v1815 = vcombine.high %v1789, %v1797
        %v1817 = vunpack.c.l.s4 1934713408
        %v1818 = vunpack.c.0.s8 %v1817
        %v1819 = vlaneseq
        %v1820 = vshrl.u32 %v1819, 7
        %v1821 = vsub.s32 %v1818, %v1820
        %v1822 = vrot.slane %v1814, %v1821
        %v1824 = vunpack.c.l.s4 1934713408
        %v1825 = vunpack.c.0.s8 %v1824
        %v1826 = vlaneseq
        %v1827 = vshrl.u32 %v1826, 7
        %v1828 = vsub.s32 %v1825, %v1827
        %v1829 = vrot.slane %v1815, %v1828
        %v1830 = vcombine.low %v1806, %v1822
        %v1831 = vcombine.high %v1806, %v1822
        %v1832 = vcombine.low %v1813, %v1829
        %v1833 = vcombine.high %v1813, %v1829
        %v1834 = vcombine.low %v1330, %v1337
        %v1836 = vunpack.c.l.s4 1983009808
        %v1837 = vunpack.c.0.s8 %v1836
        %v1838 = vlaneseq
        %v1839 = vshrl.u32 %v1838, 7
        %v1840 = vsub.s32 %v1837, %v1839
        %v1841 = vrot.slane %v1834, %v1840
        %v1842 = vcombine.low %v1354, %v1355
        %v1844 = vunpack.c.l.s4 1983009808
        %v1845 = vunpack.c.0.s8 %v1844
        %v1846 = vlaneseq
        %v1847 = vshrl.u32 %v1846, 7
        %v1848 = vsub.s32 %v1845, %v1847
        %v1849 = vrot.slane %v1842, %v1848
        %v1850 = vcombine.low %v1346, %v1353
        %v1852 = vunpack.c.l.s4 1983009808
        %v1853 = vunpack.c.0.s8 %v1852
        %v1854 = vlaneseq
        %v1855 = vshrl.u32 %v1854, 7
        %v1856 = vsub.s32 %v1853, %v1855
        %v1857 = vrot.slane %v1850, %v1856
        %v1858 = vcombine.low %v1356, %v1357
        %v1860 = vunpack.c.l.s4 1983009808
        %v1861 = vunpack.c.0.s8 %v1860
        %v1862 = vlaneseq
        %v1863 = vshrl.u32 %v1862, 7
        %v1864 = vsub.s32 %v1861, %v1863
        %v1865 = vrot.slane %v1858, %v1864
        %v1866 = vcombine.low %v1841, %v1849
        %v1867 = vcombine.high %v1841, %v1849
        %v1869 = vunpack.c.l.s4 1934713408
        %v1870 = vunpack.c.0.s8 %v1869
        %v1871 = vlaneseq
        %v1872 = vshrl.u32 %v1871, 7
        %v1873 = vsub.s32 %v1870, %v1872
        %v1874 = vrot.slane %v1866, %v1873
        %v1876 = vunpack.c.l.s4 1934713408
        %v1877 = vunpack.c.0.s8 %v1876
        %v1878 = vlaneseq
        %v1879 = vshrl.u32 %v1878, 7
        %v1880 = vsub.s32 %v1877, %v1879
        %v1881 = vrot.slane %v1867, %v1880
        %v1882 = vcombine.low %v1857, %v1865
        %v1883 = vcombine.high %v1857, %v1865
        %v1885 = vunpack.c.l.s4 1934713408
        %v1886 = vunpack.c.0.s8 %v1885
        %v1887 = vlaneseq
        %v1888 = vshrl.u32 %v1887, 7
        %v1889 = vsub.s32 %v1886, %v1888
        %v1890 = vrot.slane %v1882, %v1889
        %v1892 = vunpack.c.l.s4 1934713408
        %v1893 = vunpack.c.0.s8 %v1892
        %v1894 = vlaneseq
        %v1895 = vshrl.u32 %v1894, 7
        %v1896 = vsub.s32 %v1893, %v1895
        %v1897 = vrot.slane %v1883, %v1896
        %v1898 = vcombine.low %v1874, %v1890
        %v1899 = vcombine.high %v1874, %v1890
        %v1900 = vcombine.low %v1881, %v1897
        %v1901 = vcombine.high %v1881, %v1897
        %v1902 = vcombine.low %v1398, %v1405
        %v1904 = vunpack.c.l.s4 1983009808
        %v1905 = vunpack.c.0.s8 %v1904
        %v1906 = vlaneseq
        %v1907 = vshrl.u32 %v1906, 7
        %v1908 = vsub.s32 %v1905, %v1907
        %v1909 = vrot.slane %v1902, %v1908
        %v1910 = vcombine.low %v1422, %v1423
        %v1912 = vunpack.c.l.s4 1983009808
        %v1913 = vunpack.c.0.s8 %v1912
        %v1914 = vlaneseq
        %v1915 = vshrl.u32 %v1914, 7
        %v1916 = vsub.s32 %v1913, %v1915
        %v1917 = vrot.slane %v1910, %v1916
        %v1918 = vcombine.low %v1414, %v1421
        %v1920 = vunpack.c.l.s4 1983009808
        %v1921 = vunpack.c.0.s8 %v1920
        %v1922 = vlaneseq
        %v1923 = vshrl.u32 %v1922, 7
        %v1924 = vsub.s32 %v1921, %v1923
        %v1925 = vrot.slane %v1918, %v1924
        %v1926 = vcombine.low %v1424, %v1425
        %v1928 = vunpack.c.l.s4 1983009808
        %v1929 = vunpack.c.0.s8 %v1928
        %v1930 = vlaneseq
        %v1931 = vshrl.u32 %v1930, 7
        %v1932 = vsub.s32 %v1929, %v1931
        %v1933 = vrot.slane %v1926, %v1932
        %v1934 = vcombine.low %v1909, %v1917
        %v1935 = vcombine.high %v1909, %v1917
        %v1937 = vunpack.c.l.s4 1934713408
        %v1938 = vunpack.c.0.s8 %v1937
        %v1939 = vlaneseq
        %v1940 = vshrl.u32 %v1939, 7
        %v1941 = vsub.s32 %v1938, %v1940
        %v1942 = vrot.slane %v1934, %v1941
        %v1944 = vunpack.c.l.s4 1934713408
        %v1945 = vunpack.c.0.s8 %v1944
        %v1946 = vlaneseq
        %v1947 = vshrl.u32 %v1946, 7
        %v1948 = vsub.s32 %v1945, %v1947
        %v1949 = vrot.slane %v1935, %v1948
        %v1950 = vcombine.low %v1925, %v1933
        %v1951 = vcombine.high %v1925, %v1933
        %v1953 = vunpack.c.l.s4 1934713408
        %v1954 = vunpack.c.0.s8 %v1953
        %v1955 = vlaneseq
        %v1956 = vshrl.u32 %v1955, 7
        %v1957 = vsub.s32 %v1954, %v1956
        %v1958 = vrot.slane %v1950, %v1957
        %v1960 = vunpack.c.l.s4 1934713408
        %v1961 = vunpack.c.0.s8 %v1960
        %v1962 = vlaneseq
        %v1963 = vshrl.u32 %v1962, 7
        %v1964 = vsub.s32 %v1961, %v1963
        %v1965 = vrot.slane %v1951, %v1964
        %v1966 = vcombine.low %v1942, %v1958
        %v1967 = vcombine.high %v1942, %v1958
        %v1968 = vcombine.low %v1949, %v1965
        %v1969 = vcombine.high %v1949, %v1965
        %v1970 = vpack.c.bf16 %v1558, %v1490
        %v1971 = vpack.c.bf16 %v1694, %v1626
        %v1972 = vpack.c.bf16 %v1830, %v1762
        %v1973 = vpack.c.bf16 %v1966, %v1898
        %v1974 = vpack.c.bf16 %v1559, %v1491
        %v1975 = vpack.c.bf16 %v1695, %v1627
        %v1976 = vpack.c.bf16 %v1831, %v1763
        %v1977 = vpack.c.bf16 %v1967, %v1899
        %v1978 = vpack.c.bf16 %v1560, %v1492
        %v1979 = vpack.c.bf16 %v1696, %v1628
        %v1980 = vpack.c.bf16 %v1832, %v1764
        %v1981 = vpack.c.bf16 %v1968, %v1900
        %v1982 = vpack.c.bf16 %v1561, %v1493
        %v1983 = vpack.c.bf16 %v1697, %v1629
        %v1984 = vpack.c.bf16 %v1833, %v1765
        %v1985 = vpack.c.bf16 %v1969, %v1901
        %v2002 = vunpack.c.l.b16 %v1970
        %v2003 = vunpack.c.h.b16 %v1970
        %v2004 = vunpack.c.l.b16 %v1971
        %v2005 = vunpack.c.h.b16 %v1971
        %v2006 = vunpack.c.l.b16 %v1972
        %v2007 = vunpack.c.h.b16 %v1972
        %v2008 = vunpack.c.l.b16 %v1973
        %v2009 = vunpack.c.h.b16 %v1973
        %v2010 = vunpack.c.l.b16 %v1974
        %v2011 = vunpack.c.h.b16 %v1974
        %v2012 = vunpack.c.l.b16 %v1975
        %v2013 = vunpack.c.h.b16 %v1975
        %v2014 = vunpack.c.l.b16 %v1976
        %v2015 = vunpack.c.h.b16 %v1976
        %v2016 = vunpack.c.l.b16 %v1977
        %v2017 = vunpack.c.h.b16 %v1977
        %v2018 = vunpack.c.l.b16 %v1978
        %v2019 = vunpack.c.h.b16 %v1978
        %v2020 = vunpack.c.l.b16 %v1979
        %v2021 = vunpack.c.h.b16 %v1979
        %v2022 = vunpack.c.l.b16 %v1980
        %v2023 = vunpack.c.h.b16 %v1980
        %v2024 = vunpack.c.l.b16 %v1981
        %v2025 = vunpack.c.h.b16 %v1981
        %v2026 = vunpack.c.l.b16 %v1982
        %v2027 = vunpack.c.h.b16 %v1982
        %v2028 = vunpack.c.l.b16 %v1983
        %v2029 = vunpack.c.h.b16 %v1983
        %v2030 = vunpack.c.l.b16 %v1984
        %v2031 = vunpack.c.h.b16 %v1984
        %v2032 = vunpack.c.l.b16 %v1985
        %v2033 = vunpack.c.h.b16 %v1985
        %v2034 = vpack.c.b16 %v2002, %v2002
        %v2035 = vpack.c.b16 %v2003, %v2003
        %v2036 = vpack.c.b16 %v2004, %v2004
        %v2037 = vpack.c.b16 %v2005, %v2005
        %v2038 = vpack.c.b16 %v2006, %v2006
        %v2039 = vpack.c.b16 %v2007, %v2007
        %v2040 = vpack.c.b16 %v2008, %v2008
        %v2041 = vpack.c.b16 %v2009, %v2009
        %v2042 = vpack.c.b16 %v2010, %v2010
        %v2043 = vpack.c.b16 %v2011, %v2011
        %v2044 = vpack.c.b16 %v2012, %v2012
        %v2045 = vpack.c.b16 %v2013, %v2013
        %v2046 = vpack.c.b16 %v2014, %v2014
        %v2047 = vpack.c.b16 %v2015, %v2015
        %v2048 = vpack.c.b16 %v2016, %v2016
        %v2049 = vpack.c.b16 %v2017, %v2017
        %v2050 = vpack.c.b16 %v2018, %v2018
        %v2051 = vpack.c.b16 %v2019, %v2019
        %v2052 = vpack.c.b16 %v2020, %v2020
        %v2053 = vpack.c.b16 %v2021, %v2021
        %v2054 = vpack.c.b16 %v2022, %v2022
        %v2055 = vpack.c.b16 %v2023, %v2023
        %v2056 = vpack.c.b16 %v2024, %v2024
        %v2057 = vpack.c.b16 %v2025, %v2025
        %v2058 = vpack.c.b16 %v2026, %v2026
        %v2059 = vpack.c.b16 %v2027, %v2027
        %v2060 = vpack.c.b16 %v2028, %v2028
        %v2061 = vpack.c.b16 %v2029, %v2029
        %v2062 = vpack.c.b16 %v2030, %v2030
        %v2063 = vpack.c.b16 %v2031, %v2031
        %v2064 = vpack.c.b16 %v2032, %v2032
        %v2065 = vpack.c.b16 %v2033, %v2033
        %vm2098 = vcmask 257024
        %2099 = vst.msk [vmem:[%s330] sm:$0xf] %vm2098, %v2034
        %2100 = vst.msk [vmem:[%s330 + $0x4] sm:$0xf] %vm2098, %v2035
        %2101 = vst.msk [vmem:[%s330 + $0x8] sm:$0xf] %vm2098, %v2036
        %2102 = vst.msk [vmem:[%s330 + $0xc] sm:$0xf] %vm2098, %v2037
        %2103 = vst.msk [vmem:[%s330 + $0x10] sm:$0xf] %vm2098, %v2038
        %2104 = vst.msk [vmem:[%s330 + $0x14] sm:$0xf] %vm2098, %v2039
        %2105 = vst.msk [vmem:[%s330 + $0x18] sm:$0xf] %vm2098, %v2040
        %2106 = vst.msk [vmem:[%s330 + $0x1c] sm:$0xf] %vm2098, %v2041
        %2107 = vst.msk [vmem:[%s330 + $0x20] sm:$0xf] %vm2098, %v2042
        %2108 = vst.msk [vmem:[%s330 + $0x24] sm:$0xf] %vm2098, %v2043
        %2109 = vst.msk [vmem:[%s330 + $0x28] sm:$0xf] %vm2098, %v2044
        %2110 = vst.msk [vmem:[%s330 + $0x2c] sm:$0xf] %vm2098, %v2045
        %2111 = vst.msk [vmem:[%s330 + $0x30] sm:$0xf] %vm2098, %v2046
        %2112 = vst.msk [vmem:[%s330 + $0x34] sm:$0xf] %vm2098, %v2047
        %2113 = vst.msk [vmem:[%s330 + $0x38] sm:$0xf] %vm2098, %v2048
        %2114 = vst.msk [vmem:[%s330 + $0x3c] sm:$0xf] %vm2098, %v2049
        %2115 = vst.msk [vmem:[%s330 + $0x40] sm:$0xf] %vm2098, %v2050
        %2116 = vst.msk [vmem:[%s330 + $0x44] sm:$0xf] %vm2098, %v2051
        %2117 = vst.msk [vmem:[%s330 + $0x48] sm:$0xf] %vm2098, %v2052
        %2118 = vst.msk [vmem:[%s330 + $0x4c] sm:$0xf] %vm2098, %v2053
        %2119 = vst.msk [vmem:[%s330 + $0x50] sm:$0xf] %vm2098, %v2054
        %2120 = vst.msk [vmem:[%s330 + $0x54] sm:$0xf] %vm2098, %v2055
        %2121 = vst.msk [vmem:[%s330 + $0x58] sm:$0xf] %vm2098, %v2056
        %2122 = vst.msk [vmem:[%s330 + $0x5c] sm:$0xf] %vm2098, %v2057
        %2123 = vst.msk [vmem:[%s330 + $0x60] sm:$0xf] %vm2098, %v2058
        %2124 = vst.msk [vmem:[%s330 + $0x64] sm:$0xf] %vm2098, %v2059
        %2125 = vst.msk [vmem:[%s330 + $0x68] sm:$0xf] %vm2098, %v2060
        %2126 = vst.msk [vmem:[%s330 + $0x6c] sm:$0xf] %vm2098, %v2061
        %2127 = vst.msk [vmem:[%s330 + $0x70] sm:$0xf] %vm2098, %v2062
        %2128 = vst.msk [vmem:[%s330 + $0x74] sm:$0xf] %vm2098, %v2063
        %2129 = vst.msk [vmem:[%s330 + $0x78] sm:$0xf] %vm2098, %v2064
        %2130 = vst.msk [vmem:[%s330 + $0x7c] sm:$0xf] %vm2098, %v2065
        %2139 = vrot.lane.b32.xlu0 %v693, 96
        %v2140 = vpop.permute.xlu0 %2139
        %2141 = vrot.lane.b32.xlu0 %v697, 96
        %v2142 = vpop.permute.xlu0 %2141
        %2143 = vrot.lane.b32.xlu0 %v703, 96
        %v2144 = vpop.permute.xlu0 %2143
        %2145 = vrot.lane.b32.xlu0 %v707, 96
        %v2146 = vpop.permute.xlu0 %2145
        %2147 = vrot.lane.b32.xlu0 %v713, 96
        %v2148 = vpop.permute.xlu0 %2147
        %2149 = vrot.lane.b32.xlu0 %v717, 96
        %v2150 = vpop.permute.xlu0 %2149
        %2151 = vrot.lane.b32.xlu0 %v723, 96
        %v2152 = vpop.permute.xlu0 %2151
        %2153 = vrot.lane.b32.xlu0 %v727, 96
        %v2154 = vpop.permute.xlu0 %2153
        %2163 = vrot.lane.b32.xlu0 %v693, 64
        %v2164 = vpop.permute.xlu0 %2163
        %2165 = vrot.lane.b32.xlu0 %v697, 64
        %v2166 = vpop.permute.xlu0 %2165
        %2167 = vrot.lane.b32.xlu0 %v703, 64
        %v2168 = vpop.permute.xlu0 %2167
        %2169 = vrot.lane.b32.xlu0 %v707, 64
        %v2170 = vpop.permute.xlu0 %2169
        %2171 = vrot.lane.b32.xlu0 %v713, 64
        %v2172 = vpop.permute.xlu0 %2171
        %2173 = vrot.lane.b32.xlu0 %v717, 64
        %v2174 = vpop.permute.xlu0 %2173
        %2175 = vrot.lane.b32.xlu0 %v723, 64
        %v2176 = vpop.permute.xlu0 %2175
        %2177 = vrot.lane.b32.xlu0 %v727, 64
        %v2178 = vpop.permute.xlu0 %2177
        %2187 = vrot.lane.b32.xlu0 %v693, 32
        %v2188 = vpop.permute.xlu0 %2187
        %2189 = vrot.lane.b32.xlu0 %v697, 32
        %v2190 = vpop.permute.xlu0 %2189
        %2191 = vrot.lane.b32.xlu0 %v703, 32
        %v2192 = vpop.permute.xlu0 %2191
        %2193 = vrot.lane.b32.xlu0 %v707, 32
        %v2194 = vpop.permute.xlu0 %2193
        %2195 = vrot.lane.b32.xlu0 %v713, 32
        %v2196 = vpop.permute.xlu0 %2195
        %2197 = vrot.lane.b32.xlu0 %v717, 32
        %v2198 = vpop.permute.xlu0 %2197
        %2199 = vrot.lane.b32.xlu0 %v723, 32
        %v2200 = vpop.permute.xlu0 %2199
        %2201 = vrot.lane.b32.xlu0 %v727, 32
        %v2202 = vpop.permute.xlu0 %2201
        %v2211 = vcombine.low %v693, %v2164
        %v2212 = vcombine.high %v693, %v2164
        %v2214 = vunpack.c.l.s4 1983009808
        %v2215 = vunpack.c.0.s8 %v2214
        %v2216 = vlaneseq
        %v2217 = vshrl.u32 %v2216, 7
        %v2218 = vsub.s32 %v2215, %v2217
        %v2219 = vrot.slane %v2211, %v2218
        %v2221 = vunpack.c.l.s4 1983009808
        %v2222 = vunpack.c.0.s8 %v2221
        %v2223 = vlaneseq
        %v2224 = vshrl.u32 %v2223, 7
        %v2225 = vsub.s32 %v2222, %v2224
        %v2226 = vrot.slane %v2212, %v2225
        %v2227 = vcombine.low %v2140, %v2188
        %v2228 = vcombine.high %v2140, %v2188
        %v2230 = vunpack.c.l.s4 1983009808
        %v2231 = vunpack.c.0.s8 %v2230
        %v2232 = vlaneseq
        %v2233 = vshrl.u32 %v2232, 7
        %v2234 = vsub.s32 %v2231, %v2233
        %v2235 = vrot.slane %v2227, %v2234
        %v2237 = vunpack.c.l.s4 1983009808
        %v2238 = vunpack.c.0.s8 %v2237
        %v2239 = vlaneseq
        %v2240 = vshrl.u32 %v2239, 7
        %v2241 = vsub.s32 %v2238, %v2240
        %v2242 = vrot.slane %v2228, %v2241
        %v2243 = vcombine.low %v2219, %v2235
        %v2244 = vcombine.high %v2219, %v2235
        %v2246 = vunpack.c.l.s4 1934713408
        %v2247 = vunpack.c.0.s8 %v2246
        %v2248 = vlaneseq
        %v2249 = vshrl.u32 %v2248, 7
        %v2250 = vsub.s32 %v2247, %v2249
        %v2251 = vrot.slane %v2243, %v2250
        %v2253 = vunpack.c.l.s4 1934713408
        %v2254 = vunpack.c.0.s8 %v2253
        %v2255 = vlaneseq
        %v2256 = vshrl.u32 %v2255, 7
        %v2257 = vsub.s32 %v2254, %v2256
        %v2258 = vrot.slane %v2244, %v2257
        %v2259 = vcombine.low %v2226, %v2242
        %v2260 = vcombine.high %v2226, %v2242
        %v2262 = vunpack.c.l.s4 1934713408
        %v2263 = vunpack.c.0.s8 %v2262
        %v2264 = vlaneseq
        %v2265 = vshrl.u32 %v2264, 7
        %v2266 = vsub.s32 %v2263, %v2265
        %v2267 = vrot.slane %v2259, %v2266
        %v2269 = vunpack.c.l.s4 1934713408
        %v2270 = vunpack.c.0.s8 %v2269
        %v2271 = vlaneseq
        %v2272 = vshrl.u32 %v2271, 7
        %v2273 = vsub.s32 %v2270, %v2272
        %v2274 = vrot.slane %v2260, %v2273
        %v2275 = vcombine.high %v2251, 0.0
        %v2276 = vcombine.high %v2258, 0.0
        %v2277 = vcombine.high %v2267, 0.0
        %v2278 = vcombine.high %v2274, 0.0
        %v2279 = vcombine.low %v697, %v2166
        %v2280 = vcombine.high %v697, %v2166
        %v2282 = vunpack.c.l.s4 1983009808
        %v2283 = vunpack.c.0.s8 %v2282
        %v2284 = vlaneseq
        %v2285 = vshrl.u32 %v2284, 7
        %v2286 = vsub.s32 %v2283, %v2285
        %v2287 = vrot.slane %v2279, %v2286
        %v2289 = vunpack.c.l.s4 1983009808
        %v2290 = vunpack.c.0.s8 %v2289
        %v2291 = vlaneseq
        %v2292 = vshrl.u32 %v2291, 7
        %v2293 = vsub.s32 %v2290, %v2292
        %v2294 = vrot.slane %v2280, %v2293
        %v2295 = vcombine.low %v2142, %v2190
        %v2296 = vcombine.high %v2142, %v2190
        %v2298 = vunpack.c.l.s4 1983009808
        %v2299 = vunpack.c.0.s8 %v2298
        %v2300 = vlaneseq
        %v2301 = vshrl.u32 %v2300, 7
        %v2302 = vsub.s32 %v2299, %v2301
        %v2303 = vrot.slane %v2295, %v2302
        %v2305 = vunpack.c.l.s4 1983009808
        %v2306 = vunpack.c.0.s8 %v2305
        %v2307 = vlaneseq
        %v2308 = vshrl.u32 %v2307, 7
        %v2309 = vsub.s32 %v2306, %v2308
        %v2310 = vrot.slane %v2296, %v2309
        %v2311 = vcombine.low %v2287, %v2303
        %v2312 = vcombine.high %v2287, %v2303
        %v2314 = vunpack.c.l.s4 1934713408
        %v2315 = vunpack.c.0.s8 %v2314
        %v2316 = vlaneseq
        %v2317 = vshrl.u32 %v2316, 7
        %v2318 = vsub.s32 %v2315, %v2317
        %v2319 = vrot.slane %v2311, %v2318
        %v2321 = vunpack.c.l.s4 1934713408
        %v2322 = vunpack.c.0.s8 %v2321
        %v2323 = vlaneseq
        %v2324 = vshrl.u32 %v2323, 7
        %v2325 = vsub.s32 %v2322, %v2324
        %v2326 = vrot.slane %v2312, %v2325
        %v2327 = vcombine.low %v2294, %v2310
        %v2328 = vcombine.high %v2294, %v2310
        %v2330 = vunpack.c.l.s4 1934713408
        %v2331 = vunpack.c.0.s8 %v2330
        %v2332 = vlaneseq
        %v2333 = vshrl.u32 %v2332, 7
        %v2334 = vsub.s32 %v2331, %v2333
        %v2335 = vrot.slane %v2327, %v2334
        %v2337 = vunpack.c.l.s4 1934713408
        %v2338 = vunpack.c.0.s8 %v2337
        %v2339 = vlaneseq
        %v2340 = vshrl.u32 %v2339, 7
        %v2341 = vsub.s32 %v2338, %v2340
        %v2342 = vrot.slane %v2328, %v2341
        %v2343 = vcombine.high %v2319, 0.0
        %v2344 = vcombine.high %v2326, 0.0
        %v2345 = vcombine.high %v2335, 0.0
        %v2346 = vcombine.high %v2342, 0.0
        %v2347 = vcombine.low %v703, %v2168
        %v2348 = vcombine.high %v703, %v2168
        %v2350 = vunpack.c.l.s4 1983009808
        %v2351 = vunpack.c.0.s8 %v2350
        %v2352 = vlaneseq
        %v2353 = vshrl.u32 %v2352, 7
        %v2354 = vsub.s32 %v2351, %v2353
        %v2355 = vrot.slane %v2347, %v2354
        %v2357 = vunpack.c.l.s4 1983009808
        %v2358 = vunpack.c.0.s8 %v2357
        %v2359 = vlaneseq
        %v2360 = vshrl.u32 %v2359, 7
        %v2361 = vsub.s32 %v2358, %v2360
        %v2362 = vrot.slane %v2348, %v2361
        %v2363 = vcombine.low %v2144, %v2192
        %v2364 = vcombine.high %v2144, %v2192
        %v2366 = vunpack.c.l.s4 1983009808
        %v2367 = vunpack.c.0.s8 %v2366
        %v2368 = vlaneseq
        %v2369 = vshrl.u32 %v2368, 7
        %v2370 = vsub.s32 %v2367, %v2369
        %v2371 = vrot.slane %v2363, %v2370
        %v2373 = vunpack.c.l.s4 1983009808
        %v2374 = vunpack.c.0.s8 %v2373
        %v2375 = vlaneseq
        %v2376 = vshrl.u32 %v2375, 7
        %v2377 = vsub.s32 %v2374, %v2376
        %v2378 = vrot.slane %v2364, %v2377
        %v2379 = vcombine.low %v2355, %v2371
        %v2380 = vcombine.high %v2355, %v2371
        %v2382 = vunpack.c.l.s4 1934713408
        %v2383 = vunpack.c.0.s8 %v2382
        %v2384 = vlaneseq
        %v2385 = vshrl.u32 %v2384, 7
        %v2386 = vsub.s32 %v2383, %v2385
        %v2387 = vrot.slane %v2379, %v2386
        %v2389 = vunpack.c.l.s4 1934713408
        %v2390 = vunpack.c.0.s8 %v2389
        %v2391 = vlaneseq
        %v2392 = vshrl.u32 %v2391, 7
        %v2393 = vsub.s32 %v2390, %v2392
        %v2394 = vrot.slane %v2380, %v2393
        %v2395 = vcombine.low %v2362, %v2378
        %v2396 = vcombine.high %v2362, %v2378
        %v2398 = vunpack.c.l.s4 1934713408
        %v2399 = vunpack.c.0.s8 %v2398
        %v2400 = vlaneseq
        %v2401 = vshrl.u32 %v2400, 7
        %v2402 = vsub.s32 %v2399, %v2401
        %v2403 = vrot.slane %v2395, %v2402
        %v2405 = vunpack.c.l.s4 1934713408
        %v2406 = vunpack.c.0.s8 %v2405
        %v2407 = vlaneseq
        %v2408 = vshrl.u32 %v2407, 7
        %v2409 = vsub.s32 %v2406, %v2408
        %v2410 = vrot.slane %v2396, %v2409
        %v2411 = vcombine.high %v2387, 0.0
        %v2412 = vcombine.high %v2394, 0.0
        %v2413 = vcombine.high %v2403, 0.0
        %v2414 = vcombine.high %v2410, 0.0
        %v2415 = vcombine.low %v707, %v2170
        %v2416 = vcombine.high %v707, %v2170
        %v2418 = vunpack.c.l.s4 1983009808
        %v2419 = vunpack.c.0.s8 %v2418
        %v2420 = vlaneseq
        %v2421 = vshrl.u32 %v2420, 7
        %v2422 = vsub.s32 %v2419, %v2421
        %v2423 = vrot.slane %v2415, %v2422
        %v2425 = vunpack.c.l.s4 1983009808
        %v2426 = vunpack.c.0.s8 %v2425
        %v2427 = vlaneseq
        %v2428 = vshrl.u32 %v2427, 7
        %v2429 = vsub.s32 %v2426, %v2428
        %v2430 = vrot.slane %v2416, %v2429
        %v2431 = vcombine.low %v2146, %v2194
        %v2432 = vcombine.high %v2146, %v2194
        %v2434 = vunpack.c.l.s4 1983009808
        %v2435 = vunpack.c.0.s8 %v2434
        %v2436 = vlaneseq
        %v2437 = vshrl.u32 %v2436, 7
        %v2438 = vsub.s32 %v2435, %v2437
        %v2439 = vrot.slane %v2431, %v2438
        %v2441 = vunpack.c.l.s4 1983009808
        %v2442 = vunpack.c.0.s8 %v2441
        %v2443 = vlaneseq
        %v2444 = vshrl.u32 %v2443, 7
        %v2445 = vsub.s32 %v2442, %v2444
        %v2446 = vrot.slane %v2432, %v2445
        %v2447 = vcombine.low %v2423, %v2439
        %v2448 = vcombine.high %v2423, %v2439
        %v2450 = vunpack.c.l.s4 1934713408
        %v2451 = vunpack.c.0.s8 %v2450
        %v2452 = vlaneseq
        %v2453 = vshrl.u32 %v2452, 7
        %v2454 = vsub.s32 %v2451, %v2453
        %v2455 = vrot.slane %v2447, %v2454
        %v2457 = vunpack.c.l.s4 1934713408
        %v2458 = vunpack.c.0.s8 %v2457
        %v2459 = vlaneseq
        %v2460 = vshrl.u32 %v2459, 7
        %v2461 = vsub.s32 %v2458, %v2460
        %v2462 = vrot.slane %v2448, %v2461
        %v2463 = vcombine.low %v2430, %v2446
        %v2464 = vcombine.high %v2430, %v2446
        %v2466 = vunpack.c.l.s4 1934713408
        %v2467 = vunpack.c.0.s8 %v2466
        %v2468 = vlaneseq
        %v2469 = vshrl.u32 %v2468, 7
        %v2470 = vsub.s32 %v2467, %v2469
        %v2471 = vrot.slane %v2463, %v2470
        %v2473 = vunpack.c.l.s4 1934713408
        %v2474 = vunpack.c.0.s8 %v2473
        %v2475 = vlaneseq
        %v2476 = vshrl.u32 %v2475, 7
        %v2477 = vsub.s32 %v2474, %v2476
        %v2478 = vrot.slane %v2464, %v2477
        %v2479 = vcombine.high %v2455, 0.0
        %v2480 = vcombine.high %v2462, 0.0
        %v2481 = vcombine.high %v2471, 0.0
        %v2482 = vcombine.high %v2478, 0.0
        %v2483 = vcombine.low %v713, %v2172
        %v2484 = vcombine.high %v713, %v2172
        %v2486 = vunpack.c.l.s4 1983009808
        %v2487 = vunpack.c.0.s8 %v2486
        %v2488 = vlaneseq
        %v2489 = vshrl.u32 %v2488, 7
        %v2490 = vsub.s32 %v2487, %v2489
        %v2491 = vrot.slane %v2483, %v2490
        %v2493 = vunpack.c.l.s4 1983009808
        %v2494 = vunpack.c.0.s8 %v2493
        %v2495 = vlaneseq
        %v2496 = vshrl.u32 %v2495, 7
        %v2497 = vsub.s32 %v2494, %v2496
        %v2498 = vrot.slane %v2484, %v2497
        %v2499 = vcombine.low %v2148, %v2196
        %v2500 = vcombine.high %v2148, %v2196
        %v2502 = vunpack.c.l.s4 1983009808
        %v2503 = vunpack.c.0.s8 %v2502
        %v2504 = vlaneseq
        %v2505 = vshrl.u32 %v2504, 7
        %v2506 = vsub.s32 %v2503, %v2505
        %v2507 = vrot.slane %v2499, %v2506
        %v2509 = vunpack.c.l.s4 1983009808
        %v2510 = vunpack.c.0.s8 %v2509
        %v2511 = vlaneseq
        %v2512 = vshrl.u32 %v2511, 7
        %v2513 = vsub.s32 %v2510, %v2512
        %v2514 = vrot.slane %v2500, %v2513
        %v2515 = vcombine.low %v2491, %v2507
        %v2516 = vcombine.high %v2491, %v2507
        %v2518 = vunpack.c.l.s4 1934713408
        %v2519 = vunpack.c.0.s8 %v2518
        %v2520 = vlaneseq
        %v2521 = vshrl.u32 %v2520, 7
        %v2522 = vsub.s32 %v2519, %v2521
        %v2523 = vrot.slane %v2515, %v2522
        %v2525 = vunpack.c.l.s4 1934713408
        %v2526 = vunpack.c.0.s8 %v2525
        %v2527 = vlaneseq
        %v2528 = vshrl.u32 %v2527, 7
        %v2529 = vsub.s32 %v2526, %v2528
        %v2530 = vrot.slane %v2516, %v2529
        %v2531 = vcombine.low %v2498, %v2514
        %v2532 = vcombine.high %v2498, %v2514
        %v2534 = vunpack.c.l.s4 1934713408
        %v2535 = vunpack.c.0.s8 %v2534
        %v2536 = vlaneseq
        %v2537 = vshrl.u32 %v2536, 7
        %v2538 = vsub.s32 %v2535, %v2537
        %v2539 = vrot.slane %v2531, %v2538
        %v2541 = vunpack.c.l.s4 1934713408
        %v2542 = vunpack.c.0.s8 %v2541
        %v2543 = vlaneseq
        %v2544 = vshrl.u32 %v2543, 7
        %v2545 = vsub.s32 %v2542, %v2544
        %v2546 = vrot.slane %v2532, %v2545
        %v2547 = vcombine.high %v2523, 0.0
        %v2548 = vcombine.high %v2530, 0.0
        %v2549 = vcombine.high %v2539, 0.0
        %v2550 = vcombine.high %v2546, 0.0
        %v2551 = vcombine.low %v717, %v2174
        %v2552 = vcombine.high %v717, %v2174
        %v2554 = vunpack.c.l.s4 1983009808
        %v2555 = vunpack.c.0.s8 %v2554
        %v2556 = vlaneseq
        %v2557 = vshrl.u32 %v2556, 7
        %v2558 = vsub.s32 %v2555, %v2557
        %v2559 = vrot.slane %v2551, %v2558
        %v2561 = vunpack.c.l.s4 1983009808
        %v2562 = vunpack.c.0.s8 %v2561
        %v2563 = vlaneseq
        %v2564 = vshrl.u32 %v2563, 7
        %v2565 = vsub.s32 %v2562, %v2564
        %v2566 = vrot.slane %v2552, %v2565
        %v2567 = vcombine.low %v2150, %v2198
        %v2568 = vcombine.high %v2150, %v2198
        %v2570 = vunpack.c.l.s4 1983009808
        %v2571 = vunpack.c.0.s8 %v2570
        %v2572 = vlaneseq
        %v2573 = vshrl.u32 %v2572, 7
        %v2574 = vsub.s32 %v2571, %v2573
        %v2575 = vrot.slane %v2567, %v2574
        %v2577 = vunpack.c.l.s4 1983009808
        %v2578 = vunpack.c.0.s8 %v2577
        %v2579 = vlaneseq
        %v2580 = vshrl.u32 %v2579, 7
        %v2581 = vsub.s32 %v2578, %v2580
        %v2582 = vrot.slane %v2568, %v2581
        %v2583 = vcombine.low %v2559, %v2575
        %v2584 = vcombine.high %v2559, %v2575
        %v2586 = vunpack.c.l.s4 1934713408
        %v2587 = vunpack.c.0.s8 %v2586
        %v2588 = vlaneseq
        %v2589 = vshrl.u32 %v2588, 7
        %v2590 = vsub.s32 %v2587, %v2589
        %v2591 = vrot.slane %v2583, %v2590
        %v2593 = vunpack.c.l.s4 1934713408
        %v2594 = vunpack.c.0.s8 %v2593
        %v2595 = vlaneseq
        %v2596 = vshrl.u32 %v2595, 7
        %v2597 = vsub.s32 %v2594, %v2596
        %v2598 = vrot.slane %v2584, %v2597
        %v2599 = vcombine.low %v2566, %v2582
        %v2600 = vcombine.high %v2566, %v2582
        %v2602 = vunpack.c.l.s4 1934713408
        %v2603 = vunpack.c.0.s8 %v2602
        %v2604 = vlaneseq
        %v2605 = vshrl.u32 %v2604, 7
        %v2606 = vsub.s32 %v2603, %v2605
        %v2607 = vrot.slane %v2599, %v2606
        %v2609 = vunpack.c.l.s4 1934713408
        %v2610 = vunpack.c.0.s8 %v2609
        %v2611 = vlaneseq
        %v2612 = vshrl.u32 %v2611, 7
        %v2613 = vsub.s32 %v2610, %v2612
        %v2614 = vrot.slane %v2600, %v2613
        %v2615 = vcombine.high %v2591, 0.0
        %v2616 = vcombine.high %v2598, 0.0
        %v2617 = vcombine.high %v2607, 0.0
        %v2618 = vcombine.high %v2614, 0.0
        %v2619 = vcombine.low %v723, %v2176
        %v2620 = vcombine.high %v723, %v2176
        %v2622 = vunpack.c.l.s4 1983009808
        %v2623 = vunpack.c.0.s8 %v2622
        %v2624 = vlaneseq
        %v2625 = vshrl.u32 %v2624, 7
        %v2626 = vsub.s32 %v2623, %v2625
        %v2627 = vrot.slane %v2619, %v2626
        %v2629 = vunpack.c.l.s4 1983009808
        %v2630 = vunpack.c.0.s8 %v2629
        %v2631 = vlaneseq
        %v2632 = vshrl.u32 %v2631, 7
        %v2633 = vsub.s32 %v2630, %v2632
        %v2634 = vrot.slane %v2620, %v2633
        %v2635 = vcombine.low %v2152, %v2200
        %v2636 = vcombine.high %v2152, %v2200
        %v2638 = vunpack.c.l.s4 1983009808
        %v2639 = vunpack.c.0.s8 %v2638
        %v2640 = vlaneseq
        %v2641 = vshrl.u32 %v2640, 7
        %v2642 = vsub.s32 %v2639, %v2641
        %v2643 = vrot.slane %v2635, %v2642
        %v2645 = vunpack.c.l.s4 1983009808
        %v2646 = vunpack.c.0.s8 %v2645
        %v2647 = vlaneseq
        %v2648 = vshrl.u32 %v2647, 7
        %v2649 = vsub.s32 %v2646, %v2648
        %v2650 = vrot.slane %v2636, %v2649
        %v2651 = vcombine.low %v2627, %v2643
        %v2652 = vcombine.high %v2627, %v2643
        %v2654 = vunpack.c.l.s4 1934713408
        %v2655 = vunpack.c.0.s8 %v2654
        %v2656 = vlaneseq
        %v2657 = vshrl.u32 %v2656, 7
        %v2658 = vsub.s32 %v2655, %v2657
        %v2659 = vrot.slane %v2651, %v2658
        %v2661 = vunpack.c.l.s4 1934713408
        %v2662 = vunpack.c.0.s8 %v2661
        %v2663 = vlaneseq
        %v2664 = vshrl.u32 %v2663, 7
        %v2665 = vsub.s32 %v2662, %v2664
        %v2666 = vrot.slane %v2652, %v2665
        %v2667 = vcombine.low %v2634, %v2650
        %v2668 = vcombine.high %v2634, %v2650
        %v2670 = vunpack.c.l.s4 1934713408
        %v2671 = vunpack.c.0.s8 %v2670
        %v2672 = vlaneseq
        %v2673 = vshrl.u32 %v2672, 7
        %v2674 = vsub.s32 %v2671, %v2673
        %v2675 = vrot.slane %v2667, %v2674
        %v2677 = vunpack.c.l.s4 1934713408
        %v2678 = vunpack.c.0.s8 %v2677
        %v2679 = vlaneseq
        %v2680 = vshrl.u32 %v2679, 7
        %v2681 = vsub.s32 %v2678, %v2680
        %v2682 = vrot.slane %v2668, %v2681
        %v2683 = vcombine.high %v2659, 0.0
        %v2684 = vcombine.high %v2666, 0.0
        %v2685 = vcombine.high %v2675, 0.0
        %v2686 = vcombine.high %v2682, 0.0
        %v2687 = vcombine.low %v727, %v2178
        %v2688 = vcombine.high %v727, %v2178
        %v2690 = vunpack.c.l.s4 1983009808
        %v2691 = vunpack.c.0.s8 %v2690
        %v2692 = vlaneseq
        %v2693 = vshrl.u32 %v2692, 7
        %v2694 = vsub.s32 %v2691, %v2693
        %v2695 = vrot.slane %v2687, %v2694
        %v2697 = vunpack.c.l.s4 1983009808
        %v2698 = vunpack.c.0.s8 %v2697
        %v2699 = vlaneseq
        %v2700 = vshrl.u32 %v2699, 7
        %v2701 = vsub.s32 %v2698, %v2700
        %v2702 = vrot.slane %v2688, %v2701
        %v2703 = vcombine.low %v2154, %v2202
        %v2704 = vcombine.high %v2154, %v2202
        %v2706 = vunpack.c.l.s4 1983009808
        %v2707 = vunpack.c.0.s8 %v2706
        %v2708 = vlaneseq
        %v2709 = vshrl.u32 %v2708, 7
        %v2710 = vsub.s32 %v2707, %v2709
        %v2711 = vrot.slane %v2703, %v2710
        %v2713 = vunpack.c.l.s4 1983009808
        %v2714 = vunpack.c.0.s8 %v2713
        %v2715 = vlaneseq
        %v2716 = vshrl.u32 %v2715, 7
        %v2717 = vsub.s32 %v2714, %v2716
        %v2718 = vrot.slane %v2704, %v2717
        %v2719 = vcombine.low %v2695, %v2711
        %v2720 = vcombine.high %v2695, %v2711
        %v2722 = vunpack.c.l.s4 1934713408
        %v2723 = vunpack.c.0.s8 %v2722
        %v2724 = vlaneseq
        %v2725 = vshrl.u32 %v2724, 7
        %v2726 = vsub.s32 %v2723, %v2725
        %v2727 = vrot.slane %v2719, %v2726
        %v2729 = vunpack.c.l.s4 1934713408
        %v2730 = vunpack.c.0.s8 %v2729
        %v2731 = vlaneseq
        %v2732 = vshrl.u32 %v2731, 7
        %v2733 = vsub.s32 %v2730, %v2732
        %v2734 = vrot.slane %v2720, %v2733
        %v2735 = vcombine.low %v2702, %v2718
        %v2736 = vcombine.high %v2702, %v2718
        %v2738 = vunpack.c.l.s4 1934713408
        %v2739 = vunpack.c.0.s8 %v2738
        %v2740 = vlaneseq
        %v2741 = vshrl.u32 %v2740, 7
        %v2742 = vsub.s32 %v2739, %v2741
        %v2743 = vrot.slane %v2735, %v2742
        %v2745 = vunpack.c.l.s4 1934713408
        %v2746 = vunpack.c.0.s8 %v2745
        %v2747 = vlaneseq
        %v2748 = vshrl.u32 %v2747, 7
        %v2749 = vsub.s32 %v2746, %v2748
        %v2750 = vrot.slane %v2736, %v2749
        %v2751 = vcombine.high %v2727, 0.0
        %v2752 = vcombine.high %v2734, 0.0
        %v2753 = vcombine.high %v2743, 0.0
        %v2754 = vcombine.high %v2750, 0.0
        %v2755 = vcombine.low %v2251, %v2258
        %v2757 = vunpack.c.l.s4 1983009808
        %v2758 = vunpack.c.0.s8 %v2757
        %v2759 = vlaneseq
        %v2760 = vshrl.u32 %v2759, 7
        %v2761 = vsub.s32 %v2758, %v2760
        %v2762 = vrot.slane %v2755, %v2761
        %v2763 = vcombine.low %v2275, %v2276
        %v2765 = vunpack.c.l.s4 1983009808
        %v2766 = vunpack.c.0.s8 %v2765
        %v2767 = vlaneseq
        %v2768 = vshrl.u32 %v2767, 7
        %v2769 = vsub.s32 %v2766, %v2768
        %v2770 = vrot.slane %v2763, %v2769
        %v2771 = vcombine.low %v2267, %v2274
        %v2773 = vunpack.c.l.s4 1983009808
        %v2774 = vunpack.c.0.s8 %v2773
        %v2775 = vlaneseq
        %v2776 = vshrl.u32 %v2775, 7
        %v2777 = vsub.s32 %v2774, %v2776
        %v2778 = vrot.slane %v2771, %v2777
        %v2779 = vcombine.low %v2277, %v2278
        %v2781 = vunpack.c.l.s4 1983009808
        %v2782 = vunpack.c.0.s8 %v2781
        %v2783 = vlaneseq
        %v2784 = vshrl.u32 %v2783, 7
        %v2785 = vsub.s32 %v2782, %v2784
        %v2786 = vrot.slane %v2779, %v2785
        %v2787 = vcombine.low %v2762, %v2770
        %v2788 = vcombine.high %v2762, %v2770
        %v2790 = vunpack.c.l.s4 1934713408
        %v2791 = vunpack.c.0.s8 %v2790
        %v2792 = vlaneseq
        %v2793 = vshrl.u32 %v2792, 7
        %v2794 = vsub.s32 %v2791, %v2793
        %v2795 = vrot.slane %v2787, %v2794
        %v2797 = vunpack.c.l.s4 1934713408
        %v2798 = vunpack.c.0.s8 %v2797
        %v2799 = vlaneseq
        %v2800 = vshrl.u32 %v2799, 7
        %v2801 = vsub.s32 %v2798, %v2800
        %v2802 = vrot.slane %v2788, %v2801
        %v2803 = vcombine.low %v2778, %v2786
        %v2804 = vcombine.high %v2778, %v2786
        %v2806 = vunpack.c.l.s4 1934713408
        %v2807 = vunpack.c.0.s8 %v2806
        %v2808 = vlaneseq
        %v2809 = vshrl.u32 %v2808, 7
        %v2810 = vsub.s32 %v2807, %v2809
        %v2811 = vrot.slane %v2803, %v2810
        %v2813 = vunpack.c.l.s4 1934713408
        %v2814 = vunpack.c.0.s8 %v2813
        %v2815 = vlaneseq
        %v2816 = vshrl.u32 %v2815, 7
        %v2817 = vsub.s32 %v2814, %v2816
        %v2818 = vrot.slane %v2804, %v2817
        %v2819 = vcombine.low %v2795, %v2811
        %v2820 = vcombine.high %v2795, %v2811
        %v2821 = vcombine.low %v2802, %v2818
        %v2822 = vcombine.high %v2802, %v2818
        %v2823 = vcombine.low %v2319, %v2326
        %v2825 = vunpack.c.l.s4 1983009808
        %v2826 = vunpack.c.0.s8 %v2825
        %v2827 = vlaneseq
        %v2828 = vshrl.u32 %v2827, 7
        %v2829 = vsub.s32 %v2826, %v2828
        %v2830 = vrot.slane %v2823, %v2829
        %v2831 = vcombine.low %v2343, %v2344
        %v2833 = vunpack.c.l.s4 1983009808
        %v2834 = vunpack.c.0.s8 %v2833
        %v2835 = vlaneseq
        %v2836 = vshrl.u32 %v2835, 7
        %v2837 = vsub.s32 %v2834, %v2836
        %v2838 = vrot.slane %v2831, %v2837
        %v2839 = vcombine.low %v2335, %v2342
        %v2841 = vunpack.c.l.s4 1983009808
        %v2842 = vunpack.c.0.s8 %v2841
        %v2843 = vlaneseq
        %v2844 = vshrl.u32 %v2843, 7
        %v2845 = vsub.s32 %v2842, %v2844
        %v2846 = vrot.slane %v2839, %v2845
        %v2847 = vcombine.low %v2345, %v2346
        %v2849 = vunpack.c.l.s4 1983009808
        %v2850 = vunpack.c.0.s8 %v2849
        %v2851 = vlaneseq
        %v2852 = vshrl.u32 %v2851, 7
        %v2853 = vsub.s32 %v2850, %v2852
        %v2854 = vrot.slane %v2847, %v2853
        %v2855 = vcombine.low %v2830, %v2838
        %v2856 = vcombine.high %v2830, %v2838
        %v2858 = vunpack.c.l.s4 1934713408
        %v2859 = vunpack.c.0.s8 %v2858
        %v2860 = vlaneseq
        %v2861 = vshrl.u32 %v2860, 7
        %v2862 = vsub.s32 %v2859, %v2861
        %v2863 = vrot.slane %v2855, %v2862
        %v2865 = vunpack.c.l.s4 1934713408
        %v2866 = vunpack.c.0.s8 %v2865
        %v2867 = vlaneseq
        %v2868 = vshrl.u32 %v2867, 7
        %v2869 = vsub.s32 %v2866, %v2868
        %v2870 = vrot.slane %v2856, %v2869
        %v2871 = vcombine.low %v2846, %v2854
        %v2872 = vcombine.high %v2846, %v2854
        %v2874 = vunpack.c.l.s4 1934713408
        %v2875 = vunpack.c.0.s8 %v2874
        %v2876 = vlaneseq
        %v2877 = vshrl.u32 %v2876, 7
        %v2878 = vsub.s32 %v2875, %v2877
        %v2879 = vrot.slane %v2871, %v2878
        %v2881 = vunpack.c.l.s4 1934713408
        %v2882 = vunpack.c.0.s8 %v2881
        %v2883 = vlaneseq
        %v2884 = vshrl.u32 %v2883, 7
        %v2885 = vsub.s32 %v2882, %v2884
        %v2886 = vrot.slane %v2872, %v2885
        %v2887 = vcombine.low %v2863, %v2879
        %v2888 = vcombine.high %v2863, %v2879
        %v2889 = vcombine.low %v2870, %v2886
        %v2890 = vcombine.high %v2870, %v2886
        %v2891 = vcombine.low %v2387, %v2394
        %v2893 = vunpack.c.l.s4 1983009808
        %v2894 = vunpack.c.0.s8 %v2893
        %v2895 = vlaneseq
        %v2896 = vshrl.u32 %v2895, 7
        %v2897 = vsub.s32 %v2894, %v2896
        %v2898 = vrot.slane %v2891, %v2897
        %v2899 = vcombine.low %v2411, %v2412
        %v2901 = vunpack.c.l.s4 1983009808
        %v2902 = vunpack.c.0.s8 %v2901
        %v2903 = vlaneseq
        %v2904 = vshrl.u32 %v2903, 7
        %v2905 = vsub.s32 %v2902, %v2904
        %v2906 = vrot.slane %v2899, %v2905
        %v2907 = vcombine.low %v2403, %v2410
        %v2909 = vunpack.c.l.s4 1983009808
        %v2910 = vunpack.c.0.s8 %v2909
        %v2911 = vlaneseq
        %v2912 = vshrl.u32 %v2911, 7
        %v2913 = vsub.s32 %v2910, %v2912
        %v2914 = vrot.slane %v2907, %v2913
        %v2915 = vcombine.low %v2413, %v2414
        %v2917 = vunpack.c.l.s4 1983009808
        %v2918 = vunpack.c.0.s8 %v2917
        %v2919 = vlaneseq
        %v2920 = vshrl.u32 %v2919, 7
        %v2921 = vsub.s32 %v2918, %v2920
        %v2922 = vrot.slane %v2915, %v2921
        %v2923 = vcombine.low %v2898, %v2906
        %v2924 = vcombine.high %v2898, %v2906
        %v2926 = vunpack.c.l.s4 1934713408
        %v2927 = vunpack.c.0.s8 %v2926
        %v2928 = vlaneseq
        %v2929 = vshrl.u32 %v2928, 7
        %v2930 = vsub.s32 %v2927, %v2929
        %v2931 = vrot.slane %v2923, %v2930
        %v2933 = vunpack.c.l.s4 1934713408
        %v2934 = vunpack.c.0.s8 %v2933
        %v2935 = vlaneseq
        %v2936 = vshrl.u32 %v2935, 7
        %v2937 = vsub.s32 %v2934, %v2936
        %v2938 = vrot.slane %v2924, %v2937
        %v2939 = vcombine.low %v2914, %v2922
        %v2940 = vcombine.high %v2914, %v2922
        %v2942 = vunpack.c.l.s4 1934713408
        %v2943 = vunpack.c.0.s8 %v2942
        %v2944 = vlaneseq
        %v2945 = vshrl.u32 %v2944, 7
        %v2946 = vsub.s32 %v2943, %v2945
        %v2947 = vrot.slane %v2939, %v2946
        %v2949 = vunpack.c.l.s4 1934713408
        %v2950 = vunpack.c.0.s8 %v2949
        %v2951 = vlaneseq
        %v2952 = vshrl.u32 %v2951, 7
        %v2953 = vsub.s32 %v2950, %v2952
        %v2954 = vrot.slane %v2940, %v2953
        %v2955 = vcombine.low %v2931, %v2947
        %v2956 = vcombine.high %v2931, %v2947
        %v2957 = vcombine.low %v2938, %v2954
        %v2958 = vcombine.high %v2938, %v2954
        %v2959 = vcombine.low %v2455, %v2462
        %v2961 = vunpack.c.l.s4 1983009808
        %v2962 = vunpack.c.0.s8 %v2961
        %v2963 = vlaneseq
        %v2964 = vshrl.u32 %v2963, 7
        %v2965 = vsub.s32 %v2962, %v2964
        %v2966 = vrot.slane %v2959, %v2965
        %v2967 = vcombine.low %v2479, %v2480
        %v2969 = vunpack.c.l.s4 1983009808
        %v2970 = vunpack.c.0.s8 %v2969
        %v2971 = vlaneseq
        %v2972 = vshrl.u32 %v2971, 7
        %v2973 = vsub.s32 %v2970, %v2972
        %v2974 = vrot.slane %v2967, %v2973
        %v2975 = vcombine.low %v2471, %v2478
        %v2977 = vunpack.c.l.s4 1983009808
        %v2978 = vunpack.c.0.s8 %v2977
        %v2979 = vlaneseq
        %v2980 = vshrl.u32 %v2979, 7
        %v2981 = vsub.s32 %v2978, %v2980
        %v2982 = vrot.slane %v2975, %v2981
        %v2983 = vcombine.low %v2481, %v2482
        %v2985 = vunpack.c.l.s4 1983009808
        %v2986 = vunpack.c.0.s8 %v2985
        %v2987 = vlaneseq
        %v2988 = vshrl.u32 %v2987, 7
        %v2989 = vsub.s32 %v2986, %v2988
        %v2990 = vrot.slane %v2983, %v2989
        %v2991 = vcombine.low %v2966, %v2974
        %v2992 = vcombine.high %v2966, %v2974
        %v2994 = vunpack.c.l.s4 1934713408
        %v2995 = vunpack.c.0.s8 %v2994
        %v2996 = vlaneseq
        %v2997 = vshrl.u32 %v2996, 7
        %v2998 = vsub.s32 %v2995, %v2997
        %v2999 = vrot.slane %v2991, %v2998
        %v3001 = vunpack.c.l.s4 1934713408
        %v3002 = vunpack.c.0.s8 %v3001
        %v3003 = vlaneseq
        %v3004 = vshrl.u32 %v3003, 7
        %v3005 = vsub.s32 %v3002, %v3004
        %v3006 = vrot.slane %v2992, %v3005
        %v3007 = vcombine.low %v2982, %v2990
        %v3008 = vcombine.high %v2982, %v2990
        %v3010 = vunpack.c.l.s4 1934713408
        %v3011 = vunpack.c.0.s8 %v3010
        %v3012 = vlaneseq
        %v3013 = vshrl.u32 %v3012, 7
        %v3014 = vsub.s32 %v3011, %v3013
        %v3015 = vrot.slane %v3007, %v3014
        %v3017 = vunpack.c.l.s4 1934713408
        %v3018 = vunpack.c.0.s8 %v3017
        %v3019 = vlaneseq
        %v3020 = vshrl.u32 %v3019, 7
        %v3021 = vsub.s32 %v3018, %v3020
        %v3022 = vrot.slane %v3008, %v3021
        %v3023 = vcombine.low %v2999, %v3015
        %v3024 = vcombine.high %v2999, %v3015
        %v3025 = vcombine.low %v3006, %v3022
        %v3026 = vcombine.high %v3006, %v3022
        %v3027 = vcombine.low %v2523, %v2530
        %v3029 = vunpack.c.l.s4 1983009808
        %v3030 = vunpack.c.0.s8 %v3029
        %v3031 = vlaneseq
        %v3032 = vshrl.u32 %v3031, 7
        %v3033 = vsub.s32 %v3030, %v3032
        %v3034 = vrot.slane %v3027, %v3033
        %v3035 = vcombine.low %v2547, %v2548
        %v3037 = vunpack.c.l.s4 1983009808
        %v3038 = vunpack.c.0.s8 %v3037
        %v3039 = vlaneseq
        %v3040 = vshrl.u32 %v3039, 7
        %v3041 = vsub.s32 %v3038, %v3040
        %v3042 = vrot.slane %v3035, %v3041
        %v3043 = vcombine.low %v2539, %v2546
        %v3045 = vunpack.c.l.s4 1983009808
        %v3046 = vunpack.c.0.s8 %v3045
        %v3047 = vlaneseq
        %v3048 = vshrl.u32 %v3047, 7
        %v3049 = vsub.s32 %v3046, %v3048
        %v3050 = vrot.slane %v3043, %v3049
        %v3051 = vcombine.low %v2549, %v2550
        %v3053 = vunpack.c.l.s4 1983009808
        %v3054 = vunpack.c.0.s8 %v3053
        %v3055 = vlaneseq
        %v3056 = vshrl.u32 %v3055, 7
        %v3057 = vsub.s32 %v3054, %v3056
        %v3058 = vrot.slane %v3051, %v3057
        %v3059 = vcombine.low %v3034, %v3042
        %v3060 = vcombine.high %v3034, %v3042
        %v3062 = vunpack.c.l.s4 1934713408
        %v3063 = vunpack.c.0.s8 %v3062
        %v3064 = vlaneseq
        %v3065 = vshrl.u32 %v3064, 7
        %v3066 = vsub.s32 %v3063, %v3065
        %v3067 = vrot.slane %v3059, %v3066
        %v3069 = vunpack.c.l.s4 1934713408
        %v3070 = vunpack.c.0.s8 %v3069
        %v3071 = vlaneseq
        %v3072 = vshrl.u32 %v3071, 7
        %v3073 = vsub.s32 %v3070, %v3072
        %v3074 = vrot.slane %v3060, %v3073
        %v3075 = vcombine.low %v3050, %v3058
        %v3076 = vcombine.high %v3050, %v3058
        %v3078 = vunpack.c.l.s4 1934713408
        %v3079 = vunpack.c.0.s8 %v3078
        %v3080 = vlaneseq
        %v3081 = vshrl.u32 %v3080, 7
        %v3082 = vsub.s32 %v3079, %v3081
        %v3083 = vrot.slane %v3075, %v3082
        %v3085 = vunpack.c.l.s4 1934713408
        %v3086 = vunpack.c.0.s8 %v3085
        %v3087 = vlaneseq
        %v3088 = vshrl.u32 %v3087, 7
        %v3089 = vsub.s32 %v3086, %v3088
        %v3090 = vrot.slane %v3076, %v3089
        %v3091 = vcombine.low %v3067, %v3083
        %v3092 = vcombine.high %v3067, %v3083
        %v3093 = vcombine.low %v3074, %v3090
        %v3094 = vcombine.high %v3074, %v3090
        %v3095 = vcombine.low %v2591, %v2598
        %v3097 = vunpack.c.l.s4 1983009808
        %v3098 = vunpack.c.0.s8 %v3097
        %v3099 = vlaneseq
        %v3100 = vshrl.u32 %v3099, 7
        %v3101 = vsub.s32 %v3098, %v3100
        %v3102 = vrot.slane %v3095, %v3101
        %v3103 = vcombine.low %v2615, %v2616
        %v3105 = vunpack.c.l.s4 1983009808
        %v3106 = vunpack.c.0.s8 %v3105
        %v3107 = vlaneseq
        %v3108 = vshrl.u32 %v3107, 7
        %v3109 = vsub.s32 %v3106, %v3108
        %v3110 = vrot.slane %v3103, %v3109
        %v3111 = vcombine.low %v2607, %v2614
        %v3113 = vunpack.c.l.s4 1983009808
        %v3114 = vunpack.c.0.s8 %v3113
        %v3115 = vlaneseq
        %v3116 = vshrl.u32 %v3115, 7
        %v3117 = vsub.s32 %v3114, %v3116
        %v3118 = vrot.slane %v3111, %v3117
        %v3119 = vcombine.low %v2617, %v2618
        %v3121 = vunpack.c.l.s4 1983009808
        %v3122 = vunpack.c.0.s8 %v3121
        %v3123 = vlaneseq
        %v3124 = vshrl.u32 %v3123, 7
        %v3125 = vsub.s32 %v3122, %v3124
        %v3126 = vrot.slane %v3119, %v3125
        %v3127 = vcombine.low %v3102, %v3110
        %v3128 = vcombine.high %v3102, %v3110
        %v3130 = vunpack.c.l.s4 1934713408
        %v3131 = vunpack.c.0.s8 %v3130
        %v3132 = vlaneseq
        %v3133 = vshrl.u32 %v3132, 7
        %v3134 = vsub.s32 %v3131, %v3133
        %v3135 = vrot.slane %v3127, %v3134
        %v3137 = vunpack.c.l.s4 1934713408
        %v3138 = vunpack.c.0.s8 %v3137
        %v3139 = vlaneseq
        %v3140 = vshrl.u32 %v3139, 7
        %v3141 = vsub.s32 %v3138, %v3140
        %v3142 = vrot.slane %v3128, %v3141
        %v3143 = vcombine.low %v3118, %v3126
        %v3144 = vcombine.high %v3118, %v3126
        %v3146 = vunpack.c.l.s4 1934713408
        %v3147 = vunpack.c.0.s8 %v3146
        %v3148 = vlaneseq
        %v3149 = vshrl.u32 %v3148, 7
        %v3150 = vsub.s32 %v3147, %v3149
        %v3151 = vrot.slane %v3143, %v3150
        %v3153 = vunpack.c.l.s4 1934713408
        %v3154 = vunpack.c.0.s8 %v3153
        %v3155 = vlaneseq
        %v3156 = vshrl.u32 %v3155, 7
        %v3157 = vsub.s32 %v3154, %v3156
        %v3158 = vrot.slane %v3144, %v3157
        %v3159 = vcombine.low %v3135, %v3151
        %v3160 = vcombine.high %v3135, %v3151
        %v3161 = vcombine.low %v3142, %v3158
        %v3162 = vcombine.high %v3142, %v3158
        %v3163 = vcombine.low %v2659, %v2666
        %v3165 = vunpack.c.l.s4 1983009808
        %v3166 = vunpack.c.0.s8 %v3165
        %v3167 = vlaneseq
        %v3168 = vshrl.u32 %v3167, 7
        %v3169 = vsub.s32 %v3166, %v3168
        %v3170 = vrot.slane %v3163, %v3169
        %v3171 = vcombine.low %v2683, %v2684
        %v3173 = vunpack.c.l.s4 1983009808
        %v3174 = vunpack.c.0.s8 %v3173
        %v3175 = vlaneseq
        %v3176 = vshrl.u32 %v3175, 7
        %v3177 = vsub.s32 %v3174, %v3176
        %v3178 = vrot.slane %v3171, %v3177
        %v3179 = vcombine.low %v2675, %v2682
        %v3181 = vunpack.c.l.s4 1983009808
        %v3182 = vunpack.c.0.s8 %v3181
        %v3183 = vlaneseq
        %v3184 = vshrl.u32 %v3183, 7
        %v3185 = vsub.s32 %v3182, %v3184
        %v3186 = vrot.slane %v3179, %v3185
        %v3187 = vcombine.low %v2685, %v2686
        %v3189 = vunpack.c.l.s4 1983009808
        %v3190 = vunpack.c.0.s8 %v3189
        %v3191 = vlaneseq
        %v3192 = vshrl.u32 %v3191, 7
        %v3193 = vsub.s32 %v3190, %v3192
        %v3194 = vrot.slane %v3187, %v3193
        %v3195 = vcombine.low %v3170, %v3178
        %v3196 = vcombine.high %v3170, %v3178
        %v3198 = vunpack.c.l.s4 1934713408
        %v3199 = vunpack.c.0.s8 %v3198
        %v3200 = vlaneseq
        %v3201 = vshrl.u32 %v3200, 7
        %v3202 = vsub.s32 %v3199, %v3201
        %v3203 = vrot.slane %v3195, %v3202
        %v3205 = vunpack.c.l.s4 1934713408
        %v3206 = vunpack.c.0.s8 %v3205
        %v3207 = vlaneseq
        %v3208 = vshrl.u32 %v3207, 7
        %v3209 = vsub.s32 %v3206, %v3208
        %v3210 = vrot.slane %v3196, %v3209
        %v3211 = vcombine.low %v3186, %v3194
        %v3212 = vcombine.high %v3186, %v3194
        %v3214 = vunpack.c.l.s4 1934713408
        %v3215 = vunpack.c.0.s8 %v3214
        %v3216 = vlaneseq
        %v3217 = vshrl.u32 %v3216, 7
        %v3218 = vsub.s32 %v3215, %v3217
        %v3219 = vrot.slane %v3211, %v3218
        %v3221 = vunpack.c.l.s4 1934713408
        %v3222 = vunpack.c.0.s8 %v3221
        %v3223 = vlaneseq
        %v3224 = vshrl.u32 %v3223, 7
        %v3225 = vsub.s32 %v3222, %v3224
        %v3226 = vrot.slane %v3212, %v3225
        %v3227 = vcombine.low %v3203, %v3219
        %v3228 = vcombine.high %v3203, %v3219
        %v3229 = vcombine.low %v3210, %v3226
        %v3230 = vcombine.high %v3210, %v3226
        %v3231 = vcombine.low %v2727, %v2734
        %v3233 = vunpack.c.l.s4 1983009808
        %v3234 = vunpack.c.0.s8 %v3233
        %v3235 = vlaneseq
        %v3236 = vshrl.u32 %v3235, 7
        %v3237 = vsub.s32 %v3234, %v3236
        %v3238 = vrot.slane %v3231, %v3237
        %v3239 = vcombine.low %v2751, %v2752
        %v3241 = vunpack.c.l.s4 1983009808
        %v3242 = vunpack.c.0.s8 %v3241
        %v3243 = vlaneseq
        %v3244 = vshrl.u32 %v3243, 7
        %v3245 = vsub.s32 %v3242, %v3244
        %v3246 = vrot.slane %v3239, %v3245
        %v3247 = vcombine.low %v2743, %v2750
        %v3249 = vunpack.c.l.s4 1983009808
        %v3250 = vunpack.c.0.s8 %v3249
        %v3251 = vlaneseq
        %v3252 = vshrl.u32 %v3251, 7
        %v3253 = vsub.s32 %v3250, %v3252
        %v3254 = vrot.slane %v3247, %v3253
        %v3255 = vcombine.low %v2753, %v2754
        %v3257 = vunpack.c.l.s4 1983009808
        %v3258 = vunpack.c.0.s8 %v3257
        %v3259 = vlaneseq
        %v3260 = vshrl.u32 %v3259, 7
        %v3261 = vsub.s32 %v3258, %v3260
        %v3262 = vrot.slane %v3255, %v3261
        %v3263 = vcombine.low %v3238, %v3246
        %v3264 = vcombine.high %v3238, %v3246
        %v3266 = vunpack.c.l.s4 1934713408
        %v3267 = vunpack.c.0.s8 %v3266
        %v3268 = vlaneseq
        %v3269 = vshrl.u32 %v3268, 7
        %v3270 = vsub.s32 %v3267, %v3269
        %v3271 = vrot.slane %v3263, %v3270
        %v3273 = vunpack.c.l.s4 1934713408
        %v3274 = vunpack.c.0.s8 %v3273
        %v3275 = vlaneseq
        %v3276 = vshrl.u32 %v3275, 7
        %v3277 = vsub.s32 %v3274, %v3276
        %v3278 = vrot.slane %v3264, %v3277
        %v3279 = vcombine.low %v3254, %v3262
        %v3280 = vcombine.high %v3254, %v3262
        %v3282 = vunpack.c.l.s4 1934713408
        %v3283 = vunpack.c.0.s8 %v3282
        %v3284 = vlaneseq
        %v3285 = vshrl.u32 %v3284, 7
        %v3286 = vsub.s32 %v3283, %v3285
        %v3287 = vrot.slane %v3279, %v3286
        %v3289 = vunpack.c.l.s4 1934713408
        %v3290 = vunpack.c.0.s8 %v3289
        %v3291 = vlaneseq
        %v3292 = vshrl.u32 %v3291, 7
        %v3293 = vsub.s32 %v3290, %v3292
        %v3294 = vrot.slane %v3280, %v3293
        %v3295 = vcombine.low %v3271, %v3287
        %v3296 = vcombine.high %v3271, %v3287
        %v3297 = vcombine.low %v3278, %v3294
        %v3298 = vcombine.high %v3278, %v3294
        %v3299 = vpack.c.bf16 %v2887, %v2819
        %v3300 = vpack.c.bf16 %v3023, %v2955
        %v3301 = vpack.c.bf16 %v3159, %v3091
        %v3302 = vpack.c.bf16 %v3295, %v3227
        %v3303 = vpack.c.bf16 %v2888, %v2820
        %v3304 = vpack.c.bf16 %v3024, %v2956
        %v3305 = vpack.c.bf16 %v3160, %v3092
        %v3306 = vpack.c.bf16 %v3296, %v3228
        %v3307 = vpack.c.bf16 %v2889, %v2821
        %v3308 = vpack.c.bf16 %v3025, %v2957
        %v3309 = vpack.c.bf16 %v3161, %v3093
        %v3310 = vpack.c.bf16 %v3297, %v3229
        %v3311 = vpack.c.bf16 %v2890, %v2822
        %v3312 = vpack.c.bf16 %v3026, %v2958
        %v3313 = vpack.c.bf16 %v3162, %v3094
        %v3314 = vpack.c.bf16 %v3298, %v3230
        %v3331 = vunpack.c.l.b16 %v3299
        %v3332 = vunpack.c.h.b16 %v3299
        %v3333 = vunpack.c.l.b16 %v3300
        %v3334 = vunpack.c.h.b16 %v3300
        %v3335 = vunpack.c.l.b16 %v3301
        %v3336 = vunpack.c.h.b16 %v3301
        %v3337 = vunpack.c.l.b16 %v3302
        %v3338 = vunpack.c.h.b16 %v3302
        %v3339 = vunpack.c.l.b16 %v3303
        %v3340 = vunpack.c.h.b16 %v3303
        %v3341 = vunpack.c.l.b16 %v3304
        %v3342 = vunpack.c.h.b16 %v3304
        %v3343 = vunpack.c.l.b16 %v3305
        %v3344 = vunpack.c.h.b16 %v3305
        %v3345 = vunpack.c.l.b16 %v3306
        %v3346 = vunpack.c.h.b16 %v3306
        %v3347 = vunpack.c.l.b16 %v3307
        %v3348 = vunpack.c.h.b16 %v3307
        %v3349 = vunpack.c.l.b16 %v3308
        %v3350 = vunpack.c.h.b16 %v3308
        %v3351 = vunpack.c.l.b16 %v3309
        %v3352 = vunpack.c.h.b16 %v3309
        %v3353 = vunpack.c.l.b16 %v3310
        %v3354 = vunpack.c.h.b16 %v3310
        %v3355 = vunpack.c.l.b16 %v3311
        %v3356 = vunpack.c.h.b16 %v3311
        %v3357 = vunpack.c.l.b16 %v3312
        %v3358 = vunpack.c.h.b16 %v3312
        %v3359 = vunpack.c.l.b16 %v3313
        %v3360 = vunpack.c.h.b16 %v3313
        %v3361 = vunpack.c.l.b16 %v3314
        %v3362 = vunpack.c.h.b16 %v3314
        %v3363 = vpack.c.b16 %v3331, %v3331
        %v3364 = vpack.c.b16 %v3332, %v3332
        %v3365 = vpack.c.b16 %v3333, %v3333
        %v3366 = vpack.c.b16 %v3334, %v3334
        %v3367 = vpack.c.b16 %v3335, %v3335
        %v3368 = vpack.c.b16 %v3336, %v3336
        %v3369 = vpack.c.b16 %v3337, %v3337
        %v3370 = vpack.c.b16 %v3338, %v3338
        %v3371 = vpack.c.b16 %v3339, %v3339
        %v3372 = vpack.c.b16 %v3340, %v3340
        %v3373 = vpack.c.b16 %v3341, %v3341
        %v3374 = vpack.c.b16 %v3342, %v3342
        %v3375 = vpack.c.b16 %v3343, %v3343
        %v3376 = vpack.c.b16 %v3344, %v3344
        %v3377 = vpack.c.b16 %v3345, %v3345
        %v3378 = vpack.c.b16 %v3346, %v3346
        %v3379 = vpack.c.b16 %v3347, %v3347
        %v3380 = vpack.c.b16 %v3348, %v3348
        %v3381 = vpack.c.b16 %v3349, %v3349
        %v3382 = vpack.c.b16 %v3350, %v3350
        %v3383 = vpack.c.b16 %v3351, %v3351
        %v3384 = vpack.c.b16 %v3352, %v3352
        %v3385 = vpack.c.b16 %v3353, %v3353
        %v3386 = vpack.c.b16 %v3354, %v3354
        %v3387 = vpack.c.b16 %v3355, %v3355
        %v3388 = vpack.c.b16 %v3356, %v3356
        %v3389 = vpack.c.b16 %v3357, %v3357
        %v3390 = vpack.c.b16 %v3358, %v3358
        %v3391 = vpack.c.b16 %v3359, %v3359
        %v3392 = vpack.c.b16 %v3360, %v3360
        %v3393 = vpack.c.b16 %v3361, %v3361
        %v3394 = vpack.c.b16 %v3362, %v3362
        %3427 = vst.msk [vmem:[%s336] sm:$0xf] %vm2098, %v3363
        %3428 = vst.msk [vmem:[%s336 + $0x4] sm:$0xf] %vm2098, %v3364
        %3429 = vst.msk [vmem:[%s336 + $0x8] sm:$0xf] %vm2098, %v3365
        %3430 = vst.msk [vmem:[%s336 + $0xc] sm:$0xf] %vm2098, %v3366
        %3431 = vst.msk [vmem:[%s336 + $0x10] sm:$0xf] %vm2098, %v3367
        %3432 = vst.msk [vmem:[%s336 + $0x14] sm:$0xf] %vm2098, %v3368
        %3433 = vst.msk [vmem:[%s336 + $0x18] sm:$0xf] %vm2098, %v3369
        %3434 = vst.msk [vmem:[%s336 + $0x1c] sm:$0xf] %vm2098, %v3370
        %3435 = vst.msk [vmem:[%s336 + $0x20] sm:$0xf] %vm2098, %v3371
        %3436 = vst.msk [vmem:[%s336 + $0x24] sm:$0xf] %vm2098, %v3372
        %3437 = vst.msk [vmem:[%s336 + $0x28] sm:$0xf] %vm2098, %v3373
        %3438 = vst.msk [vmem:[%s336 + $0x2c] sm:$0xf] %vm2098, %v3374
        %3439 = vst.msk [vmem:[%s336 + $0x30] sm:$0xf] %vm2098, %v3375
        %3440 = vst.msk [vmem:[%s336 + $0x34] sm:$0xf] %vm2098, %v3376
        %3441 = vst.msk [vmem:[%s336 + $0x38] sm:$0xf] %vm2098, %v3377
        %3442 = vst.msk [vmem:[%s336 + $0x3c] sm:$0xf] %vm2098, %v3378
        %3443 = vst.msk [vmem:[%s336 + $0x40] sm:$0xf] %vm2098, %v3379
        %3444 = vst.msk [vmem:[%s336 + $0x44] sm:$0xf] %vm2098, %v3380
        %3445 = vst.msk [vmem:[%s336 + $0x48] sm:$0xf] %vm2098, %v3381
        %3446 = vst.msk [vmem:[%s336 + $0x4c] sm:$0xf] %vm2098, %v3382
        %3447 = vst.msk [vmem:[%s336 + $0x50] sm:$0xf] %vm2098, %v3383
        %3448 = vst.msk [vmem:[%s336 + $0x54] sm:$0xf] %vm2098, %v3384
        %3449 = vst.msk [vmem:[%s336 + $0x58] sm:$0xf] %vm2098, %v3385
        %3450 = vst.msk [vmem:[%s336 + $0x5c] sm:$0xf] %vm2098, %v3386
        %3451 = vst.msk [vmem:[%s336 + $0x60] sm:$0xf] %vm2098, %v3387
        %3452 = vst.msk [vmem:[%s336 + $0x64] sm:$0xf] %vm2098, %v3388
        %3453 = vst.msk [vmem:[%s336 + $0x68] sm:$0xf] %vm2098, %v3389
        %3454 = vst.msk [vmem:[%s336 + $0x6c] sm:$0xf] %vm2098, %v3390
        %3455 = vst.msk [vmem:[%s336 + $0x70] sm:$0xf] %vm2098, %v3391
        %3456 = vst.msk [vmem:[%s336 + $0x74] sm:$0xf] %vm2098, %v3392
        %3457 = vst.msk [vmem:[%s336 + $0x78] sm:$0xf] %vm2098, %v3393
        %3458 = vst.msk [vmem:[%s336 + $0x7c] sm:$0xf] %vm2098, %v3394
        %3467 = vrot.lane.b32.xlu0 %v764, 96
        %v3468 = vpop.permute.xlu0 %3467
        %3469 = vrot.lane.b32.xlu0 %v767, 96
        %v3470 = vpop.permute.xlu0 %3469
        %3471 = vrot.lane.b32.xlu0 %v772, 96
        %v3472 = vpop.permute.xlu0 %3471
        %3473 = vrot.lane.b32.xlu0 %v775, 96
        %v3474 = vpop.permute.xlu0 %3473
        %3475 = vrot.lane.b32.xlu0 %v780, 96
        %v3476 = vpop.permute.xlu0 %3475
        %3477 = vrot.lane.b32.xlu0 %v783, 96
        %v3478 = vpop.permute.xlu0 %3477
        %3479 = vrot.lane.b32.xlu0 %v788, 96
        %v3480 = vpop.permute.xlu0 %3479
        %3481 = vrot.lane.b32.xlu0 %v791, 96
        %v3482 = vpop.permute.xlu0 %3481
        %3491 = vrot.lane.b32.xlu0 %v764, 64
        %v3492 = vpop.permute.xlu0 %3491
        %3493 = vrot.lane.b32.xlu0 %v767, 64
        %v3494 = vpop.permute.xlu0 %3493
        %3495 = vrot.lane.b32.xlu0 %v772, 64
        %v3496 = vpop.permute.xlu0 %3495
        %3497 = vrot.lane.b32.xlu0 %v775, 64
        %v3498 = vpop.permute.xlu0 %3497
        %3499 = vrot.lane.b32.xlu0 %v780, 64
        %v3500 = vpop.permute.xlu0 %3499
        %3501 = vrot.lane.b32.xlu0 %v783, 64
        %v3502 = vpop.permute.xlu0 %3501
        %3503 = vrot.lane.b32.xlu0 %v788, 64
        %v3504 = vpop.permute.xlu0 %3503
        %3505 = vrot.lane.b32.xlu0 %v791, 64
        %v3506 = vpop.permute.xlu0 %3505
        %3515 = vrot.lane.b32.xlu0 %v764, 32
        %v3516 = vpop.permute.xlu0 %3515
        %3517 = vrot.lane.b32.xlu0 %v767, 32
        %v3518 = vpop.permute.xlu0 %3517
        %3519 = vrot.lane.b32.xlu0 %v772, 32
        %v3520 = vpop.permute.xlu0 %3519
        %3521 = vrot.lane.b32.xlu0 %v775, 32
        %v3522 = vpop.permute.xlu0 %3521
        %3523 = vrot.lane.b32.xlu0 %v780, 32
        %v3524 = vpop.permute.xlu0 %3523
        %3525 = vrot.lane.b32.xlu0 %v783, 32
        %v3526 = vpop.permute.xlu0 %3525
        %3527 = vrot.lane.b32.xlu0 %v788, 32
        %v3528 = vpop.permute.xlu0 %3527
        %3529 = vrot.lane.b32.xlu0 %v791, 32
        %v3530 = vpop.permute.xlu0 %3529
        %v3539 = vcombine.low %v764, %v3492
        %v3540 = vcombine.high %v764, %v3492
        %v3542 = vunpack.c.l.s4 1983009808
        %v3543 = vunpack.c.0.s8 %v3542
        %v3544 = vlaneseq
        %v3545 = vshrl.u32 %v3544, 7
        %v3546 = vsub.s32 %v3543, %v3545
        %v3547 = vrot.slane %v3539, %v3546
        %v3549 = vunpack.c.l.s4 1983009808
        %v3550 = vunpack.c.0.s8 %v3549
        %v3551 = vlaneseq
        %v3552 = vshrl.u32 %v3551, 7
        %v3553 = vsub.s32 %v3550, %v3552
        %v3554 = vrot.slane %v3540, %v3553
        %v3555 = vcombine.low %v3468, %v3516
        %v3556 = vcombine.high %v3468, %v3516
        %v3558 = vunpack.c.l.s4 1983009808
        %v3559 = vunpack.c.0.s8 %v3558
        %v3560 = vlaneseq
        %v3561 = vshrl.u32 %v3560, 7
        %v3562 = vsub.s32 %v3559, %v3561
        %v3563 = vrot.slane %v3555, %v3562
        %v3565 = vunpack.c.l.s4 1983009808
        %v3566 = vunpack.c.0.s8 %v3565
        %v3567 = vlaneseq
        %v3568 = vshrl.u32 %v3567, 7
        %v3569 = vsub.s32 %v3566, %v3568
        %v3570 = vrot.slane %v3556, %v3569
        %v3571 = vcombine.low %v3547, %v3563
        %v3572 = vcombine.high %v3547, %v3563
        %v3574 = vunpack.c.l.s4 1934713408
        %v3575 = vunpack.c.0.s8 %v3574
        %v3576 = vlaneseq
        %v3577 = vshrl.u32 %v3576, 7
        %v3578 = vsub.s32 %v3575, %v3577
        %v3579 = vrot.slane %v3571, %v3578
        %v3581 = vunpack.c.l.s4 1934713408
        %v3582 = vunpack.c.0.s8 %v3581
        %v3583 = vlaneseq
        %v3584 = vshrl.u32 %v3583, 7
        %v3585 = vsub.s32 %v3582, %v3584
        %v3586 = vrot.slane %v3572, %v3585
        %v3587 = vcombine.low %v3554, %v3570
        %v3588 = vcombine.high %v3554, %v3570
        %v3590 = vunpack.c.l.s4 1934713408
        %v3591 = vunpack.c.0.s8 %v3590
        %v3592 = vlaneseq
        %v3593 = vshrl.u32 %v3592, 7
        %v3594 = vsub.s32 %v3591, %v3593
        %v3595 = vrot.slane %v3587, %v3594
        %v3597 = vunpack.c.l.s4 1934713408
        %v3598 = vunpack.c.0.s8 %v3597
        %v3599 = vlaneseq
        %v3600 = vshrl.u32 %v3599, 7
        %v3601 = vsub.s32 %v3598, %v3600
        %v3602 = vrot.slane %v3588, %v3601
        %v3603 = vcombine.high %v3579, 0.0
        %v3604 = vcombine.high %v3586, 0.0
        %v3605 = vcombine.high %v3595, 0.0
        %v3606 = vcombine.high %v3602, 0.0
        %v3607 = vcombine.low %v767, %v3494
        %v3608 = vcombine.high %v767, %v3494
        %v3610 = vunpack.c.l.s4 1983009808
        %v3611 = vunpack.c.0.s8 %v3610
        %v3612 = vlaneseq
        %v3613 = vshrl.u32 %v3612, 7
        %v3614 = vsub.s32 %v3611, %v3613
        %v3615 = vrot.slane %v3607, %v3614
        %v3617 = vunpack.c.l.s4 1983009808
        %v3618 = vunpack.c.0.s8 %v3617
        %v3619 = vlaneseq
        %v3620 = vshrl.u32 %v3619, 7
        %v3621 = vsub.s32 %v3618, %v3620
        %v3622 = vrot.slane %v3608, %v3621
        %v3623 = vcombine.low %v3470, %v3518
        %v3624 = vcombine.high %v3470, %v3518
        %v3626 = vunpack.c.l.s4 1983009808
        %v3627 = vunpack.c.0.s8 %v3626
        %v3628 = vlaneseq
        %v3629 = vshrl.u32 %v3628, 7
        %v3630 = vsub.s32 %v3627, %v3629
        %v3631 = vrot.slane %v3623, %v3630
        %v3633 = vunpack.c.l.s4 1983009808
        %v3634 = vunpack.c.0.s8 %v3633
        %v3635 = vlaneseq
        %v3636 = vshrl.u32 %v3635, 7
        %v3637 = vsub.s32 %v3634, %v3636
        %v3638 = vrot.slane %v3624, %v3637
        %v3639 = vcombine.low %v3615, %v3631
        %v3640 = vcombine.high %v3615, %v3631
        %v3642 = vunpack.c.l.s4 1934713408
        %v3643 = vunpack.c.0.s8 %v3642
        %v3644 = vlaneseq
        %v3645 = vshrl.u32 %v3644, 7
        %v3646 = vsub.s32 %v3643, %v3645
        %v3647 = vrot.slane %v3639, %v3646
        %v3649 = vunpack.c.l.s4 1934713408
        %v3650 = vunpack.c.0.s8 %v3649
        %v3651 = vlaneseq
        %v3652 = vshrl.u32 %v3651, 7
        %v3653 = vsub.s32 %v3650, %v3652
        %v3654 = vrot.slane %v3640, %v3653
        %v3655 = vcombine.low %v3622, %v3638
        %v3656 = vcombine.high %v3622, %v3638
        %v3658 = vunpack.c.l.s4 1934713408
        %v3659 = vunpack.c.0.s8 %v3658
        %v3660 = vlaneseq
        %v3661 = vshrl.u32 %v3660, 7
        %v3662 = vsub.s32 %v3659, %v3661
        %v3663 = vrot.slane %v3655, %v3662
        %v3665 = vunpack.c.l.s4 1934713408
        %v3666 = vunpack.c.0.s8 %v3665
        %v3667 = vlaneseq
        %v3668 = vshrl.u32 %v3667, 7
        %v3669 = vsub.s32 %v3666, %v3668
        %v3670 = vrot.slane %v3656, %v3669
        %v3671 = vcombine.high %v3647, 0.0
        %v3672 = vcombine.high %v3654, 0.0
        %v3673 = vcombine.high %v3663, 0.0
        %v3674 = vcombine.high %v3670, 0.0
        %v3675 = vcombine.low %v772, %v3496
        %v3676 = vcombine.high %v772, %v3496
        %v3678 = vunpack.c.l.s4 1983009808
        %v3679 = vunpack.c.0.s8 %v3678
        %v3680 = vlaneseq
        %v3681 = vshrl.u32 %v3680, 7
        %v3682 = vsub.s32 %v3679, %v3681
        %v3683 = vrot.slane %v3675, %v3682
        %v3685 = vunpack.c.l.s4 1983009808
        %v3686 = vunpack.c.0.s8 %v3685
        %v3687 = vlaneseq
        %v3688 = vshrl.u32 %v3687, 7
        %v3689 = vsub.s32 %v3686, %v3688
        %v3690 = vrot.slane %v3676, %v3689
        %v3691 = vcombine.low %v3472, %v3520
        %v3692 = vcombine.high %v3472, %v3520
        %v3694 = vunpack.c.l.s4 1983009808
        %v3695 = vunpack.c.0.s8 %v3694
        %v3696 = vlaneseq
        %v3697 = vshrl.u32 %v3696, 7
        %v3698 = vsub.s32 %v3695, %v3697
        %v3699 = vrot.slane %v3691, %v3698
        %v3701 = vunpack.c.l.s4 1983009808
        %v3702 = vunpack.c.0.s8 %v3701
        %v3703 = vlaneseq
        %v3704 = vshrl.u32 %v3703, 7
        %v3705 = vsub.s32 %v3702, %v3704
        %v3706 = vrot.slane %v3692, %v3705
        %v3707 = vcombine.low %v3683, %v3699
        %v3708 = vcombine.high %v3683, %v3699
        %v3710 = vunpack.c.l.s4 1934713408
        %v3711 = vunpack.c.0.s8 %v3710
        %v3712 = vlaneseq
        %v3713 = vshrl.u32 %v3712, 7
        %v3714 = vsub.s32 %v3711, %v3713
        %v3715 = vrot.slane %v3707, %v3714
        %v3717 = vunpack.c.l.s4 1934713408
        %v3718 = vunpack.c.0.s8 %v3717
        %v3719 = vlaneseq
        %v3720 = vshrl.u32 %v3719, 7
        %v3721 = vsub.s32 %v3718, %v3720
        %v3722 = vrot.slane %v3708, %v3721
        %v3723 = vcombine.low %v3690, %v3706
        %v3724 = vcombine.high %v3690, %v3706
        %v3726 = vunpack.c.l.s4 1934713408
        %v3727 = vunpack.c.0.s8 %v3726
        %v3728 = vlaneseq
        %v3729 = vshrl.u32 %v3728, 7
        %v3730 = vsub.s32 %v3727, %v3729
        %v3731 = vrot.slane %v3723, %v3730
        %v3733 = vunpack.c.l.s4 1934713408
        %v3734 = vunpack.c.0.s8 %v3733
        %v3735 = vlaneseq
        %v3736 = vshrl.u32 %v3735, 7
        %v3737 = vsub.s32 %v3734, %v3736
        %v3738 = vrot.slane %v3724, %v3737
        %v3739 = vcombine.high %v3715, 0.0
        %v3740 = vcombine.high %v3722, 0.0
        %v3741 = vcombine.high %v3731, 0.0
        %v3742 = vcombine.high %v3738, 0.0
        %v3743 = vcombine.low %v775, %v3498
        %v3744 = vcombine.high %v775, %v3498
        %v3746 = vunpack.c.l.s4 1983009808
        %v3747 = vunpack.c.0.s8 %v3746
        %v3748 = vlaneseq
        %v3749 = vshrl.u32 %v3748, 7
        %v3750 = vsub.s32 %v3747, %v3749
        %v3751 = vrot.slane %v3743, %v3750
        %v3753 = vunpack.c.l.s4 1983009808
        %v3754 = vunpack.c.0.s8 %v3753
        %v3755 = vlaneseq
        %v3756 = vshrl.u32 %v3755, 7
        %v3757 = vsub.s32 %v3754, %v3756
        %v3758 = vrot.slane %v3744, %v3757
        %v3759 = vcombine.low %v3474, %v3522
        %v3760 = vcombine.high %v3474, %v3522
        %v3762 = vunpack.c.l.s4 1983009808
        %v3763 = vunpack.c.0.s8 %v3762
        %v3764 = vlaneseq
        %v3765 = vshrl.u32 %v3764, 7
        %v3766 = vsub.s32 %v3763, %v3765
        %v3767 = vrot.slane %v3759, %v3766
        %v3769 = vunpack.c.l.s4 1983009808
        %v3770 = vunpack.c.0.s8 %v3769
        %v3771 = vlaneseq
        %v3772 = vshrl.u32 %v3771, 7
        %v3773 = vsub.s32 %v3770, %v3772
        %v3774 = vrot.slane %v3760, %v3773
        %v3775 = vcombine.low %v3751, %v3767
        %v3776 = vcombine.high %v3751, %v3767
        %v3778 = vunpack.c.l.s4 1934713408
        %v3779 = vunpack.c.0.s8 %v3778
        %v3780 = vlaneseq
        %v3781 = vshrl.u32 %v3780, 7
        %v3782 = vsub.s32 %v3779, %v3781
        %v3783 = vrot.slane %v3775, %v3782
        %v3785 = vunpack.c.l.s4 1934713408
        %v3786 = vunpack.c.0.s8 %v3785
        %v3787 = vlaneseq
        %v3788 = vshrl.u32 %v3787, 7
        %v3789 = vsub.s32 %v3786, %v3788
        %v3790 = vrot.slane %v3776, %v3789
        %v3791 = vcombine.low %v3758, %v3774
        %v3792 = vcombine.high %v3758, %v3774
        %v3794 = vunpack.c.l.s4 1934713408
        %v3795 = vunpack.c.0.s8 %v3794
        %v3796 = vlaneseq
        %v3797 = vshrl.u32 %v3796, 7
        %v3798 = vsub.s32 %v3795, %v3797
        %v3799 = vrot.slane %v3791, %v3798
        %v3801 = vunpack.c.l.s4 1934713408
        %v3802 = vunpack.c.0.s8 %v3801
        %v3803 = vlaneseq
        %v3804 = vshrl.u32 %v3803, 7
        %v3805 = vsub.s32 %v3802, %v3804
        %v3806 = vrot.slane %v3792, %v3805
        %v3807 = vcombine.high %v3783, 0.0
        %v3808 = vcombine.high %v3790, 0.0
        %v3809 = vcombine.high %v3799, 0.0
        %v3810 = vcombine.high %v3806, 0.0
        %v3811 = vcombine.low %v780, %v3500
        %v3812 = vcombine.high %v780, %v3500
        %v3814 = vunpack.c.l.s4 1983009808
        %v3815 = vunpack.c.0.s8 %v3814
        %v3816 = vlaneseq
        %v3817 = vshrl.u32 %v3816, 7
        %v3818 = vsub.s32 %v3815, %v3817
        %v3819 = vrot.slane %v3811, %v3818
        %v3821 = vunpack.c.l.s4 1983009808
        %v3822 = vunpack.c.0.s8 %v3821
        %v3823 = vlaneseq
        %v3824 = vshrl.u32 %v3823, 7
        %v3825 = vsub.s32 %v3822, %v3824
        %v3826 = vrot.slane %v3812, %v3825
        %v3827 = vcombine.low %v3476, %v3524
        %v3828 = vcombine.high %v3476, %v3524
        %v3830 = vunpack.c.l.s4 1983009808
        %v3831 = vunpack.c.0.s8 %v3830
        %v3832 = vlaneseq
        %v3833 = vshrl.u32 %v3832, 7
        %v3834 = vsub.s32 %v3831, %v3833
        %v3835 = vrot.slane %v3827, %v3834
        %v3837 = vunpack.c.l.s4 1983009808
        %v3838 = vunpack.c.0.s8 %v3837
        %v3839 = vlaneseq
        %v3840 = vshrl.u32 %v3839, 7
        %v3841 = vsub.s32 %v3838, %v3840
        %v3842 = vrot.slane %v3828, %v3841
        %v3843 = vcombine.low %v3819, %v3835
        %v3844 = vcombine.high %v3819, %v3835
        %v3846 = vunpack.c.l.s4 1934713408
        %v3847 = vunpack.c.0.s8 %v3846
        %v3848 = vlaneseq
        %v3849 = vshrl.u32 %v3848, 7
        %v3850 = vsub.s32 %v3847, %v3849
        %v3851 = vrot.slane %v3843, %v3850
        %v3853 = vunpack.c.l.s4 1934713408
        %v3854 = vunpack.c.0.s8 %v3853
        %v3855 = vlaneseq
        %v3856 = vshrl.u32 %v3855, 7
        %v3857 = vsub.s32 %v3854, %v3856
        %v3858 = vrot.slane %v3844, %v3857
        %v3859 = vcombine.low %v3826, %v3842
        %v3860 = vcombine.high %v3826, %v3842
        %v3862 = vunpack.c.l.s4 1934713408
        %v3863 = vunpack.c.0.s8 %v3862
        %v3864 = vlaneseq
        %v3865 = vshrl.u32 %v3864, 7
        %v3866 = vsub.s32 %v3863, %v3865
        %v3867 = vrot.slane %v3859, %v3866
        %v3869 = vunpack.c.l.s4 1934713408
        %v3870 = vunpack.c.0.s8 %v3869
        %v3871 = vlaneseq
        %v3872 = vshrl.u32 %v3871, 7
        %v3873 = vsub.s32 %v3870, %v3872
        %v3874 = vrot.slane %v3860, %v3873
        %v3875 = vcombine.high %v3851, 0.0
        %v3876 = vcombine.high %v3858, 0.0
        %v3877 = vcombine.high %v3867, 0.0
        %v3878 = vcombine.high %v3874, 0.0
        %v3879 = vcombine.low %v783, %v3502
        %v3880 = vcombine.high %v783, %v3502
        %v3882 = vunpack.c.l.s4 1983009808
        %v3883 = vunpack.c.0.s8 %v3882
        %v3884 = vlaneseq
        %v3885 = vshrl.u32 %v3884, 7
        %v3886 = vsub.s32 %v3883, %v3885
        %v3887 = vrot.slane %v3879, %v3886
        %v3889 = vunpack.c.l.s4 1983009808
        %v3890 = vunpack.c.0.s8 %v3889
        %v3891 = vlaneseq
        %v3892 = vshrl.u32 %v3891, 7
        %v3893 = vsub.s32 %v3890, %v3892
        %v3894 = vrot.slane %v3880, %v3893
        %v3895 = vcombine.low %v3478, %v3526
        %v3896 = vcombine.high %v3478, %v3526
        %v3898 = vunpack.c.l.s4 1983009808
        %v3899 = vunpack.c.0.s8 %v3898
        %v3900 = vlaneseq
        %v3901 = vshrl.u32 %v3900, 7
        %v3902 = vsub.s32 %v3899, %v3901
        %v3903 = vrot.slane %v3895, %v3902
        %v3905 = vunpack.c.l.s4 1983009808
        %v3906 = vunpack.c.0.s8 %v3905
        %v3907 = vlaneseq
        %v3908 = vshrl.u32 %v3907, 7
        %v3909 = vsub.s32 %v3906, %v3908
        %v3910 = vrot.slane %v3896, %v3909
        %v3911 = vcombine.low %v3887, %v3903
        %v3912 = vcombine.high %v3887, %v3903
        %v3914 = vunpack.c.l.s4 1934713408
        %v3915 = vunpack.c.0.s8 %v3914
        %v3916 = vlaneseq
        %v3917 = vshrl.u32 %v3916, 7
        %v3918 = vsub.s32 %v3915, %v3917
        %v3919 = vrot.slane %v3911, %v3918
        %v3921 = vunpack.c.l.s4 1934713408
        %v3922 = vunpack.c.0.s8 %v3921
        %v3923 = vlaneseq
        %v3924 = vshrl.u32 %v3923, 7
        %v3925 = vsub.s32 %v3922, %v3924
        %v3926 = vrot.slane %v3912, %v3925
        %v3927 = vcombine.low %v3894, %v3910
        %v3928 = vcombine.high %v3894, %v3910
        %v3930 = vunpack.c.l.s4 1934713408
        %v3931 = vunpack.c.0.s8 %v3930
        %v3932 = vlaneseq
        %v3933 = vshrl.u32 %v3932, 7
        %v3934 = vsub.s32 %v3931, %v3933
        %v3935 = vrot.slane %v3927, %v3934
        %v3937 = vunpack.c.l.s4 1934713408
        %v3938 = vunpack.c.0.s8 %v3937
        %v3939 = vlaneseq
        %v3940 = vshrl.u32 %v3939, 7
        %v3941 = vsub.s32 %v3938, %v3940
        %v3942 = vrot.slane %v3928, %v3941
        %v3943 = vcombine.high %v3919, 0.0
        %v3944 = vcombine.high %v3926, 0.0
        %v3945 = vcombine.high %v3935, 0.0
        %v3946 = vcombine.high %v3942, 0.0
        %v3947 = vcombine.low %v788, %v3504
        %v3948 = vcombine.high %v788, %v3504
        %v3950 = vunpack.c.l.s4 1983009808
        %v3951 = vunpack.c.0.s8 %v3950
        %v3952 = vlaneseq
        %v3953 = vshrl.u32 %v3952, 7
        %v3954 = vsub.s32 %v3951, %v3953
        %v3955 = vrot.slane %v3947, %v3954
        %v3957 = vunpack.c.l.s4 1983009808
        %v3958 = vunpack.c.0.s8 %v3957
        %v3959 = vlaneseq
        %v3960 = vshrl.u32 %v3959, 7
        %v3961 = vsub.s32 %v3958, %v3960
        %v3962 = vrot.slane %v3948, %v3961
        %v3963 = vcombine.low %v3480, %v3528
        %v3964 = vcombine.high %v3480, %v3528
        %v3966 = vunpack.c.l.s4 1983009808
        %v3967 = vunpack.c.0.s8 %v3966
        %v3968 = vlaneseq
        %v3969 = vshrl.u32 %v3968, 7
        %v3970 = vsub.s32 %v3967, %v3969
        %v3971 = vrot.slane %v3963, %v3970
        %v3973 = vunpack.c.l.s4 1983009808
        %v3974 = vunpack.c.0.s8 %v3973
        %v3975 = vlaneseq
        %v3976 = vshrl.u32 %v3975, 7
        %v3977 = vsub.s32 %v3974, %v3976
        %v3978 = vrot.slane %v3964, %v3977
        %v3979 = vcombine.low %v3955, %v3971
        %v3980 = vcombine.high %v3955, %v3971
        %v3982 = vunpack.c.l.s4 1934713408
        %v3983 = vunpack.c.0.s8 %v3982
        %v3984 = vlaneseq
        %v3985 = vshrl.u32 %v3984, 7
        %v3986 = vsub.s32 %v3983, %v3985
        %v3987 = vrot.slane %v3979, %v3986
        %v3989 = vunpack.c.l.s4 1934713408
        %v3990 = vunpack.c.0.s8 %v3989
        %v3991 = vlaneseq
        %v3992 = vshrl.u32 %v3991, 7
        %v3993 = vsub.s32 %v3990, %v3992
        %v3994 = vrot.slane %v3980, %v3993
        %v3995 = vcombine.low %v3962, %v3978
        %v3996 = vcombine.high %v3962, %v3978
        %v3998 = vunpack.c.l.s4 1934713408
        %v3999 = vunpack.c.0.s8 %v3998
        %v4000 = vlaneseq
        %v4001 = vshrl.u32 %v4000, 7
        %v4002 = vsub.s32 %v3999, %v4001
        %v4003 = vrot.slane %v3995, %v4002
        %v4005 = vunpack.c.l.s4 1934713408
        %v4006 = vunpack.c.0.s8 %v4005
        %v4007 = vlaneseq
        %v4008 = vshrl.u32 %v4007, 7
        %v4009 = vsub.s32 %v4006, %v4008
        %v4010 = vrot.slane %v3996, %v4009
        %v4011 = vcombine.high %v3987, 0.0
        %v4012 = vcombine.high %v3994, 0.0
        %v4013 = vcombine.high %v4003, 0.0
        %v4014 = vcombine.high %v4010, 0.0
        %v4015 = vcombine.low %v791, %v3506
        %v4016 = vcombine.high %v791, %v3506
        %v4018 = vunpack.c.l.s4 1983009808
        %v4019 = vunpack.c.0.s8 %v4018
        %v4020 = vlaneseq
        %v4021 = vshrl.u32 %v4020, 7
        %v4022 = vsub.s32 %v4019, %v4021
        %v4023 = vrot.slane %v4015, %v4022
        %v4025 = vunpack.c.l.s4 1983009808
        %v4026 = vunpack.c.0.s8 %v4025
        %v4027 = vlaneseq
        %v4028 = vshrl.u32 %v4027, 7
        %v4029 = vsub.s32 %v4026, %v4028
        %v4030 = vrot.slane %v4016, %v4029
        %v4031 = vcombine.low %v3482, %v3530
        %v4032 = vcombine.high %v3482, %v3530
        %v4034 = vunpack.c.l.s4 1983009808
        %v4035 = vunpack.c.0.s8 %v4034
        %v4036 = vlaneseq
        %v4037 = vshrl.u32 %v4036, 7
        %v4038 = vsub.s32 %v4035, %v4037
        %v4039 = vrot.slane %v4031, %v4038
        %v4041 = vunpack.c.l.s4 1983009808
        %v4042 = vunpack.c.0.s8 %v4041
        %v4043 = vlaneseq
        %v4044 = vshrl.u32 %v4043, 7
        %v4045 = vsub.s32 %v4042, %v4044
        %v4046 = vrot.slane %v4032, %v4045
        %v4047 = vcombine.low %v4023, %v4039
        %v4048 = vcombine.high %v4023, %v4039
        %v4050 = vunpack.c.l.s4 1934713408
        %v4051 = vunpack.c.0.s8 %v4050
        %v4052 = vlaneseq
        %v4053 = vshrl.u32 %v4052, 7
        %v4054 = vsub.s32 %v4051, %v4053
        %v4055 = vrot.slane %v4047, %v4054
        %v4057 = vunpack.c.l.s4 1934713408
        %v4058 = vunpack.c.0.s8 %v4057
        %v4059 = vlaneseq
        %v4060 = vshrl.u32 %v4059, 7
        %v4061 = vsub.s32 %v4058, %v4060
        %v4062 = vrot.slane %v4048, %v4061
        %v4063 = vcombine.low %v4030, %v4046
        %v4064 = vcombine.high %v4030, %v4046
        %v4066 = vunpack.c.l.s4 1934713408
        %v4067 = vunpack.c.0.s8 %v4066
        %v4068 = vlaneseq
        %v4069 = vshrl.u32 %v4068, 7
        %v4070 = vsub.s32 %v4067, %v4069
        %v4071 = vrot.slane %v4063, %v4070
        %v4073 = vunpack.c.l.s4 1934713408
        %v4074 = vunpack.c.0.s8 %v4073
        %v4075 = vlaneseq
        %v4076 = vshrl.u32 %v4075, 7
        %v4077 = vsub.s32 %v4074, %v4076
        %v4078 = vrot.slane %v4064, %v4077
        %v4079 = vcombine.high %v4055, 0.0
        %v4080 = vcombine.high %v4062, 0.0
        %v4081 = vcombine.high %v4071, 0.0
        %v4082 = vcombine.high %v4078, 0.0
        %v4083 = vcombine.low %v3579, %v3586
        %v4085 = vunpack.c.l.s4 1983009808
        %v4086 = vunpack.c.0.s8 %v4085
        %v4087 = vlaneseq
        %v4088 = vshrl.u32 %v4087, 7
        %v4089 = vsub.s32 %v4086, %v4088
        %v4090 = vrot.slane %v4083, %v4089
        %v4091 = vcombine.low %v3603, %v3604
        %v4093 = vunpack.c.l.s4 1983009808
        %v4094 = vunpack.c.0.s8 %v4093
        %v4095 = vlaneseq
        %v4096 = vshrl.u32 %v4095, 7
        %v4097 = vsub.s32 %v4094, %v4096
        %v4098 = vrot.slane %v4091, %v4097
        %v4099 = vcombine.low %v3595, %v3602
        %v4101 = vunpack.c.l.s4 1983009808
        %v4102 = vunpack.c.0.s8 %v4101
        %v4103 = vlaneseq
        %v4104 = vshrl.u32 %v4103, 7
        %v4105 = vsub.s32 %v4102, %v4104
        %v4106 = vrot.slane %v4099, %v4105
        %v4107 = vcombine.low %v3605, %v3606
        %v4109 = vunpack.c.l.s4 1983009808
        %v4110 = vunpack.c.0.s8 %v4109
        %v4111 = vlaneseq
        %v4112 = vshrl.u32 %v4111, 7
        %v4113 = vsub.s32 %v4110, %v4112
        %v4114 = vrot.slane %v4107, %v4113
        %v4115 = vcombine.low %v4090, %v4098
        %v4116 = vcombine.high %v4090, %v4098
        %v4118 = vunpack.c.l.s4 1934713408
        %v4119 = vunpack.c.0.s8 %v4118
        %v4120 = vlaneseq
        %v4121 = vshrl.u32 %v4120, 7
        %v4122 = vsub.s32 %v4119, %v4121
        %v4123 = vrot.slane %v4115, %v4122
        %v4125 = vunpack.c.l.s4 1934713408
        %v4126 = vunpack.c.0.s8 %v4125
        %v4127 = vlaneseq
        %v4128 = vshrl.u32 %v4127, 7
        %v4129 = vsub.s32 %v4126, %v4128
        %v4130 = vrot.slane %v4116, %v4129
        %v4131 = vcombine.low %v4106, %v4114
        %v4132 = vcombine.high %v4106, %v4114
        %v4134 = vunpack.c.l.s4 1934713408
        %v4135 = vunpack.c.0.s8 %v4134
        %v4136 = vlaneseq
        %v4137 = vshrl.u32 %v4136, 7
        %v4138 = vsub.s32 %v4135, %v4137
        %v4139 = vrot.slane %v4131, %v4138
        %v4141 = vunpack.c.l.s4 1934713408
        %v4142 = vunpack.c.0.s8 %v4141
        %v4143 = vlaneseq
        %v4144 = vshrl.u32 %v4143, 7
        %v4145 = vsub.s32 %v4142, %v4144
        %v4146 = vrot.slane %v4132, %v4145
        %v4147 = vcombine.low %v4123, %v4139
        %v4148 = vcombine.high %v4123, %v4139
        %v4149 = vcombine.low %v4130, %v4146
        %v4150 = vcombine.high %v4130, %v4146
        %v4151 = vcombine.low %v3647, %v3654
        %v4153 = vunpack.c.l.s4 1983009808
        %v4154 = vunpack.c.0.s8 %v4153
        %v4155 = vlaneseq
        %v4156 = vshrl.u32 %v4155, 7
        %v4157 = vsub.s32 %v4154, %v4156
        %v4158 = vrot.slane %v4151, %v4157
        %v4159 = vcombine.low %v3671, %v3672
        %v4161 = vunpack.c.l.s4 1983009808
        %v4162 = vunpack.c.0.s8 %v4161
        %v4163 = vlaneseq
        %v4164 = vshrl.u32 %v4163, 7
        %v4165 = vsub.s32 %v4162, %v4164
        %v4166 = vrot.slane %v4159, %v4165
        %v4167 = vcombine.low %v3663, %v3670
        %v4169 = vunpack.c.l.s4 1983009808
        %v4170 = vunpack.c.0.s8 %v4169
        %v4171 = vlaneseq
        %v4172 = vshrl.u32 %v4171, 7
        %v4173 = vsub.s32 %v4170, %v4172
        %v4174 = vrot.slane %v4167, %v4173
        %v4175 = vcombine.low %v3673, %v3674
        %v4177 = vunpack.c.l.s4 1983009808
        %v4178 = vunpack.c.0.s8 %v4177
        %v4179 = vlaneseq
        %v4180 = vshrl.u32 %v4179, 7
        %v4181 = vsub.s32 %v4178, %v4180
        %v4182 = vrot.slane %v4175, %v4181
        %v4183 = vcombine.low %v4158, %v4166
        %v4184 = vcombine.high %v4158, %v4166
        %v4186 = vunpack.c.l.s4 1934713408
        %v4187 = vunpack.c.0.s8 %v4186
        %v4188 = vlaneseq
        %v4189 = vshrl.u32 %v4188, 7
        %v4190 = vsub.s32 %v4187, %v4189
        %v4191 = vrot.slane %v4183, %v4190
        %v4193 = vunpack.c.l.s4 1934713408
        %v4194 = vunpack.c.0.s8 %v4193
        %v4195 = vlaneseq
        %v4196 = vshrl.u32 %v4195, 7
        %v4197 = vsub.s32 %v4194, %v4196
        %v4198 = vrot.slane %v4184, %v4197
        %v4199 = vcombine.low %v4174, %v4182
        %v4200 = vcombine.high %v4174, %v4182
        %v4202 = vunpack.c.l.s4 1934713408
        %v4203 = vunpack.c.0.s8 %v4202
        %v4204 = vlaneseq
        %v4205 = vshrl.u32 %v4204, 7
        %v4206 = vsub.s32 %v4203, %v4205
        %v4207 = vrot.slane %v4199, %v4206
        %v4209 = vunpack.c.l.s4 1934713408
        %v4210 = vunpack.c.0.s8 %v4209
        %v4211 = vlaneseq
        %v4212 = vshrl.u32 %v4211, 7
        %v4213 = vsub.s32 %v4210, %v4212
        %v4214 = vrot.slane %v4200, %v4213
        %v4215 = vcombine.low %v4191, %v4207
        %v4216 = vcombine.high %v4191, %v4207
        %v4217 = vcombine.low %v4198, %v4214
        %v4218 = vcombine.high %v4198, %v4214
        %v4219 = vcombine.low %v3715, %v3722
        %v4221 = vunpack.c.l.s4 1983009808
        %v4222 = vunpack.c.0.s8 %v4221
        %v4223 = vlaneseq
        %v4224 = vshrl.u32 %v4223, 7
        %v4225 = vsub.s32 %v4222, %v4224
        %v4226 = vrot.slane %v4219, %v4225
        %v4227 = vcombine.low %v3739, %v3740
        %v4229 = vunpack.c.l.s4 1983009808
        %v4230 = vunpack.c.0.s8 %v4229
        %v4231 = vlaneseq
        %v4232 = vshrl.u32 %v4231, 7
        %v4233 = vsub.s32 %v4230, %v4232
        %v4234 = vrot.slane %v4227, %v4233
        %v4235 = vcombine.low %v3731, %v3738
        %v4237 = vunpack.c.l.s4 1983009808
        %v4238 = vunpack.c.0.s8 %v4237
        %v4239 = vlaneseq
        %v4240 = vshrl.u32 %v4239, 7
        %v4241 = vsub.s32 %v4238, %v4240
        %v4242 = vrot.slane %v4235, %v4241
        %v4243 = vcombine.low %v3741, %v3742
        %v4245 = vunpack.c.l.s4 1983009808
        %v4246 = vunpack.c.0.s8 %v4245
        %v4247 = vlaneseq
        %v4248 = vshrl.u32 %v4247, 7
        %v4249 = vsub.s32 %v4246, %v4248
        %v4250 = vrot.slane %v4243, %v4249
        %v4251 = vcombine.low %v4226, %v4234
        %v4252 = vcombine.high %v4226, %v4234
        %v4254 = vunpack.c.l.s4 1934713408
        %v4255 = vunpack.c.0.s8 %v4254
        %v4256 = vlaneseq
        %v4257 = vshrl.u32 %v4256, 7
        %v4258 = vsub.s32 %v4255, %v4257
        %v4259 = vrot.slane %v4251, %v4258
        %v4261 = vunpack.c.l.s4 1934713408
        %v4262 = vunpack.c.0.s8 %v4261
        %v4263 = vlaneseq
        %v4264 = vshrl.u32 %v4263, 7
        %v4265 = vsub.s32 %v4262, %v4264
        %v4266 = vrot.slane %v4252, %v4265
        %v4267 = vcombine.low %v4242, %v4250
        %v4268 = vcombine.high %v4242, %v4250
        %v4270 = vunpack.c.l.s4 1934713408
        %v4271 = vunpack.c.0.s8 %v4270
        %v4272 = vlaneseq
        %v4273 = vshrl.u32 %v4272, 7
        %v4274 = vsub.s32 %v4271, %v4273
        %v4275 = vrot.slane %v4267, %v4274
        %v4277 = vunpack.c.l.s4 1934713408
        %v4278 = vunpack.c.0.s8 %v4277
        %v4279 = vlaneseq
        %v4280 = vshrl.u32 %v4279, 7
        %v4281 = vsub.s32 %v4278, %v4280
        %v4282 = vrot.slane %v4268, %v4281
        %v4283 = vcombine.low %v4259, %v4275
        %v4284 = vcombine.high %v4259, %v4275
        %v4285 = vcombine.low %v4266, %v4282
        %v4286 = vcombine.high %v4266, %v4282
        %v4287 = vcombine.low %v3783, %v3790
        %v4289 = vunpack.c.l.s4 1983009808
        %v4290 = vunpack.c.0.s8 %v4289
        %v4291 = vlaneseq
        %v4292 = vshrl.u32 %v4291, 7
        %v4293 = vsub.s32 %v4290, %v4292
        %v4294 = vrot.slane %v4287, %v4293
        %v4295 = vcombine.low %v3807, %v3808
        %v4297 = vunpack.c.l.s4 1983009808
        %v4298 = vunpack.c.0.s8 %v4297
        %v4299 = vlaneseq
        %v4300 = vshrl.u32 %v4299, 7
        %v4301 = vsub.s32 %v4298, %v4300
        %v4302 = vrot.slane %v4295, %v4301
        %v4303 = vcombine.low %v3799, %v3806
        %v4305 = vunpack.c.l.s4 1983009808
        %v4306 = vunpack.c.0.s8 %v4305
        %v4307 = vlaneseq
        %v4308 = vshrl.u32 %v4307, 7
        %v4309 = vsub.s32 %v4306, %v4308
        %v4310 = vrot.slane %v4303, %v4309
        %v4311 = vcombine.low %v3809, %v3810
        %v4313 = vunpack.c.l.s4 1983009808
        %v4314 = vunpack.c.0.s8 %v4313
        %v4315 = vlaneseq
        %v4316 = vshrl.u32 %v4315, 7
        %v4317 = vsub.s32 %v4314, %v4316
        %v4318 = vrot.slane %v4311, %v4317
        %v4319 = vcombine.low %v4294, %v4302
        %v4320 = vcombine.high %v4294, %v4302
        %v4322 = vunpack.c.l.s4 1934713408
        %v4323 = vunpack.c.0.s8 %v4322
        %v4324 = vlaneseq
        %v4325 = vshrl.u32 %v4324, 7
        %v4326 = vsub.s32 %v4323, %v4325
        %v4327 = vrot.slane %v4319, %v4326
        %v4329 = vunpack.c.l.s4 1934713408
        %v4330 = vunpack.c.0.s8 %v4329
        %v4331 = vlaneseq
        %v4332 = vshrl.u32 %v4331, 7
        %v4333 = vsub.s32 %v4330, %v4332
        %v4334 = vrot.slane %v4320, %v4333
        %v4335 = vcombine.low %v4310, %v4318
        %v4336 = vcombine.high %v4310, %v4318
        %v4338 = vunpack.c.l.s4 1934713408
        %v4339 = vunpack.c.0.s8 %v4338
        %v4340 = vlaneseq
        %v4341 = vshrl.u32 %v4340, 7
        %v4342 = vsub.s32 %v4339, %v4341
        %v4343 = vrot.slane %v4335, %v4342
        %v4345 = vunpack.c.l.s4 1934713408
        %v4346 = vunpack.c.0.s8 %v4345
        %v4347 = vlaneseq
        %v4348 = vshrl.u32 %v4347, 7
        %v4349 = vsub.s32 %v4346, %v4348
        %v4350 = vrot.slane %v4336, %v4349
        %v4351 = vcombine.low %v4327, %v4343
        %v4352 = vcombine.high %v4327, %v4343
        %v4353 = vcombine.low %v4334, %v4350
        %v4354 = vcombine.high %v4334, %v4350
        %v4355 = vcombine.low %v3851, %v3858
        %v4357 = vunpack.c.l.s4 1983009808
        %v4358 = vunpack.c.0.s8 %v4357
        %v4359 = vlaneseq
        %v4360 = vshrl.u32 %v4359, 7
        %v4361 = vsub.s32 %v4358, %v4360
        %v4362 = vrot.slane %v4355, %v4361
        %v4363 = vcombine.low %v3875, %v3876
        %v4365 = vunpack.c.l.s4 1983009808
        %v4366 = vunpack.c.0.s8 %v4365
        %v4367 = vlaneseq
        %v4368 = vshrl.u32 %v4367, 7
        %v4369 = vsub.s32 %v4366, %v4368
        %v4370 = vrot.slane %v4363, %v4369
        %v4371 = vcombine.low %v3867, %v3874
        %v4373 = vunpack.c.l.s4 1983009808
        %v4374 = vunpack.c.0.s8 %v4373
        %v4375 = vlaneseq
        %v4376 = vshrl.u32 %v4375, 7
        %v4377 = vsub.s32 %v4374, %v4376
        %v4378 = vrot.slane %v4371, %v4377
        %v4379 = vcombine.low %v3877, %v3878
        %v4381 = vunpack.c.l.s4 1983009808
        %v4382 = vunpack.c.0.s8 %v4381
        %v4383 = vlaneseq
        %v4384 = vshrl.u32 %v4383, 7
        %v4385 = vsub.s32 %v4382, %v4384
        %v4386 = vrot.slane %v4379, %v4385
        %v4387 = vcombine.low %v4362, %v4370
        %v4388 = vcombine.high %v4362, %v4370
        %v4390 = vunpack.c.l.s4 1934713408
        %v4391 = vunpack.c.0.s8 %v4390
        %v4392 = vlaneseq
        %v4393 = vshrl.u32 %v4392, 7
        %v4394 = vsub.s32 %v4391, %v4393
        %v4395 = vrot.slane %v4387, %v4394
        %v4397 = vunpack.c.l.s4 1934713408
        %v4398 = vunpack.c.0.s8 %v4397
        %v4399 = vlaneseq
        %v4400 = vshrl.u32 %v4399, 7
        %v4401 = vsub.s32 %v4398, %v4400
        %v4402 = vrot.slane %v4388, %v4401
        %v4403 = vcombine.low %v4378, %v4386
        %v4404 = vcombine.high %v4378, %v4386
        %v4406 = vunpack.c.l.s4 1934713408
        %v4407 = vunpack.c.0.s8 %v4406
        %v4408 = vlaneseq
        %v4409 = vshrl.u32 %v4408, 7
        %v4410 = vsub.s32 %v4407, %v4409
        %v4411 = vrot.slane %v4403, %v4410
        %v4413 = vunpack.c.l.s4 1934713408
        %v4414 = vunpack.c.0.s8 %v4413
        %v4415 = vlaneseq
        %v4416 = vshrl.u32 %v4415, 7
        %v4417 = vsub.s32 %v4414, %v4416
        %v4418 = vrot.slane %v4404, %v4417
        %v4419 = vcombine.low %v4395, %v4411
        %v4420 = vcombine.high %v4395, %v4411
        %v4421 = vcombine.low %v4402, %v4418
        %v4422 = vcombine.high %v4402, %v4418
        %v4423 = vcombine.low %v3919, %v3926
        %v4425 = vunpack.c.l.s4 1983009808
        %v4426 = vunpack.c.0.s8 %v4425
        %v4427 = vlaneseq
        %v4428 = vshrl.u32 %v4427, 7
        %v4429 = vsub.s32 %v4426, %v4428
        %v4430 = vrot.slane %v4423, %v4429
        %v4431 = vcombine.low %v3943, %v3944
        %v4433 = vunpack.c.l.s4 1983009808
        %v4434 = vunpack.c.0.s8 %v4433
        %v4435 = vlaneseq
        %v4436 = vshrl.u32 %v4435, 7
        %v4437 = vsub.s32 %v4434, %v4436
        %v4438 = vrot.slane %v4431, %v4437
        %v4439 = vcombine.low %v3935, %v3942
        %v4441 = vunpack.c.l.s4 1983009808
        %v4442 = vunpack.c.0.s8 %v4441
        %v4443 = vlaneseq
        %v4444 = vshrl.u32 %v4443, 7
        %v4445 = vsub.s32 %v4442, %v4444
        %v4446 = vrot.slane %v4439, %v4445
        %v4447 = vcombine.low %v3945, %v3946
        %v4449 = vunpack.c.l.s4 1983009808
        %v4450 = vunpack.c.0.s8 %v4449
        %v4451 = vlaneseq
        %v4452 = vshrl.u32 %v4451, 7
        %v4453 = vsub.s32 %v4450, %v4452
        %v4454 = vrot.slane %v4447, %v4453
        %v4455 = vcombine.low %v4430, %v4438
        %v4456 = vcombine.high %v4430, %v4438
        %v4458 = vunpack.c.l.s4 1934713408
        %v4459 = vunpack.c.0.s8 %v4458
        %v4460 = vlaneseq
        %v4461 = vshrl.u32 %v4460, 7
        %v4462 = vsub.s32 %v4459, %v4461
        %v4463 = vrot.slane %v4455, %v4462
        %v4465 = vunpack.c.l.s4 1934713408
        %v4466 = vunpack.c.0.s8 %v4465
        %v4467 = vlaneseq
        %v4468 = vshrl.u32 %v4467, 7
        %v4469 = vsub.s32 %v4466, %v4468
        %v4470 = vrot.slane %v4456, %v4469
        %v4471 = vcombine.low %v4446, %v4454
        %v4472 = vcombine.high %v4446, %v4454
        %v4474 = vunpack.c.l.s4 1934713408
        %v4475 = vunpack.c.0.s8 %v4474
        %v4476 = vlaneseq
        %v4477 = vshrl.u32 %v4476, 7
        %v4478 = vsub.s32 %v4475, %v4477
        %v4479 = vrot.slane %v4471, %v4478
        %v4481 = vunpack.c.l.s4 1934713408
        %v4482 = vunpack.c.0.s8 %v4481
        %v4483 = vlaneseq
        %v4484 = vshrl.u32 %v4483, 7
        %v4485 = vsub.s32 %v4482, %v4484
        %v4486 = vrot.slane %v4472, %v4485
        %v4487 = vcombine.low %v4463, %v4479
        %v4488 = vcombine.high %v4463, %v4479
        %v4489 = vcombine.low %v4470, %v4486
        %v4490 = vcombine.high %v4470, %v4486
        %v4491 = vcombine.low %v3987, %v3994
        %v4493 = vunpack.c.l.s4 1983009808
        %v4494 = vunpack.c.0.s8 %v4493
        %v4495 = vlaneseq
        %v4496 = vshrl.u32 %v4495, 7
        %v4497 = vsub.s32 %v4494, %v4496
        %v4498 = vrot.slane %v4491, %v4497
        %v4499 = vcombine.low %v4011, %v4012
        %v4501 = vunpack.c.l.s4 1983009808
        %v4502 = vunpack.c.0.s8 %v4501
        %v4503 = vlaneseq
        %v4504 = vshrl.u32 %v4503, 7
        %v4505 = vsub.s32 %v4502, %v4504
        %v4506 = vrot.slane %v4499, %v4505
        %v4507 = vcombine.low %v4003, %v4010
        %v4509 = vunpack.c.l.s4 1983009808
        %v4510 = vunpack.c.0.s8 %v4509
        %v4511 = vlaneseq
        %v4512 = vshrl.u32 %v4511, 7
        %v4513 = vsub.s32 %v4510, %v4512
        %v4514 = vrot.slane %v4507, %v4513
        %v4515 = vcombine.low %v4013, %v4014
        %v4517 = vunpack.c.l.s4 1983009808
        %v4518 = vunpack.c.0.s8 %v4517
        %v4519 = vlaneseq
        %v4520 = vshrl.u32 %v4519, 7
        %v4521 = vsub.s32 %v4518, %v4520
        %v4522 = vrot.slane %v4515, %v4521
        %v4523 = vcombine.low %v4498, %v4506
        %v4524 = vcombine.high %v4498, %v4506
        %v4526 = vunpack.c.l.s4 1934713408
        %v4527 = vunpack.c.0.s8 %v4526
        %v4528 = vlaneseq
        %v4529 = vshrl.u32 %v4528, 7
        %v4530 = vsub.s32 %v4527, %v4529
        %v4531 = vrot.slane %v4523, %v4530
        %v4533 = vunpack.c.l.s4 1934713408
        %v4534 = vunpack.c.0.s8 %v4533
        %v4535 = vlaneseq
        %v4536 = vshrl.u32 %v4535, 7
        %v4537 = vsub.s32 %v4534, %v4536
        %v4538 = vrot.slane %v4524, %v4537
        %v4539 = vcombine.low %v4514, %v4522
        %v4540 = vcombine.high %v4514, %v4522
        %v4542 = vunpack.c.l.s4 1934713408
        %v4543 = vunpack.c.0.s8 %v4542
        %v4544 = vlaneseq
        %v4545 = vshrl.u32 %v4544, 7
        %v4546 = vsub.s32 %v4543, %v4545
        %v4547 = vrot.slane %v4539, %v4546
        %v4549 = vunpack.c.l.s4 1934713408
        %v4550 = vunpack.c.0.s8 %v4549
        %v4551 = vlaneseq
        %v4552 = vshrl.u32 %v4551, 7
        %v4553 = vsub.s32 %v4550, %v4552
        %v4554 = vrot.slane %v4540, %v4553
        %v4555 = vcombine.low %v4531, %v4547
        %v4556 = vcombine.high %v4531, %v4547
        %v4557 = vcombine.low %v4538, %v4554
        %v4558 = vcombine.high %v4538, %v4554
        %v4559 = vcombine.low %v4055, %v4062
        %v4561 = vunpack.c.l.s4 1983009808
        %v4562 = vunpack.c.0.s8 %v4561
        %v4563 = vlaneseq
        %v4564 = vshrl.u32 %v4563, 7
        %v4565 = vsub.s32 %v4562, %v4564
        %v4566 = vrot.slane %v4559, %v4565
        %v4567 = vcombine.low %v4079, %v4080
        %v4569 = vunpack.c.l.s4 1983009808
        %v4570 = vunpack.c.0.s8 %v4569
        %v4571 = vlaneseq
        %v4572 = vshrl.u32 %v4571, 7
        %v4573 = vsub.s32 %v4570, %v4572
        %v4574 = vrot.slane %v4567, %v4573
        %v4575 = vcombine.low %v4071, %v4078
        %v4577 = vunpack.c.l.s4 1983009808
        %v4578 = vunpack.c.0.s8 %v4577
        %v4579 = vlaneseq
        %v4580 = vshrl.u32 %v4579, 7
        %v4581 = vsub.s32 %v4578, %v4580
        %v4582 = vrot.slane %v4575, %v4581
        %v4583 = vcombine.low %v4081, %v4082
        %v4585 = vunpack.c.l.s4 1983009808
        %v4586 = vunpack.c.0.s8 %v4585
        %v4587 = vlaneseq
        %v4588 = vshrl.u32 %v4587, 7
        %v4589 = vsub.s32 %v4586, %v4588
        %v4590 = vrot.slane %v4583, %v4589
        %v4591 = vcombine.low %v4566, %v4574
        %v4592 = vcombine.high %v4566, %v4574
        %v4594 = vunpack.c.l.s4 1934713408
        %v4595 = vunpack.c.0.s8 %v4594
        %v4596 = vlaneseq
        %v4597 = vshrl.u32 %v4596, 7
        %v4598 = vsub.s32 %v4595, %v4597
        %v4599 = vrot.slane %v4591, %v4598
        %v4601 = vunpack.c.l.s4 1934713408
        %v4602 = vunpack.c.0.s8 %v4601
        %v4603 = vlaneseq
        %v4604 = vshrl.u32 %v4603, 7
        %v4605 = vsub.s32 %v4602, %v4604
        %v4606 = vrot.slane %v4592, %v4605
        %v4607 = vcombine.low %v4582, %v4590
        %v4608 = vcombine.high %v4582, %v4590
        %v4610 = vunpack.c.l.s4 1934713408
        %v4611 = vunpack.c.0.s8 %v4610
        %v4612 = vlaneseq
        %v4613 = vshrl.u32 %v4612, 7
        %v4614 = vsub.s32 %v4611, %v4613
        %v4615 = vrot.slane %v4607, %v4614
        %v4617 = vunpack.c.l.s4 1934713408
        %v4618 = vunpack.c.0.s8 %v4617
        %v4619 = vlaneseq
        %v4620 = vshrl.u32 %v4619, 7
        %v4621 = vsub.s32 %v4618, %v4620
        %v4622 = vrot.slane %v4608, %v4621
        %v4623 = vcombine.low %v4599, %v4615
        %v4624 = vcombine.high %v4599, %v4615
        %v4625 = vcombine.low %v4606, %v4622
        %v4626 = vcombine.high %v4606, %v4622
        %v4627 = vpack.c.bf16 %v4215, %v4147
        %v4628 = vpack.c.bf16 %v4351, %v4283
        %v4629 = vpack.c.bf16 %v4487, %v4419
        %v4630 = vpack.c.bf16 %v4623, %v4555
        %v4631 = vpack.c.bf16 %v4216, %v4148
        %v4632 = vpack.c.bf16 %v4352, %v4284
        %v4633 = vpack.c.bf16 %v4488, %v4420
        %v4634 = vpack.c.bf16 %v4624, %v4556
        %v4635 = vpack.c.bf16 %v4217, %v4149
        %v4636 = vpack.c.bf16 %v4353, %v4285
        %v4637 = vpack.c.bf16 %v4489, %v4421
        %v4638 = vpack.c.bf16 %v4625, %v4557
        %v4639 = vpack.c.bf16 %v4218, %v4150
        %v4640 = vpack.c.bf16 %v4354, %v4286
        %v4641 = vpack.c.bf16 %v4490, %v4422
        %v4642 = vpack.c.bf16 %v4626, %v4558
        %v4659 = vunpack.c.l.b16 %v4627
        %v4660 = vunpack.c.h.b16 %v4627
        %v4661 = vunpack.c.l.b16 %v4628
        %v4662 = vunpack.c.h.b16 %v4628
        %v4663 = vunpack.c.l.b16 %v4629
        %v4664 = vunpack.c.h.b16 %v4629
        %v4665 = vunpack.c.l.b16 %v4630
        %v4666 = vunpack.c.h.b16 %v4630
        %v4667 = vunpack.c.l.b16 %v4631
        %v4668 = vunpack.c.h.b16 %v4631
        %v4669 = vunpack.c.l.b16 %v4632
        %v4670 = vunpack.c.h.b16 %v4632
        %v4671 = vunpack.c.l.b16 %v4633
        %v4672 = vunpack.c.h.b16 %v4633
        %v4673 = vunpack.c.l.b16 %v4634
        %v4674 = vunpack.c.h.b16 %v4634
        %v4675 = vunpack.c.l.b16 %v4635
        %v4676 = vunpack.c.h.b16 %v4635
        %v4677 = vunpack.c.l.b16 %v4636
        %v4678 = vunpack.c.h.b16 %v4636
        %v4679 = vunpack.c.l.b16 %v4637
        %v4680 = vunpack.c.h.b16 %v4637
        %v4681 = vunpack.c.l.b16 %v4638
        %v4682 = vunpack.c.h.b16 %v4638
        %v4683 = vunpack.c.l.b16 %v4639
        %v4684 = vunpack.c.h.b16 %v4639
        %v4685 = vunpack.c.l.b16 %v4640
        %v4686 = vunpack.c.h.b16 %v4640
        %v4687 = vunpack.c.l.b16 %v4641
        %v4688 = vunpack.c.h.b16 %v4641
        %v4689 = vunpack.c.l.b16 %v4642
        %v4690 = vunpack.c.h.b16 %v4642
        %v4691 = vpack.c.b16 %v4659, %v4659
        %v4692 = vpack.c.b16 %v4660, %v4660
        %v4693 = vpack.c.b16 %v4661, %v4661
        %v4694 = vpack.c.b16 %v4662, %v4662
        %v4695 = vpack.c.b16 %v4663, %v4663
        %v4696 = vpack.c.b16 %v4664, %v4664
        %v4697 = vpack.c.b16 %v4665, %v4665
        %v4698 = vpack.c.b16 %v4666, %v4666
        %v4699 = vpack.c.b16 %v4667, %v4667
        %v4700 = vpack.c.b16 %v4668, %v4668
        %v4701 = vpack.c.b16 %v4669, %v4669
        %v4702 = vpack.c.b16 %v4670, %v4670
        %v4703 = vpack.c.b16 %v4671, %v4671
        %v4704 = vpack.c.b16 %v4672, %v4672
        %v4705 = vpack.c.b16 %v4673, %v4673
        %v4706 = vpack.c.b16 %v4674, %v4674
        %v4707 = vpack.c.b16 %v4675, %v4675
        %v4708 = vpack.c.b16 %v4676, %v4676
        %v4709 = vpack.c.b16 %v4677, %v4677
        %v4710 = vpack.c.b16 %v4678, %v4678
        %v4711 = vpack.c.b16 %v4679, %v4679
        %v4712 = vpack.c.b16 %v4680, %v4680
        %v4713 = vpack.c.b16 %v4681, %v4681
        %v4714 = vpack.c.b16 %v4682, %v4682
        %v4715 = vpack.c.b16 %v4683, %v4683
        %v4716 = vpack.c.b16 %v4684, %v4684
        %v4717 = vpack.c.b16 %v4685, %v4685
        %v4718 = vpack.c.b16 %v4686, %v4686
        %v4719 = vpack.c.b16 %v4687, %v4687
        %v4720 = vpack.c.b16 %v4688, %v4688
        %v4721 = vpack.c.b16 %v4689, %v4689
        %v4722 = vpack.c.b16 %v4690, %v4690
        %4755 = vst.msk [vmem:[%s342] sm:$0xf] %vm2098, %v4691
        %4756 = vst.msk [vmem:[%s342 + $0x4] sm:$0xf] %vm2098, %v4692
        %4757 = vst.msk [vmem:[%s342 + $0x8] sm:$0xf] %vm2098, %v4693
        %4758 = vst.msk [vmem:[%s342 + $0xc] sm:$0xf] %vm2098, %v4694
        %4759 = vst.msk [vmem:[%s342 + $0x10] sm:$0xf] %vm2098, %v4695
        %4760 = vst.msk [vmem:[%s342 + $0x14] sm:$0xf] %vm2098, %v4696
        %4761 = vst.msk [vmem:[%s342 + $0x18] sm:$0xf] %vm2098, %v4697
        %4762 = vst.msk [vmem:[%s342 + $0x1c] sm:$0xf] %vm2098, %v4698
        %4763 = vst.msk [vmem:[%s342 + $0x20] sm:$0xf] %vm2098, %v4699
        %4764 = vst.msk [vmem:[%s342 + $0x24] sm:$0xf] %vm2098, %v4700
        %4765 = vst.msk [vmem:[%s342 + $0x28] sm:$0xf] %vm2098, %v4701
        %4766 = vst.msk [vmem:[%s342 + $0x2c] sm:$0xf] %vm2098, %v4702
        %4767 = vst.msk [vmem:[%s342 + $0x30] sm:$0xf] %vm2098, %v4703
        %4768 = vst.msk [vmem:[%s342 + $0x34] sm:$0xf] %vm2098, %v4704
        %4769 = vst.msk [vmem:[%s342 + $0x38] sm:$0xf] %vm2098, %v4705
        %4770 = vst.msk [vmem:[%s342 + $0x3c] sm:$0xf] %vm2098, %v4706
        %4771 = vst.msk [vmem:[%s342 + $0x40] sm:$0xf] %vm2098, %v4707
        %4772 = vst.msk [vmem:[%s342 + $0x44] sm:$0xf] %vm2098, %v4708
        %4773 = vst.msk [vmem:[%s342 + $0x48] sm:$0xf] %vm2098, %v4709
        %4774 = vst.msk [vmem:[%s342 + $0x4c] sm:$0xf] %vm2098, %v4710
        %4775 = vst.msk [vmem:[%s342 + $0x50] sm:$0xf] %vm2098, %v4711
        %4776 = vst.msk [vmem:[%s342 + $0x54] sm:$0xf] %vm2098, %v4712
        %4777 = vst.msk [vmem:[%s342 + $0x58] sm:$0xf] %vm2098, %v4713
        %4778 = vst.msk [vmem:[%s342 + $0x5c] sm:$0xf] %vm2098, %v4714
        %4779 = vst.msk [vmem:[%s342 + $0x60] sm:$0xf] %vm2098, %v4715
        %4780 = vst.msk [vmem:[%s342 + $0x64] sm:$0xf] %vm2098, %v4716
        %4781 = vst.msk [vmem:[%s342 + $0x68] sm:$0xf] %vm2098, %v4717
        %4782 = vst.msk [vmem:[%s342 + $0x6c] sm:$0xf] %vm2098, %v4718
        %4783 = vst.msk [vmem:[%s342 + $0x70] sm:$0xf] %vm2098, %v4719
        %4784 = vst.msk [vmem:[%s342 + $0x74] sm:$0xf] %vm2098, %v4720
        %4785 = vst.msk [vmem:[%s342 + $0x78] sm:$0xf] %vm2098, %v4721
        %4786 = vst.msk [vmem:[%s342 + $0x7c] sm:$0xf] %vm2098, %v4722
        %s4787 = sand.u32 %s157, 1
        %s4788 = sand.u32 %s157, 1
        %s4789 = smul.addr %s4788, 128
        %s4790 = scalar_lea.vmem [#allocation6], %s4789
        %s4791 = sand.u32 %s185, 1
        %s4792 = sand.u32 %s185, 1
        %s4793 = smul.addr %s4792, 128
        %s4794 = scalar_lea.vmem [#allocation7], %s4793
        %s4795 = sand.u32 %s213, 1
        %s4796 = sand.u32 %s213, 1
        %s4797 = smul.addr %s4796, 128
        %s4798 = scalar_lea.vmem [#allocation8], %s4797
        // Predicated region
        $region49: #{tpu_custom_call.1} parent=39 // pred_check
          %p4799 = pneg %p167
        $region50: #{tpu_custom_call.1} parent=39 // pred_check_branch
          %4801 = sbr.rel (%p4799) target = $region52
        $region51: #{tpu_custom_call.1} parent=39 // pred_region
          %s4802 = smul.u32 8, %s28
          %s4803 = smul.addr %s27, 64
          %s4804 = sadd.s32 %s4802, %s4803
          %s4805 = smul.addr %s4804, 4
          %s4806 = scalar_lea.vmem %s5, %s4805
          // Predicated region
          $region53: #{tpu_custom_call.1} parent=51 // pred_check
            _
          $region54: #{tpu_custom_call.1} parent=51 // pred_check_branch
            %4808 = sbr.rel (0) target = $region56
          $region55: #{tpu_custom_call.1} parent=51 // pred_region
            // Predicated region
            $region57: #{tpu_custom_call.1} parent=55 // pred_check
              _
            $region58: #{tpu_custom_call.1} parent=55 // pred_check_branch
              %4810 = sbr.rel target = $region60
            $region59: #{tpu_custom_call.1} parent=55 // pred_region
              // Predicated region
              $region72: #{tpu_custom_call.1} parent=59 // pred_check
                _
              $region73: #{tpu_custom_call.1} parent=59 // pred_check_branch
                %4887 = sbr.rel (0) target = $region75
              $region74: #{tpu_custom_call.1} parent=59 // pred_region
                loop: start=0, step=1, limit=1
                $region76: #{tpu_custom_call.1} parent=74 // loop_pre_header
                  _
                $region77: #{tpu_custom_call.1} parent=74 // loop_header
                  %s4889 = sphi 0, %s4893
                  %p4890 = scmp.ge.s32.totalorder %s4889, 1
                  %s4894 = sphi %s4790, %s4790
                  %s4895 = sphi %s4806, %s4806
                $region78: #{tpu_custom_call.1} parent=74 // loop_header_branch
                  %4892 = sbr.rel (%p4890) target = $region82
                $region79: #{tpu_custom_call.1} parent=74 // loop_body
                  _
                $region80: #{tpu_custom_call.1} parent=74 // loop_footer
                  %s4893 = sadd.s32 1, %s4889
                $region81: #{tpu_custom_call.1} parent=74 // loop_footer_branch
                  %4888 = sbr.rel target = $region77
                $region82: #{tpu_custom_call.1} parent=74 // loop_exit
                  _
                loop: start=0, step=1, limit=1
                $region83: #{tpu_custom_call.1} parent=74 // loop_pre_header
                  _
                $region84: #{tpu_custom_call.1} parent=74 // loop_header
                  %s4898 = sphi 0, %s4902
                  %p4899 = scmp.ge.s32.totalorder %s4898, 1
                  %s4903 = sphi %s4790, %s4790
                  %s4904 = sphi %s4806, %s4806
                $region85: #{tpu_custom_call.1} parent=74 // loop_header_branch
                  %4901 = sbr.rel (%p4899) target = $region89
                $region86: #{tpu_custom_call.1} parent=74 // loop_body
                  %v4905 = vld [vmem:[%s4903] sm:$0xf]
                  %4906 = vst [vmem:[%s4904] sm:$0xf] %v4905
                  %v4907 = vld [vmem:[%s4903 + $0x4] sm:$0xf]
                  %4908 = vst [vmem:[%s4904 + $0x4] sm:$0xf] %v4907
                  %v4909 = vld [vmem:[%s4903 + $0x8] sm:$0xf]
                  %4910 = vst [vmem:[%s4904 + $0x8] sm:$0xf] %v4909
                  %v4911 = vld [vmem:[%s4903 + $0xc] sm:$0xf]
                  %4912 = vst [vmem:[%s4904 + $0xc] sm:$0xf] %v4911
                  %v4913 = vld [vmem:[%s4903 + $0x10] sm:$0xf]
                  %4914 = vst [vmem:[%s4904 + $0x10] sm:$0xf] %v4913
                  %v4915 = vld [vmem:[%s4903 + $0x14] sm:$0xf]
                  %4916 = vst [vmem:[%s4904 + $0x14] sm:$0xf] %v4915
                  %v4917 = vld [vmem:[%s4903 + $0x18] sm:$0xf]
                  %4918 = vst [vmem:[%s4904 + $0x18] sm:$0xf] %v4917
                  %v4919 = vld [vmem:[%s4903 + $0x1c] sm:$0xf]
                  %4920 = vst [vmem:[%s4904 + $0x1c] sm:$0xf] %v4919
                  %v4921 = vld [vmem:[%s4903 + $0x20] sm:$0xf]
                  %4922 = vst [vmem:[%s4904 + $0x40] sm:$0xf] %v4921
                  %v4923 = vld [vmem:[%s4903 + $0x24] sm:$0xf]
                  %4924 = vst [vmem:[%s4904 + $0x44] sm:$0xf] %v4923
                  %v4925 = vld [vmem:[%s4903 + $0x28] sm:$0xf]
                  %4926 = vst [vmem:[%s4904 + $0x48] sm:$0xf] %v4925
                  %v4927 = vld [vmem:[%s4903 + $0x2c] sm:$0xf]
                  %4928 = vst [vmem:[%s4904 + $0x4c] sm:$0xf] %v4927
                  %v4929 = vld [vmem:[%s4903 + $0x30] sm:$0xf]
                  %4930 = vst [vmem:[%s4904 + $0x50] sm:$0xf] %v4929
                  %v4931 = vld [vmem:[%s4903 + $0x34] sm:$0xf]
                  %4932 = vst [vmem:[%s4904 + $0x54] sm:$0xf] %v4931
                  %v4933 = vld [vmem:[%s4903 + $0x38] sm:$0xf]
                  %4934 = vst [vmem:[%s4904 + $0x58] sm:$0xf] %v4933
                  %v4935 = vld [vmem:[%s4903 + $0x3c] sm:$0xf]
                  %4936 = vst [vmem:[%s4904 + $0x5c] sm:$0xf] %v4935
                  %v4937 = vld [vmem:[%s4903 + $0x40] sm:$0xf]
                  %4938 = vst [vmem:[%s4904 + $0x80] sm:$0xf] %v4937
                  %v4939 = vld [vmem:[%s4903 + $0x44] sm:$0xf]
                  %4940 = vst [vmem:[%s4904 + $0x84] sm:$0xf] %v4939
                  %v4941 = vld [vmem:[%s4903 + $0x48] sm:$0xf]
                  %4942 = vst [vmem:[%s4904 + $0x88] sm:$0xf] %v4941
                  %v4943 = vld [vmem:[%s4903 + $0x4c] sm:$0xf]
                  %4944 = vst [vmem:[%s4904 + $0x8c] sm:$0xf] %v4943
                  %v4945 = vld [vmem:[%s4903 + $0x50] sm:$0xf]
                  %4946 = vst [vmem:[%s4904 + $0x90] sm:$0xf] %v4945
                  %v4947 = vld [vmem:[%s4903 + $0x54] sm:$0xf]
                  %4948 = vst [vmem:[%s4904 + $0x94] sm:$0xf] %v4947
                  %v4949 = vld [vmem:[%s4903 + $0x58] sm:$0xf]
                  %4950 = vst [vmem:[%s4904 + $0x98] sm:$0xf] %v4949
                  %v4951 = vld [vmem:[%s4903 + $0x5c] sm:$0xf]
                  %4952 = vst [vmem:[%s4904 + $0x9c] sm:$0xf] %v4951
                  %v4953 = vld [vmem:[%s4903 + $0x60] sm:$0xf]
                  %4954 = vst [vmem:[%s4904 + $0xc0] sm:$0xf] %v4953
                  %v4955 = vld [vmem:[%s4903 + $0x64] sm:$0xf]
                  %4956 = vst [vmem:[%s4904 + $0xc4] sm:$0xf] %v4955
                  %v4957 = vld [vmem:[%s4903 + $0x68] sm:$0xf]
                  %4958 = vst [vmem:[%s4904 + $0xc8] sm:$0xf] %v4957
                  %v4959 = vld [vmem:[%s4903 + $0x6c] sm:$0xf]
                  %4960 = vst [vmem:[%s4904 + $0xcc] sm:$0xf] %v4959
                  %v4961 = vld [vmem:[%s4903 + $0x70] sm:$0xf]
                  %4962 = vst [vmem:[%s4904 + $0xd0] sm:$0xf] %v4961
                  %v4963 = vld [vmem:[%s4903 + $0x74] sm:$0xf]
                  %4964 = vst [vmem:[%s4904 + $0xd4] sm:$0xf] %v4963
                  %v4965 = vld [vmem:[%s4903 + $0x78] sm:$0xf]
                  %4966 = vst [vmem:[%s4904 + $0xd8] sm:$0xf] %v4965
                  %v4967 = vld [vmem:[%s4903 + $0x7c] sm:$0xf]
                  %4968 = vst [vmem:[%s4904 + $0xdc] sm:$0xf] %v4967
                $region87: #{tpu_custom_call.1} parent=74 // loop_footer
                  %s4902 = sadd.s32 1, %s4898
                $region88: #{tpu_custom_call.1} parent=74 // loop_footer_branch
                  %4897 = sbr.rel target = $region84
                $region89: #{tpu_custom_call.1} parent=74 // loop_exit
                  _
              $region75: #{tpu_custom_call.1} parent=59 // pred_fallthru
                _
            $region60: #{tpu_custom_call.1} parent=55 // pred_fallthru
              _
            // Predicated region
            $region61: #{tpu_custom_call.1} parent=55 // pred_check
              _
            $region62: #{tpu_custom_call.1} parent=55 // pred_check_branch
              %4812 = sbr.rel (0) target = $region64
            $region63: #{tpu_custom_call.1} parent=55 // pred_region
              loop: start=0, step=1, limit=1
              $region65: #{tpu_custom_call.1} parent=63 // loop_pre_header
                _
              $region66: #{tpu_custom_call.1} parent=63 // loop_header
                %s4815 = sphi 0, %s4819
                %p4816 = scmp.ge.s32.totalorder %s4815, 1
                %s4820 = sphi %s4790, %s4790
                %s4821 = sphi %s4806, %s4806
              $region67: #{tpu_custom_call.1} parent=63 // loop_header_branch
                %4818 = sbr.rel (%p4816) target = $region71
              $region68: #{tpu_custom_call.1} parent=63 // loop_body
                %v4822 = vld [vmem:[%s4820] sm:$0xf]
                %4823 = vst [vmem:[%s4821] sm:$0xf] %v4822
                %v4824 = vld [vmem:[%s4820 + $0x4] sm:$0xf]
                %4825 = vst [vmem:[%s4821 + $0x4] sm:$0xf] %v4824
                %v4826 = vld [vmem:[%s4820 + $0x8] sm:$0xf]
                %4827 = vst [vmem:[%s4821 + $0x8] sm:$0xf] %v4826
                %v4828 = vld [vmem:[%s4820 + $0xc] sm:$0xf]
                %4829 = vst [vmem:[%s4821 + $0xc] sm:$0xf] %v4828
                %v4830 = vld [vmem:[%s4820 + $0x10] sm:$0xf]
                %4831 = vst [vmem:[%s4821 + $0x10] sm:$0xf] %v4830
                %v4832 = vld [vmem:[%s4820 + $0x14] sm:$0xf]
                %4833 = vst [vmem:[%s4821 + $0x14] sm:$0xf] %v4832
                %v4834 = vld [vmem:[%s4820 + $0x18] sm:$0xf]
                %4835 = vst [vmem:[%s4821 + $0x18] sm:$0xf] %v4834
                %v4836 = vld [vmem:[%s4820 + $0x1c] sm:$0xf]
                %4837 = vst [vmem:[%s4821 + $0x1c] sm:$0xf] %v4836
                %v4838 = vld [vmem:[%s4820 + $0x20] sm:$0xf]
                %4839 = vst [vmem:[%s4821 + $0x40] sm:$0xf] %v4838
                %v4840 = vld [vmem:[%s4820 + $0x24] sm:$0xf]
                %4841 = vst [vmem:[%s4821 + $0x44] sm:$0xf] %v4840
                %v4842 = vld [vmem:[%s4820 + $0x28] sm:$0xf]
                %4843 = vst [vmem:[%s4821 + $0x48] sm:$0xf] %v4842
                %v4844 = vld [vmem:[%s4820 + $0x2c] sm:$0xf]
                %4845 = vst [vmem:[%s4821 + $0x4c] sm:$0xf] %v4844
                %v4846 = vld [vmem:[%s4820 + $0x30] sm:$0xf]
                %4847 = vst [vmem:[%s4821 + $0x50] sm:$0xf] %v4846
                %v4848 = vld [vmem:[%s4820 + $0x34] sm:$0xf]
                %4849 = vst [vmem:[%s4821 + $0x54] sm:$0xf] %v4848
                %v4850 = vld [vmem:[%s4820 + $0x38] sm:$0xf]
                %4851 = vst [vmem:[%s4821 + $0x58] sm:$0xf] %v4850
                %v4852 = vld [vmem:[%s4820 + $0x3c] sm:$0xf]
                %4853 = vst [vmem:[%s4821 + $0x5c] sm:$0xf] %v4852
                %v4854 = vld [vmem:[%s4820 + $0x40] sm:$0xf]
                %4855 = vst [vmem:[%s4821 + $0x80] sm:$0xf] %v4854
                %v4856 = vld [vmem:[%s4820 + $0x44] sm:$0xf]
                %4857 = vst [vmem:[%s4821 + $0x84] sm:$0xf] %v4856
                %v4858 = vld [vmem:[%s4820 + $0x48] sm:$0xf]
                %4859 = vst [vmem:[%s4821 + $0x88] sm:$0xf] %v4858
                %v4860 = vld [vmem:[%s4820 + $0x4c] sm:$0xf]
                %4861 = vst [vmem:[%s4821 + $0x8c] sm:$0xf] %v4860
                %v4862 = vld [vmem:[%s4820 + $0x50] sm:$0xf]
                %4863 = vst [vmem:[%s4821 + $0x90] sm:$0xf] %v4862
                %v4864 = vld [vmem:[%s4820 + $0x54] sm:$0xf]
                %4865 = vst [vmem:[%s4821 + $0x94] sm:$0xf] %v4864
                %v4866 = vld [vmem:[%s4820 + $0x58] sm:$0xf]
                %4867 = vst [vmem:[%s4821 + $0x98] sm:$0xf] %v4866
                %v4868 = vld [vmem:[%s4820 + $0x5c] sm:$0xf]
                %4869 = vst [vmem:[%s4821 + $0x9c] sm:$0xf] %v4868
                %v4870 = vld [vmem:[%s4820 + $0x60] sm:$0xf]
                %4871 = vst [vmem:[%s4821 + $0xc0] sm:$0xf] %v4870
                %v4872 = vld [vmem:[%s4820 + $0x64] sm:$0xf]
                %4873 = vst [vmem:[%s4821 + $0xc4] sm:$0xf] %v4872
                %v4874 = vld [vmem:[%s4820 + $0x68] sm:$0xf]
                %4875 = vst [vmem:[%s4821 + $0xc8] sm:$0xf] %v4874
                %v4876 = vld [vmem:[%s4820 + $0x6c] sm:$0xf]
                %4877 = vst [vmem:[%s4821 + $0xcc] sm:$0xf] %v4876
                %v4878 = vld [vmem:[%s4820 + $0x70] sm:$0xf]
                %4879 = vst [vmem:[%s4821 + $0xd0] sm:$0xf] %v4878
                %v4880 = vld [vmem:[%s4820 + $0x74] sm:$0xf]
                %4881 = vst [vmem:[%s4821 + $0xd4] sm:$0xf] %v4880
                %v4882 = vld [vmem:[%s4820 + $0x78] sm:$0xf]
                %4883 = vst [vmem:[%s4821 + $0xd8] sm:$0xf] %v4882
                %v4884 = vld [vmem:[%s4820 + $0x7c] sm:$0xf]
                %4885 = vst [vmem:[%s4821 + $0xdc] sm:$0xf] %v4884
              $region69: #{tpu_custom_call.1} parent=63 // loop_footer
                %s4819 = sadd.s32 1, %s4815
              $region70: #{tpu_custom_call.1} parent=63 // loop_footer_branch
                %4814 = sbr.rel target = $region66
              $region71: #{tpu_custom_call.1} parent=63 // loop_exit
                _
            $region64: #{tpu_custom_call.1} parent=55 // pred_fallthru
              _
          $region56: #{tpu_custom_call.1} parent=51 // pred_fallthru
            _
          %4969 = vnop
        $region52: #{tpu_custom_call.1} parent=39 // pred_fallthru
          _
        // Predicated region
        $region90: #{tpu_custom_call.1} parent=39 // pred_check
          %p4970 = pneg %p195
        $region91: #{tpu_custom_call.1} parent=39 // pred_check_branch
          %4972 = sbr.rel (%p4970) target = $region93
        $region92: #{tpu_custom_call.1} parent=39 // pred_region
          %s4973 = smul.u32 8, %s28
          %s4974 = smul.addr %s27, 64
          %s4975 = sadd.s32 %s4973, %s4974
          %s4976 = smul.addr %s4975, 4
          %s4977 = scalar_lea.vmem %s6, %s4976
          // Predicated region
          $region94: #{tpu_custom_call.1} parent=92 // pred_check
            _
          $region95: #{tpu_custom_call.1} parent=92 // pred_check_branch
            %4979 = sbr.rel (0) target = $region97
          $region96: #{tpu_custom_call.1} parent=92 // pred_region
            // Predicated region
            $region98: #{tpu_custom_call.1} parent=96 // pred_check
              _
            $region99: #{tpu_custom_call.1} parent=96 // pred_check_branch
              %4981 = sbr.rel target = $region101
            $region100: #{tpu_custom_call.1} parent=96 // pred_region
              // Predicated region
              $region113: #{tpu_custom_call.1} parent=100 // pred_check
                _
              $region114: #{tpu_custom_call.1} parent=100 // pred_check_branch
                %5058 = sbr.rel (0) target = $region116
              $region115: #{tpu_custom_call.1} parent=100 // pred_region
                loop: start=0, step=1, limit=1
                $region117: #{tpu_custom_call.1} parent=115 // loop_pre_header
                  _
                $region118: #{tpu_custom_call.1} parent=115 // loop_header
                  %s5060 = sphi 0, %s5064
                  %p5061 = scmp.ge.s32.totalorder %s5060, 1
                  %s5065 = sphi %s4794, %s4794
                  %s5066 = sphi %s4977, %s4977
                $region119: #{tpu_custom_call.1} parent=115 // loop_header_branch
                  %5063 = sbr.rel (%p5061) target = $region123
                $region120: #{tpu_custom_call.1} parent=115 // loop_body
                  _
                $region121: #{tpu_custom_call.1} parent=115 // loop_footer
                  %s5064 = sadd.s32 1, %s5060
                $region122: #{tpu_custom_call.1} parent=115 // loop_footer_branch
                  %5059 = sbr.rel target = $region118
                $region123: #{tpu_custom_call.1} parent=115 // loop_exit
                  _
                loop: start=0, step=1, limit=1
                $region124: #{tpu_custom_call.1} parent=115 // loop_pre_header
                  _
                $region125: #{tpu_custom_call.1} parent=115 // loop_header
                  %s5069 = sphi 0, %s5073
                  %p5070 = scmp.ge.s32.totalorder %s5069, 1
                  %s5074 = sphi %s4794, %s4794
                  %s5075 = sphi %s4977, %s4977
                $region126: #{tpu_custom_call.1} parent=115 // loop_header_branch
                  %5072 = sbr.rel (%p5070) target = $region130
                $region127: #{tpu_custom_call.1} parent=115 // loop_body
                  %v5076 = vld [vmem:[%s5074] sm:$0xf]
                  %5077 = vst [vmem:[%s5075] sm:$0xf] %v5076
                  %v5078 = vld [vmem:[%s5074 + $0x4] sm:$0xf]
                  %5079 = vst [vmem:[%s5075 + $0x4] sm:$0xf] %v5078
                  %v5080 = vld [vmem:[%s5074 + $0x8] sm:$0xf]
                  %5081 = vst [vmem:[%s5075 + $0x8] sm:$0xf] %v5080
                  %v5082 = vld [vmem:[%s5074 + $0xc] sm:$0xf]
                  %5083 = vst [vmem:[%s5075 + $0xc] sm:$0xf] %v5082
                  %v5084 = vld [vmem:[%s5074 + $0x10] sm:$0xf]
                  %5085 = vst [vmem:[%s5075 + $0x10] sm:$0xf] %v5084
                  %v5086 = vld [vmem:[%s5074 + $0x14] sm:$0xf]
                  %5087 = vst [vmem:[%s5075 + $0x14] sm:$0xf] %v5086
                  %v5088 = vld [vmem:[%s5074 + $0x18] sm:$0xf]
                  %5089 = vst [vmem:[%s5075 + $0x18] sm:$0xf] %v5088
                  %v5090 = vld [vmem:[%s5074 + $0x1c] sm:$0xf]
                  %5091 = vst [vmem:[%s5075 + $0x1c] sm:$0xf] %v5090
                  %v5092 = vld [vmem:[%s5074 + $0x20] sm:$0xf]
                  %5093 = vst [vmem:[%s5075 + $0x40] sm:$0xf] %v5092
                  %v5094 = vld [vmem:[%s5074 + $0x24] sm:$0xf]
                  %5095 = vst [vmem:[%s5075 + $0x44] sm:$0xf] %v5094
                  %v5096 = vld [vmem:[%s5074 + $0x28] sm:$0xf]
                  %5097 = vst [vmem:[%s5075 + $0x48] sm:$0xf] %v5096
                  %v5098 = vld [vmem:[%s5074 + $0x2c] sm:$0xf]
                  %5099 = vst [vmem:[%s5075 + $0x4c] sm:$0xf] %v5098
                  %v5100 = vld [vmem:[%s5074 + $0x30] sm:$0xf]
                  %5101 = vst [vmem:[%s5075 + $0x50] sm:$0xf] %v5100
                  %v5102 = vld [vmem:[%s5074 + $0x34] sm:$0xf]
                  %5103 = vst [vmem:[%s5075 + $0x54] sm:$0xf] %v5102
                  %v5104 = vld [vmem:[%s5074 + $0x38] sm:$0xf]
                  %5105 = vst [vmem:[%s5075 + $0x58] sm:$0xf] %v5104
                  %v5106 = vld [vmem:[%s5074 + $0x3c] sm:$0xf]
                  %5107 = vst [vmem:[%s5075 + $0x5c] sm:$0xf] %v5106
                  %v5108 = vld [vmem:[%s5074 + $0x40] sm:$0xf]
                  %5109 = vst [vmem:[%s5075 + $0x80] sm:$0xf] %v5108
                  %v5110 = vld [vmem:[%s5074 + $0x44] sm:$0xf]
                  %5111 = vst [vmem:[%s5075 + $0x84] sm:$0xf] %v5110
                  %v5112 = vld [vmem:[%s5074 + $0x48] sm:$0xf]
                  %5113 = vst [vmem:[%s5075 + $0x88] sm:$0xf] %v5112
                  %v5114 = vld [vmem:[%s5074 + $0x4c] sm:$0xf]
                  %5115 = vst [vmem:[%s5075 + $0x8c] sm:$0xf] %v5114
                  %v5116 = vld [vmem:[%s5074 + $0x50] sm:$0xf]
                  %5117 = vst [vmem:[%s5075 + $0x90] sm:$0xf] %v5116
                  %v5118 = vld [vmem:[%s5074 + $0x54] sm:$0xf]
                  %5119 = vst [vmem:[%s5075 + $0x94] sm:$0xf] %v5118
                  %v5120 = vld [vmem:[%s5074 + $0x58] sm:$0xf]
                  %5121 = vst [vmem:[%s5075 + $0x98] sm:$0xf] %v5120
                  %v5122 = vld [vmem:[%s5074 + $0x5c] sm:$0xf]
                  %5123 = vst [vmem:[%s5075 + $0x9c] sm:$0xf] %v5122
                  %v5124 = vld [vmem:[%s5074 + $0x60] sm:$0xf]
                  %5125 = vst [vmem:[%s5075 + $0xc0] sm:$0xf] %v5124
                  %v5126 = vld [vmem:[%s5074 + $0x64] sm:$0xf]
                  %5127 = vst [vmem:[%s5075 + $0xc4] sm:$0xf] %v5126
                  %v5128 = vld [vmem:[%s5074 + $0x68] sm:$0xf]
                  %5129 = vst [vmem:[%s5075 + $0xc8] sm:$0xf] %v5128
                  %v5130 = vld [vmem:[%s5074 + $0x6c] sm:$0xf]
                  %5131 = vst [vmem:[%s5075 + $0xcc] sm:$0xf] %v5130
                  %v5132 = vld [vmem:[%s5074 + $0x70] sm:$0xf]
                  %5133 = vst [vmem:[%s5075 + $0xd0] sm:$0xf] %v5132
                  %v5134 = vld [vmem:[%s5074 + $0x74] sm:$0xf]
                  %5135 = vst [vmem:[%s5075 + $0xd4] sm:$0xf] %v5134
                  %v5136 = vld [vmem:[%s5074 + $0x78] sm:$0xf]
                  %5137 = vst [vmem:[%s5075 + $0xd8] sm:$0xf] %v5136
                  %v5138 = vld [vmem:[%s5074 + $0x7c] sm:$0xf]
                  %5139 = vst [vmem:[%s5075 + $0xdc] sm:$0xf] %v5138
                $region128: #{tpu_custom_call.1} parent=115 // loop_footer
                  %s5073 = sadd.s32 1, %s5069
                $region129: #{tpu_custom_call.1} parent=115 // loop_footer_branch
                  %5068 = sbr.rel target = $region125
                $region130: #{tpu_custom_call.1} parent=115 // loop_exit
                  _
              $region116: #{tpu_custom_call.1} parent=100 // pred_fallthru
                _
            $region101: #{tpu_custom_call.1} parent=96 // pred_fallthru
              _
            // Predicated region
            $region102: #{tpu_custom_call.1} parent=96 // pred_check
              _
            $region103: #{tpu_custom_call.1} parent=96 // pred_check_branch
              %4983 = sbr.rel (0) target = $region105
            $region104: #{tpu_custom_call.1} parent=96 // pred_region
              loop: start=0, step=1, limit=1
              $region106: #{tpu_custom_call.1} parent=104 // loop_pre_header
                _
              $region107: #{tpu_custom_call.1} parent=104 // loop_header
                %s4986 = sphi 0, %s4990
                %p4987 = scmp.ge.s32.totalorder %s4986, 1
                %s4991 = sphi %s4794, %s4794
                %s4992 = sphi %s4977, %s4977
              $region108: #{tpu_custom_call.1} parent=104 // loop_header_branch
                %4989 = sbr.rel (%p4987) target = $region112
              $region109: #{tpu_custom_call.1} parent=104 // loop_body
                %v4993 = vld [vmem:[%s4991] sm:$0xf]
                %4994 = vst [vmem:[%s4992] sm:$0xf] %v4993
                %v4995 = vld [vmem:[%s4991 + $0x4] sm:$0xf]
                %4996 = vst [vmem:[%s4992 + $0x4] sm:$0xf] %v4995
                %v4997 = vld [vmem:[%s4991 + $0x8] sm:$0xf]
                %4998 = vst [vmem:[%s4992 + $0x8] sm:$0xf] %v4997
                %v4999 = vld [vmem:[%s4991 + $0xc] sm:$0xf]
                %5000 = vst [vmem:[%s4992 + $0xc] sm:$0xf] %v4999
                %v5001 = vld [vmem:[%s4991 + $0x10] sm:$0xf]
                %5002 = vst [vmem:[%s4992 + $0x10] sm:$0xf] %v5001
                %v5003 = vld [vmem:[%s4991 + $0x14] sm:$0xf]
                %5004 = vst [vmem:[%s4992 + $0x14] sm:$0xf] %v5003
                %v5005 = vld [vmem:[%s4991 + $0x18] sm:$0xf]
                %5006 = vst [vmem:[%s4992 + $0x18] sm:$0xf] %v5005
                %v5007 = vld [vmem:[%s4991 + $0x1c] sm:$0xf]
                %5008 = vst [vmem:[%s4992 + $0x1c] sm:$0xf] %v5007
                %v5009 = vld [vmem:[%s4991 + $0x20] sm:$0xf]
                %5010 = vst [vmem:[%s4992 + $0x40] sm:$0xf] %v5009
                %v5011 = vld [vmem:[%s4991 + $0x24] sm:$0xf]
                %5012 = vst [vmem:[%s4992 + $0x44] sm:$0xf] %v5011
                %v5013 = vld [vmem:[%s4991 + $0x28] sm:$0xf]
                %5014 = vst [vmem:[%s4992 + $0x48] sm:$0xf] %v5013
                %v5015 = vld [vmem:[%s4991 + $0x2c] sm:$0xf]
                %5016 = vst [vmem:[%s4992 + $0x4c] sm:$0xf] %v5015
                %v5017 = vld [vmem:[%s4991 + $0x30] sm:$0xf]
                %5018 = vst [vmem:[%s4992 + $0x50] sm:$0xf] %v5017
                %v5019 = vld [vmem:[%s4991 + $0x34] sm:$0xf]
                %5020 = vst [vmem:[%s4992 + $0x54] sm:$0xf] %v5019
                %v5021 = vld [vmem:[%s4991 + $0x38] sm:$0xf]
                %5022 = vst [vmem:[%s4992 + $0x58] sm:$0xf] %v5021
                %v5023 = vld [vmem:[%s4991 + $0x3c] sm:$0xf]
                %5024 = vst [vmem:[%s4992 + $0x5c] sm:$0xf] %v5023
                %v5025 = vld [vmem:[%s4991 + $0x40] sm:$0xf]
                %5026 = vst [vmem:[%s4992 + $0x80] sm:$0xf] %v5025
                %v5027 = vld [vmem:[%s4991 + $0x44] sm:$0xf]
                %5028 = vst [vmem:[%s4992 + $0x84] sm:$0xf] %v5027
                %v5029 = vld [vmem:[%s4991 + $0x48] sm:$0xf]
                %5030 = vst [vmem:[%s4992 + $0x88] sm:$0xf] %v5029
                %v5031 = vld [vmem:[%s4991 + $0x4c] sm:$0xf]
                %5032 = vst [vmem:[%s4992 + $0x8c] sm:$0xf] %v5031
                %v5033 = vld [vmem:[%s4991 + $0x50] sm:$0xf]
                %5034 = vst [vmem:[%s4992 + $0x90] sm:$0xf] %v5033
                %v5035 = vld [vmem:[%s4991 + $0x54] sm:$0xf]
                %5036 = vst [vmem:[%s4992 + $0x94] sm:$0xf] %v5035
                %v5037 = vld [vmem:[%s4991 + $0x58] sm:$0xf]
                %5038 = vst [vmem:[%s4992 + $0x98] sm:$0xf] %v5037
                %v5039 = vld [vmem:[%s4991 + $0x5c] sm:$0xf]
                %5040 = vst [vmem:[%s4992 + $0x9c] sm:$0xf] %v5039
                %v5041 = vld [vmem:[%s4991 + $0x60] sm:$0xf]
                %5042 = vst [vmem:[%s4992 + $0xc0] sm:$0xf] %v5041
                %v5043 = vld [vmem:[%s4991 + $0x64] sm:$0xf]
                %5044 = vst [vmem:[%s4992 + $0xc4] sm:$0xf] %v5043
                %v5045 = vld [vmem:[%s4991 + $0x68] sm:$0xf]
                %5046 = vst [vmem:[%s4992 + $0xc8] sm:$0xf] %v5045
                %v5047 = vld [vmem:[%s4991 + $0x6c] sm:$0xf]
                %5048 = vst [vmem:[%s4992 + $0xcc] sm:$0xf] %v5047
                %v5049 = vld [vmem:[%s4991 + $0x70] sm:$0xf]
                %5050 = vst [vmem:[%s4992 + $0xd0] sm:$0xf] %v5049
                %v5051 = vld [vmem:[%s4991 + $0x74] sm:$0xf]
                %5052 = vst [vmem:[%s4992 + $0xd4] sm:$0xf] %v5051
                %v5053 = vld [vmem:[%s4991 + $0x78] sm:$0xf]
                %5054 = vst [vmem:[%s4992 + $0xd8] sm:$0xf] %v5053
                %v5055 = vld [vmem:[%s4991 + $0x7c] sm:$0xf]
                %5056 = vst [vmem:[%s4992 + $0xdc] sm:$0xf] %v5055
              $region110: #{tpu_custom_call.1} parent=104 // loop_footer
                %s4990 = sadd.s32 1, %s4986
              $region111: #{tpu_custom_call.1} parent=104 // loop_footer_branch
                %4985 = sbr.rel target = $region107
              $region112: #{tpu_custom_call.1} parent=104 // loop_exit
                _
            $region105: #{tpu_custom_call.1} parent=96 // pred_fallthru
              _
          $region97: #{tpu_custom_call.1} parent=92 // pred_fallthru
            _
          %5140 = vnop
        $region93: #{tpu_custom_call.1} parent=39 // pred_fallthru
          _
        // Predicated region
        $region131: #{tpu_custom_call.1} parent=39 // pred_check
          %p5141 = pneg %p223
        $region132: #{tpu_custom_call.1} parent=39 // pred_check_branch
          %5143 = sbr.rel (%p5141) target = $region134
        $region133: #{tpu_custom_call.1} parent=39 // pred_region
          %s5144 = smul.u32 8, %s28
          %s5145 = smul.addr %s27, 64
          %s5146 = sadd.s32 %s5144, %s5145
          %s5147 = smul.addr %s5146, 4
          %s5148 = scalar_lea.vmem %s7, %s5147
          // Predicated region
          $region135: #{tpu_custom_call.1} parent=133 // pred_check
            _
          $region136: #{tpu_custom_call.1} parent=133 // pred_check_branch
            %5150 = sbr.rel (0) target = $region138
          $region137: #{tpu_custom_call.1} parent=133 // pred_region
            // Predicated region
            $region139: #{tpu_custom_call.1} parent=137 // pred_check
              _
            $region140: #{tpu_custom_call.1} parent=137 // pred_check_branch
              %5152 = sbr.rel target = $region142
            $region141: #{tpu_custom_call.1} parent=137 // pred_region
              // Predicated region
              $region154: #{tpu_custom_call.1} parent=141 // pred_check
                _
              $region155: #{tpu_custom_call.1} parent=141 // pred_check_branch
                %5229 = sbr.rel (0) target = $region157
              $region156: #{tpu_custom_call.1} parent=141 // pred_region
                loop: start=0, step=1, limit=1
                $region158: #{tpu_custom_call.1} parent=156 // loop_pre_header
                  _
                $region159: #{tpu_custom_call.1} parent=156 // loop_header
                  %s5231 = sphi 0, %s5235
                  %p5232 = scmp.ge.s32.totalorder %s5231, 1
                  %s5236 = sphi %s4798, %s4798
                  %s5237 = sphi %s5148, %s5148
                $region160: #{tpu_custom_call.1} parent=156 // loop_header_branch
                  %5234 = sbr.rel (%p5232) target = $region164
                $region161: #{tpu_custom_call.1} parent=156 // loop_body
                  _
                $region162: #{tpu_custom_call.1} parent=156 // loop_footer
                  %s5235 = sadd.s32 1, %s5231
                $region163: #{tpu_custom_call.1} parent=156 // loop_footer_branch
                  %5230 = sbr.rel target = $region159
                $region164: #{tpu_custom_call.1} parent=156 // loop_exit
                  _
                loop: start=0, step=1, limit=1
                $region165: #{tpu_custom_call.1} parent=156 // loop_pre_header
                  _
                $region166: #{tpu_custom_call.1} parent=156 // loop_header
                  %s5240 = sphi 0, %s5244
                  %p5241 = scmp.ge.s32.totalorder %s5240, 1
                  %s5245 = sphi %s4798, %s4798
                  %s5246 = sphi %s5148, %s5148
                $region167: #{tpu_custom_call.1} parent=156 // loop_header_branch
                  %5243 = sbr.rel (%p5241) target = $region171
                $region168: #{tpu_custom_call.1} parent=156 // loop_body
                  %v5247 = vld [vmem:[%s5245] sm:$0xf]
                  %5248 = vst [vmem:[%s5246] sm:$0xf] %v5247
                  %v5249 = vld [vmem:[%s5245 + $0x4] sm:$0xf]
                  %5250 = vst [vmem:[%s5246 + $0x4] sm:$0xf] %v5249
                  %v5251 = vld [vmem:[%s5245 + $0x8] sm:$0xf]
                  %5252 = vst [vmem:[%s5246 + $0x8] sm:$0xf] %v5251
                  %v5253 = vld [vmem:[%s5245 + $0xc] sm:$0xf]
                  %5254 = vst [vmem:[%s5246 + $0xc] sm:$0xf] %v5253
                  %v5255 = vld [vmem:[%s5245 + $0x10] sm:$0xf]
                  %5256 = vst [vmem:[%s5246 + $0x10] sm:$0xf] %v5255
                  %v5257 = vld [vmem:[%s5245 + $0x14] sm:$0xf]
                  %5258 = vst [vmem:[%s5246 + $0x14] sm:$0xf] %v5257
                  %v5259 = vld [vmem:[%s5245 + $0x18] sm:$0xf]
                  %5260 = vst [vmem:[%s5246 + $0x18] sm:$0xf] %v5259
                  %v5261 = vld [vmem:[%s5245 + $0x1c] sm:$0xf]
                  %5262 = vst [vmem:[%s5246 + $0x1c] sm:$0xf] %v5261
                  %v5263 = vld [vmem:[%s5245 + $0x20] sm:$0xf]
                  %5264 = vst [vmem:[%s5246 + $0x40] sm:$0xf] %v5263
                  %v5265 = vld [vmem:[%s5245 + $0x24] sm:$0xf]
                  %5266 = vst [vmem:[%s5246 + $0x44] sm:$0xf] %v5265
                  %v5267 = vld [vmem:[%s5245 + $0x28] sm:$0xf]
                  %5268 = vst [vmem:[%s5246 + $0x48] sm:$0xf] %v5267
                  %v5269 = vld [vmem:[%s5245 + $0x2c] sm:$0xf]
                  %5270 = vst [vmem:[%s5246 + $0x4c] sm:$0xf] %v5269
                  %v5271 = vld [vmem:[%s5245 + $0x30] sm:$0xf]
                  %5272 = vst [vmem:[%s5246 + $0x50] sm:$0xf] %v5271
                  %v5273 = vld [vmem:[%s5245 + $0x34] sm:$0xf]
                  %5274 = vst [vmem:[%s5246 + $0x54] sm:$0xf] %v5273
                  %v5275 = vld [vmem:[%s5245 + $0x38] sm:$0xf]
                  %5276 = vst [vmem:[%s5246 + $0x58] sm:$0xf] %v5275
                  %v5277 = vld [vmem:[%s5245 + $0x3c] sm:$0xf]
                  %5278 = vst [vmem:[%s5246 + $0x5c] sm:$0xf] %v5277
                  %v5279 = vld [vmem:[%s5245 + $0x40] sm:$0xf]
                  %5280 = vst [vmem:[%s5246 + $0x80] sm:$0xf] %v5279
                  %v5281 = vld [vmem:[%s5245 + $0x44] sm:$0xf]
                  %5282 = vst [vmem:[%s5246 + $0x84] sm:$0xf] %v5281
                  %v5283 = vld [vmem:[%s5245 + $0x48] sm:$0xf]
                  %5284 = vst [vmem:[%s5246 + $0x88] sm:$0xf] %v5283
                  %v5285 = vld [vmem:[%s5245 + $0x4c] sm:$0xf]
                  %5286 = vst [vmem:[%s5246 + $0x8c] sm:$0xf] %v5285
                  %v5287 = vld [vmem:[%s5245 + $0x50] sm:$0xf]
                  %5288 = vst [vmem:[%s5246 + $0x90] sm:$0xf] %v5287
                  %v5289 = vld [vmem:[%s5245 + $0x54] sm:$0xf]
                  %5290 = vst [vmem:[%s5246 + $0x94] sm:$0xf] %v5289
                  %v5291 = vld [vmem:[%s5245 + $0x58] sm:$0xf]
                  %5292 = vst [vmem:[%s5246 + $0x98] sm:$0xf] %v5291
                  %v5293 = vld [vmem:[%s5245 + $0x5c] sm:$0xf]
                  %5294 = vst [vmem:[%s5246 + $0x9c] sm:$0xf] %v5293
                  %v5295 = vld [vmem:[%s5245 + $0x60] sm:$0xf]
                  %5296 = vst [vmem:[%s5246 + $0xc0] sm:$0xf] %v5295
                  %v5297 = vld [vmem:[%s5245 + $0x64] sm:$0xf]
                  %5298 = vst [vmem:[%s5246 + $0xc4] sm:$0xf] %v5297
                  %v5299 = vld [vmem:[%s5245 + $0x68] sm:$0xf]
                  %5300 = vst [vmem:[%s5246 + $0xc8] sm:$0xf] %v5299
                  %v5301 = vld [vmem:[%s5245 + $0x6c] sm:$0xf]
                  %5302 = vst [vmem:[%s5246 + $0xcc] sm:$0xf] %v5301
                  %v5303 = vld [vmem:[%s5245 + $0x70] sm:$0xf]
                  %5304 = vst [vmem:[%s5246 + $0xd0] sm:$0xf] %v5303
                  %v5305 = vld [vmem:[%s5245 + $0x74] sm:$0xf]
                  %5306 = vst [vmem:[%s5246 + $0xd4] sm:$0xf] %v5305
                  %v5307 = vld [vmem:[%s5245 + $0x78] sm:$0xf]
                  %5308 = vst [vmem:[%s5246 + $0xd8] sm:$0xf] %v5307
                  %v5309 = vld [vmem:[%s5245 + $0x7c] sm:$0xf]
                  %5310 = vst [vmem:[%s5246 + $0xdc] sm:$0xf] %v5309
                $region169: #{tpu_custom_call.1} parent=156 // loop_footer
                  %s5244 = sadd.s32 1, %s5240
                $region170: #{tpu_custom_call.1} parent=156 // loop_footer_branch
                  %5239 = sbr.rel target = $region166
                $region171: #{tpu_custom_call.1} parent=156 // loop_exit
                  _
              $region157: #{tpu_custom_call.1} parent=141 // pred_fallthru
                _
            $region142: #{tpu_custom_call.1} parent=137 // pred_fallthru
              _
            // Predicated region
            $region143: #{tpu_custom_call.1} parent=137 // pred_check
              _
            $region144: #{tpu_custom_call.1} parent=137 // pred_check_branch
              %5154 = sbr.rel (0) target = $region146
            $region145: #{tpu_custom_call.1} parent=137 // pred_region
              loop: start=0, step=1, limit=1
              $region147: #{tpu_custom_call.1} parent=145 // loop_pre_header
                _
              $region148: #{tpu_custom_call.1} parent=145 // loop_header
                %s5157 = sphi 0, %s5161
                %p5158 = scmp.ge.s32.totalorder %s5157, 1
                %s5162 = sphi %s4798, %s4798
                %s5163 = sphi %s5148, %s5148
              $region149: #{tpu_custom_call.1} parent=145 // loop_header_branch
                %5160 = sbr.rel (%p5158) target = $region153
              $region150: #{tpu_custom_call.1} parent=145 // loop_body
                %v5164 = vld [vmem:[%s5162] sm:$0xf]
                %5165 = vst [vmem:[%s5163] sm:$0xf] %v5164
                %v5166 = vld [vmem:[%s5162 + $0x4] sm:$0xf]
                %5167 = vst [vmem:[%s5163 + $0x4] sm:$0xf] %v5166
                %v5168 = vld [vmem:[%s5162 + $0x8] sm:$0xf]
                %5169 = vst [vmem:[%s5163 + $0x8] sm:$0xf] %v5168
                %v5170 = vld [vmem:[%s5162 + $0xc] sm:$0xf]
                %5171 = vst [vmem:[%s5163 + $0xc] sm:$0xf] %v5170
                %v5172 = vld [vmem:[%s5162 + $0x10] sm:$0xf]
                %5173 = vst [vmem:[%s5163 + $0x10] sm:$0xf] %v5172
                %v5174 = vld [vmem:[%s5162 + $0x14] sm:$0xf]
                %5175 = vst [vmem:[%s5163 + $0x14] sm:$0xf] %v5174
                %v5176 = vld [vmem:[%s5162 + $0x18] sm:$0xf]
                %5177 = vst [vmem:[%s5163 + $0x18] sm:$0xf] %v5176
                %v5178 = vld [vmem:[%s5162 + $0x1c] sm:$0xf]
                %5179 = vst [vmem:[%s5163 + $0x1c] sm:$0xf] %v5178
                %v5180 = vld [vmem:[%s5162 + $0x20] sm:$0xf]
                %5181 = vst [vmem:[%s5163 + $0x40] sm:$0xf] %v5180
                %v5182 = vld [vmem:[%s5162 + $0x24] sm:$0xf]
                %5183 = vst [vmem:[%s5163 + $0x44] sm:$0xf] %v5182
                %v5184 = vld [vmem:[%s5162 + $0x28] sm:$0xf]
                %5185 = vst [vmem:[%s5163 + $0x48] sm:$0xf] %v5184
                %v5186 = vld [vmem:[%s5162 + $0x2c] sm:$0xf]
                %5187 = vst [vmem:[%s5163 + $0x4c] sm:$0xf] %v5186
                %v5188 = vld [vmem:[%s5162 + $0x30] sm:$0xf]
                %5189 = vst [vmem:[%s5163 + $0x50] sm:$0xf] %v5188
                %v5190 = vld [vmem:[%s5162 + $0x34] sm:$0xf]
                %5191 = vst [vmem:[%s5163 + $0x54] sm:$0xf] %v5190
                %v5192 = vld [vmem:[%s5162 + $0x38] sm:$0xf]
                %5193 = vst [vmem:[%s5163 + $0x58] sm:$0xf] %v5192
                %v5194 = vld [vmem:[%s5162 + $0x3c] sm:$0xf]
                %5195 = vst [vmem:[%s5163 + $0x5c] sm:$0xf] %v5194
                %v5196 = vld [vmem:[%s5162 + $0x40] sm:$0xf]
                %5197 = vst [vmem:[%s5163 + $0x80] sm:$0xf] %v5196
                %v5198 = vld [vmem:[%s5162 + $0x44] sm:$0xf]
                %5199 = vst [vmem:[%s5163 + $0x84] sm:$0xf] %v5198
                %v5200 = vld [vmem:[%s5162 + $0x48] sm:$0xf]
                %5201 = vst [vmem:[%s5163 + $0x88] sm:$0xf] %v5200
                %v5202 = vld [vmem:[%s5162 + $0x4c] sm:$0xf]
                %5203 = vst [vmem:[%s5163 + $0x8c] sm:$0xf] %v5202
                %v5204 = vld [vmem:[%s5162 + $0x50] sm:$0xf]
                %5205 = vst [vmem:[%s5163 + $0x90] sm:$0xf] %v5204
                %v5206 = vld [vmem:[%s5162 + $0x54] sm:$0xf]
                %5207 = vst [vmem:[%s5163 + $0x94] sm:$0xf] %v5206
                %v5208 = vld [vmem:[%s5162 + $0x58] sm:$0xf]
                %5209 = vst [vmem:[%s5163 + $0x98] sm:$0xf] %v5208
                %v5210 = vld [vmem:[%s5162 + $0x5c] sm:$0xf]
                %5211 = vst [vmem:[%s5163 + $0x9c] sm:$0xf] %v5210
                %v5212 = vld [vmem:[%s5162 + $0x60] sm:$0xf]
                %5213 = vst [vmem:[%s5163 + $0xc0] sm:$0xf] %v5212
                %v5214 = vld [vmem:[%s5162 + $0x64] sm:$0xf]
                %5215 = vst [vmem:[%s5163 + $0xc4] sm:$0xf] %v5214
                %v5216 = vld [vmem:[%s5162 + $0x68] sm:$0xf]
                %5217 = vst [vmem:[%s5163 + $0xc8] sm:$0xf] %v5216
                %v5218 = vld [vmem:[%s5162 + $0x6c] sm:$0xf]
                %5219 = vst [vmem:[%s5163 + $0xcc] sm:$0xf] %v5218
                %v5220 = vld [vmem:[%s5162 + $0x70] sm:$0xf]
                %5221 = vst [vmem:[%s5163 + $0xd0] sm:$0xf] %v5220
                %v5222 = vld [vmem:[%s5162 + $0x74] sm:$0xf]
                %5223 = vst [vmem:[%s5163 + $0xd4] sm:$0xf] %v5222
                %v5224 = vld [vmem:[%s5162 + $0x78] sm:$0xf]
                %5225 = vst [vmem:[%s5163 + $0xd8] sm:$0xf] %v5224
                %v5226 = vld [vmem:[%s5162 + $0x7c] sm:$0xf]
                %5227 = vst [vmem:[%s5163 + $0xdc] sm:$0xf] %v5226
              $region151: #{tpu_custom_call.1} parent=145 // loop_footer
                %s5161 = sadd.s32 1, %s5157
              $region152: #{tpu_custom_call.1} parent=145 // loop_footer_branch
                %5156 = sbr.rel target = $region148
              $region153: #{tpu_custom_call.1} parent=145 // loop_exit
                _
            $region146: #{tpu_custom_call.1} parent=137 // pred_fallthru
              _
          $region138: #{tpu_custom_call.1} parent=133 // pred_fallthru
            _
          %5311 = vnop
        $region134: #{tpu_custom_call.1} parent=39 // pred_fallthru
          _
      $region40: #{tpu_custom_call.1} parent=5 // pred_fallthru
        _
      %p5312 = scmp.le.s32.totalorder 2, %s18
      // Predicated region
      $region172: #{tpu_custom_call.1} parent=5 // pred_check
        %p5313 = pneg %p5312
      $region173: #{tpu_custom_call.1} parent=5 // pred_check_branch
        %5315 = sbr.rel (%p5313) target = $region175
      $region174: #{tpu_custom_call.1} parent=5 // pred_region
        %s5316 = ssub.s32 %s18, 2
        // Predicated region
        $region176: #{tpu_custom_call.1} parent=174 // pred_check
          %p5317 = pneg %p173
        $region177: #{tpu_custom_call.1} parent=174 // pred_check_branch
          %5319 = sbr.rel (%p5317) target = $region179
        $region178: #{tpu_custom_call.1} parent=174 // pred_region
          %s5320 = sand.u32 %s158, 1
          %s5321 = sand.u32 %s158, 1
          %s5322 = smul.addr %s5321, 128
          %s5323 = scalar_lea.vmem [#allocation6], %s5322
        $region179: #{tpu_custom_call.1} parent=174 // pred_fallthru
          _
        // Predicated region
        $region180: #{tpu_custom_call.1} parent=174 // pred_check
          %p5324 = pneg %p201
        $region181: #{tpu_custom_call.1} parent=174 // pred_check_branch
          %5326 = sbr.rel (%p5324) target = $region183
        $region182: #{tpu_custom_call.1} parent=174 // pred_region
          %s5327 = sand.u32 %s186, 1
          %s5328 = sand.u32 %s186, 1
          %s5329 = smul.addr %s5328, 128
          %s5330 = scalar_lea.vmem [#allocation7], %s5329
        $region183: #{tpu_custom_call.1} parent=174 // pred_fallthru
          _
        // Predicated region
        $region184: #{tpu_custom_call.1} parent=174 // pred_check
          %p5331 = pneg %p229
        $region185: #{tpu_custom_call.1} parent=174 // pred_check_branch
          %5333 = sbr.rel (%p5331) target = $region187
        $region186: #{tpu_custom_call.1} parent=174 // pred_region
          %s5334 = sand.u32 %s214, 1
          %s5335 = sand.u32 %s214, 1
          %s5336 = smul.addr %s5335, 128
          %s5337 = scalar_lea.vmem [#allocation8], %s5336
        $region187: #{tpu_custom_call.1} parent=174 // pred_fallthru
          _
      $region175: #{tpu_custom_call.1} parent=5 // pred_fallthru
        _
    $region6: #{tpu_custom_call.1} parent=1 // loop_footer
      %s22 = sadd.s32 1, %s18
    $region7: #{tpu_custom_call.1} parent=1 // loop_footer_branch
      %17 = sbr.rel target = $region3
    $region8: #{tpu_custom_call.1} parent=1 // loop_exit
      _
    %5338 = vsyncpa [#allocation3], 1
    %s5339 = scalar_lea.sflag [#allocation3], 1
    %5340 = vsyncpa %s5339, 1
    %5341 = vsyncpa [#allocation5], 1

</llo_original>
